<compile_context>
chip_gen: v5e
topology: v5e:2x2
jax: 0.10.0
libtpu: 0.0.40
codegen_flags: <defaults>
</compile_context>

<pallas_src>
import jax
import jax.numpy as jnp
from jax.experimental import pallas as pl
from jax.experimental.pallas import tpu as pltpu  # noqa: F401  (TPU backend)


# ----------------------------------------------------------------------------
# fused kernel: conv1d_flatten + 2 generic stacks (shared weights per stack)
# ----------------------------------------------------------------------------
def make_nbeats_kernel(M, T, F, H, nb_blocks, n_stacks, n_conv=4):
    MT = M * T

    def kernel(*refs):
        x_ref, wflat_ref, bflat_ref = refs[0], refs[1], refs[2]
        o_ref = refs[-1]
        stack_refs = refs[3:-1]
        assert len(stack_refs) == 8 * n_stacks

        # Boundary masks for the k=3 / pad=1 convs.  Built ONCE per kernel
        # invocation (single grid step) and reused by every conv layer of every
        # block / stack.  Row r = m*T + t of the flattened activation slab.
        t_idx = jax.lax.broadcasted_iota(jnp.int32, (MT, 1), 0) % T
        is_first = t_idx == 0          # t == 0    -> x[t-1] is the zero pad
        is_last = t_idx == (T - 1)     # t == T-1  -> x[t+1] is the zero pad

        def conv_k3(h, w_cat, b):
            # h: (MT, Cin) f32,  w_cat: (3*Cin, Cout) bf16,  b: (1, Cout) f32
            z = jnp.zeros_like(h[:1])
            # shift down / up by one row; sample-boundary rows are masked to 0,
            # which reproduces per-sample zero padding exactly.
            hm1 = jnp.where(is_first, 0.0, jnp.concatenate([z, h[:-1]], axis=0))
            hp1 = jnp.where(is_last, 0.0, jnp.concatenate([h[1:], z], axis=0))
            h_cat = jnp.concatenate([hm1, h, hp1], axis=-1).astype(jnp.bfloat16)
            return jnp.dot(h_cat, w_cat, preferred_element_type=jnp.float32) + b

        # conv1d_flatten (Din -> H), NO ReLU (matches NBeatsNet.forward)
        r = conv_k3(x_ref[...], wflat_ref[...], bflat_ref[...])        # (MT, H) f32
        f = jnp.zeros((M, F), jnp.float32)                             # forecast acc.

        for s in range(n_stacks):
            (wc_ref, bc_ref, wth_ref, bth_ref,
             wout_ref, bout_ref, wmap_ref, bmap_ref) = stack_refs[8 * s:8 * s + 8]
            w_theta = wth_ref[...]    # (2*M*Dth, M*T)    bf16, block-diag [Wtb;Wtf]
            b_theta = bth_ref[...]    # (2*M*Dth, 1)      f32
            w_out = wout_ref[...]     # (M*(T+F), 2*M*Dth) bf16, block-diag back/fc
            b_out = bout_ref[...]     # (M*(T+F), 1)      f32
            w_map = wmap_ref[...]     # (H, F)            bf16
            b_map = bmap_ref[...]     # (1, F)            f32

            for _ in range(nb_blocks):            # share_weights_in_stack=True
                # Block.forward: 4 x relu(conv1d(k=3, pad=1))
                h = r
                for l in range(n_conv):
                    h = jnp.maximum(conv_k3(h, wc_ref[l], bc_ref[l]), 0.0)
                h_bf = h.astype(jnp.bfloat16)

                # theta_b / theta_f (Linear T->Dth over time, + ReLU), one dot
                theta = jnp.maximum(
                    jnp.dot(w_theta, h_bf, preferred_element_type=jnp.float32)
                    + b_theta, 0.0)                               # (2*M*Dth, H)

                # backcast_fc (Dth->T) and forecast_fc (Dth->F), one dot
                out = (jnp.dot(w_out, theta.astype(jnp.bfloat16),
                               preferred_element_type=jnp.float32) + b_out)
                back = out[:MT]                                   # (M*T, H), no ReLU
                fc = jnp.maximum(out[MT:], 0.0)                   # (M*F, H), ReLU

                # AdaptiveMaxPool1d(1): max over forecast axis per hidden chan
                pooled = jnp.max(fc.reshape(M, F, H), axis=1)     # (M, H)

                # forecast_map (H -> F)
                fmap = (jnp.dot(pooled.astype(jnp.bfloat16), w_map,
                                preferred_element_type=jnp.float32) + b_map)

                # residual updates (kept in f32)
                r = r - back
                f = f + fmap

        o_ref[...] = f

    return kernel


def nbeats_fused_forward(x_flat, prep, *, M, T, F, H, nb_blocks):
    """x_flat: (M*T, Din) float32 channels-last input features."""
    n_stacks = len(prep["stacks"])
    kernel = make_nbeats_kernel(M=M, T=T, F=F, H=H,
                                nb_blocks=nb_blocks, n_stacks=n_stacks)
    args = [x_flat, prep["Wflat"], prep["bflat"]]
    for sp in prep["stacks"]:
        args += [sp["Wc"], sp["Bc"], sp["Wth"], sp["bth"],
                 sp["Wout"], sp["bout"], sp["Wmap"], sp["bmap"]]
    # No grid / no BlockSpecs: every operand is a whole-array VMEM block and the
    # kernel runs as a single step (launch-bound workload, working set < 1 MiB).
    return pl.pallas_call(
        kernel,
        out_shape=jax.ShapeDtypeStruct((M, F), jnp.float32),
    )(*args)


# ----------------------------------------------------------------------------
# parameters (natural layout) + one-time host-side preprocessing for the kernel
# ----------------------------------------------------------------------------
def init_params(key, Din, H, T, F, thetas_dims, date_emb_dim, id_emb_dim,
                num_nodes):
    keys = iter(jax.random.split(key, 64))

    def nrm(shape, scale=0.1):
        return scale * jax.random.normal(next(keys), shape, jnp.float32)

    params = {
        "week_em": nrm((7, date_emb_dim), 1.0),
        "id_em": nrm((num_nodes, id_emb_dim), 1.0),
        "Wflat": nrm((3, Din, H)),      # conv taps: [t-1, t, t+1]
        "bflat": nrm((H,)),
        "stacks": [],
    }
    for Dth in thetas_dims:
        params["stacks"].append({
            "Wc": nrm((4, 3, H, H)),    # 4 conv layers, taps [t-1, t, t+1]
            "Bc": nrm((4, H)),
            "Wtb": nrm((Dth, T)), "btb": nrm((Dth,)),
            "Wtf": nrm((Dth, T)), "btf": nrm((Dth,)),
            "Wback": nrm((T, Dth)), "bback": nrm((T,)),
            "Wfc": nrm((F, Dth)), "bfc": nrm((F,)),
            "Wmap": nrm((H, F)), "bmap": nrm((F,)),
        })
    return params


def prepare_params(params, M):
    """Build kernel-ready weights: tap-concatenated convs, block-diagonal
    (kron(I_M, W)) theta / output projections, bf16 MXU operands."""
    bf16 = jnp.bfloat16
    H = params["Wflat"].shape[-1]
    eye = jnp.eye(M, dtype=jnp.float32)

    prep = {
        "Wflat": params["Wflat"].reshape(-1, H).astype(bf16),     # (3*Din, H)
        "bflat": params["bflat"].reshape(1, H),
        "stacks": [],
    }
    for sp in params["stacks"]:
        Dth, T = sp["Wtb"].shape
        F = sp["Wfc"].shape[0]
        # theta_b || theta_f fused, block-diagonal over samples
        wth = jnp.concatenate([jnp.kron(eye, sp["Wtb"]),
                               jnp.kron(eye, sp["Wtf"])], axis=0)  # (2MD, MT)
        bth = jnp.concatenate([jnp.tile(sp["btb"], M),
                               jnp.tile(sp["btf"], M)]).reshape(-1, 1)
        # backcast_fc || forecast_fc fused, block-diagonal over samples & thetas
        wout = jnp.zeros((M * (T + F), 2 * M * Dth), jnp.float32)
        wout = wout.at[:M * T, :M * Dth].set(jnp.kron(eye, sp["Wback"]))
        wout = wout.at[M * T:, M * Dth:].set(jnp.kron(eye, sp["Wfc"]))
        bout = jnp.concatenate([jnp.tile(sp["bback"], M),
                                jnp.tile(sp["bfc"], M)]).reshape(-1, 1)
        prep["stacks"].append({
            "Wc": sp["Wc"].reshape(4, -1, H).astype(bf16),        # (4, 3H, H)
            "Bc": sp["Bc"].reshape(4, 1, H),
            "Wth": wth.astype(bf16), "bth": bth,
            "Wout": wout.astype(bf16), "bout": bout,
            "Wmap": sp["Wmap"].astype(bf16),
            "bmap": sp["bmap"].reshape(1, F),
        })
    return prep


# ----------------------------------------------------------------------------
# NBeatsModel.forward (embedding gathers are plain-JAX glue outside the kernel)
# ----------------------------------------------------------------------------
def build_features(input_day, cent_n_id, params):
    B, N, T, _ = input_day.shape
    x = input_day[..., :-1]
    wk_idx = input_day[..., -1].astype(jnp.int32)
    weekday = params["week_em"][wk_idx]                            # (B,N,T,De)
    x = jnp.concatenate([x, weekday], axis=-1)
    cent = params["id_em"][cent_n_id]                              # (N, Di)
    cent = jnp.broadcast_to(cent[None, :, None, :], (B, N, T, cent.shape[-1]))
    x = jnp.concatenate([x, cent], axis=-1)
    # PyTorch permutes to (M, C, T); the kernel uses channels-last (M, T, C).
    return x.reshape(B * N, T, x.shape[-1]).astype(jnp.float32)


def nbeats_model_forward(input_day, cent_n_id, params, prep, lookahead_days,
                         block_size):
    B, N, T, _ = input_day.shape
    x = build_features(input_day, cent_n_id, params)               # (M, T, Din)
    M = B * N
    H = params["Wflat"].shape[-1]
    fcast = nbeats_fused_forward(x.reshape(M * T, -1), prep,
                                 M=M, T=T, F=lookahead_days, H=H,
                                 nb_blocks=block_size)             # (M, F)
    return fcast.reshape(B, N, lookahead_days)


# ----------------------------------------------------------------------------
# pure-JAX reference (same math, same bf16 weight/operand rounding)
# ----------------------------------------------------------------------------
def nbeats_reference(x, params, nb_blocks):
    bf16 = jnp.bfloat16
    M, T, _ = x.shape
    F = params["stacks"][0]["Wfc"].shape[0]

    def conv_cl(h, W3, b):
        z = jnp.zeros_like(h[:, :1])
        hm1 = jnp.concatenate([z, h[:, :-1]], axis=1)
        hp1 = jnp.concatenate([h[:, 1:], z], axis=1)
        hc = jnp.concatenate([hm1, h, hp1], axis=-1).astype(bf16)
        Wcat = W3.reshape(-1, W3.shape[-1]).astype(bf16)
        out = jnp.einsum("mtk,kc->mtc", hc, Wcat,
                         preferred_element_type=jnp.float32)
        return out + b[None, None, :]

    r = conv_cl(x, params["Wflat"], params["bflat"])
    f = jnp.zeros((M, F), jnp.float32)
    for sp in params["stacks"]:
        for _ in range(nb_blocks):
            h = r
            for l in range(4):
                h = jax.nn.relu(conv_cl(h, sp["Wc"][l], sp["Bc"][l]))
            hb = h.astype(bf16)
            th_b = jax.nn.relu(
                jnp.einsum("dt,mtc->mdc", sp["Wtb"].astype(bf16), hb,
                           preferred_element_type=jnp.float32)
                + sp["btb"][None, :, None])
            th_f = jax.nn.relu(
                jnp.einsum("dt,mtc->mdc", sp["Wtf"].astype(bf16), hb,
                           preferred_element_type=jnp.float32)
                + sp["btf"][None, :, None])
            back = (jnp.einsum("td,mdc->mtc", sp["Wback"].astype(bf16),
                               th_b.astype(bf16),
                               preferred_element_type=jnp.float32)
                    + sp["bback"][None, :, None])
            fc = jax.nn.relu(
                jnp.einsum("fd,mdc->mfc", sp["Wfc"].astype(bf16),
                           th_f.astype(bf16),
                           preferred_element_type=jnp.float32)
                + sp["bfc"][None, :, None])
            pooled = jnp.max(fc, axis=1)                           # (M, H)
            fmap = (jnp.dot(pooled.astype(bf16), sp["Wmap"].astype(bf16),
                            preferred_element_type=jnp.float32)
                    + sp["bmap"][None, :])
            r = r - back
            f = f + fmap
    return f


# ----------------------------------------------------------------------------
if __name__ == "__main__":
    # config (small, consistent with NBeatsModel)
    B, N = 2, 4                      # batch, num nodes -> M = 8
    lookback_days = 8                # T
    lookahead_days = 8               # F
    day_fea_dim = 5
    date_emb_dim = 4
    id_emb_dim = 8
    num_nodes = N
    hidden_dim = 32                  # H
    block_size = 2                   # nb_blocks_per_stack (shared weights)
    thetas_dims = (4, 8)             # stack_types = ('generic', 'generic')
    Din = (day_fea_dim - 1) + date_emb_dim + id_emb_dim           # 16

    key = jax.random.PRNGKey(0)
    k_feat, k_week, k_par = jax.random.split(key, 3)

    feats = jax.random.normal(k_feat, (B, N, lookback_days, day_fea_dim - 1),
                              jnp.float32)
    weekday = jax.random.randint(k_week, (B, N, lookback_days, 1), 0, 7
                                 ).astype(jnp.float32)
    input_day = jnp.concatenate([feats, weekday], axis=-1)        # (B,N,T,fea)
    cent_n_id = jnp.arange(N, dtype=jnp.int32)                    # g['cent_n_id']

    params = init_params(k_par, Din, hidden_dim, lookback_days, lookahead_days,
                         thetas_dims, date_emb_dim, id_emb_dim, num_nodes)
    prep = prepare_params(params, B * N)

    pred = nbeats_model_forward(input_day, cent_n_id, params, prep,
                                lookahead_days, block_size)
    pred = jax.block_until_ready(pred)

    # correctness: compare against a plain-JAX reference with identical math
    x_feat = build_features(input_day, cent_n_id, params)
    ref = nbeats_reference(x_feat, params, block_size
                           ).reshape(B, N, lookahead_days)
    assert pred.shape == (B, N, lookahead_days)
    assert bool(jnp.all(jnp.isfinite(pred)))
    err = float(jnp.max(jnp.abs(pred - ref)))
    assert err < 2e-2, f"kernel/reference mismatch: max abs err = {err}"
    print("KERNEL_OK")
</pallas_src>

<mosaic_0001>
module attributes {stable_mosaic.version = 11 : i64} {
  func.func @kernel(%arg0: memref<64x16xf32, #tpu.memory_space<vmem>>, %arg1: memref<48x32xbf16, #tpu.memory_space<vmem>>, %arg2: memref<1x32xf32, #tpu.memory_space<vmem>>, %arg3: memref<4x96x32xbf16, #tpu.memory_space<vmem>>, %arg4: memref<4x1x32xf32, #tpu.memory_space<vmem>>, %arg5: memref<64x64xbf16, #tpu.memory_space<vmem>>, %arg6: memref<64x1xf32, #tpu.memory_space<vmem>>, %arg7: memref<128x64xbf16, #tpu.memory_space<vmem>>, %arg8: memref<128x1xf32, #tpu.memory_space<vmem>>, %arg9: memref<32x8xbf16, #tpu.memory_space<vmem>>, %arg10: memref<1x8xf32, #tpu.memory_space<vmem>>, %arg11: memref<4x96x32xbf16, #tpu.memory_space<vmem>>, %arg12: memref<4x1x32xf32, #tpu.memory_space<vmem>>, %arg13: memref<128x64xbf16, #tpu.memory_space<vmem>>, %arg14: memref<128x1xf32, #tpu.memory_space<vmem>>, %arg15: memref<128x128xbf16, #tpu.memory_space<vmem>>, %arg16: memref<128x1xf32, #tpu.memory_space<vmem>>, %arg17: memref<32x8xbf16, #tpu.memory_space<vmem>>, %arg18: memref<1x8xf32, #tpu.memory_space<vmem>>, %arg19: memref<8x8xf32, #tpu.memory_space<vmem>>) attributes {dimension_semantics = [], scalar_prefetch = 0 : i64, scratch_operands = 0 : i64, tpu.core_type = #tpu.core_type<tc>} {
    %0 = tpu.iota {dimensions = array<i32: 0>} : vector<64x1xi32>
    %c8_i32 = arith.constant 8 : i32
    %c0_i32 = arith.constant 0 : i32
    %1 = arith.cmpi eq, %c8_i32, %c0_i32 : i32
    %c1_i32 = arith.constant 1 : i32
    %2 = arith.select %1, %c1_i32, %c8_i32 : i32
    %3 = vector.broadcast %2 : i32 to vector<64x1xi32>
    %4 = arith.remsi %0, %3 : vector<64x1xi32>
    %c0_i32_0 = arith.constant 0 : i32
    %5 = vector.broadcast %c0_i32_0 : i32 to vector<64x1xi32>
    %6 = arith.cmpi ne, %4, %5 : vector<64x1xi32>
    %c0_i32_1 = arith.constant 0 : i32
    %7 = vector.broadcast %c0_i32_1 : i32 to vector<64x1xi32>
    %8 = arith.cmpi slt, %4, %7 : vector<64x1xi32>
    %c0_i32_2 = arith.constant 0 : i32
    %9 = arith.cmpi slt, %2, %c0_i32_2 : i32
    %10 = vector.broadcast %9 : i1 to vector<64x1xi1>
    %11 = vector.broadcast %10 : vector<64x1xi1> to vector<64x1xi1>
    %12 = arith.xori %8, %11 : vector<64x1xi1>
    %13 = arith.andi %12, %6 : vector<64x1xi1>
    %14 = vector.broadcast %2 : i32 to vector<64x1xi32>
    %15 = arith.addi %4, %14 : vector<64x1xi32>
    %16 = arith.select %13, %15, %4 : vector<64x1xi1>, vector<64x1xi32>
    %c0_i32_3 = arith.constant 0 : i32
    %17 = vector.broadcast %c0_i32_3 : i32 to vector<64x1xi32>
    %18 = arith.cmpi eq, %16, %17 : vector<64x1xi32>
    %c7_i32 = arith.constant 7 : i32
    %19 = vector.broadcast %c7_i32 : i32 to vector<64x1xi32>
    %20 = arith.cmpi eq, %16, %19 : vector<64x1xi32>
    %c0 = arith.constant 0 : index
    %c0_4 = arith.constant 0 : index
    %21 = vector.load %arg0[%c0, %c0_4] : memref<64x16xf32, #tpu.memory_space<vmem>>, vector<64x16xf32>
    %c0_5 = arith.constant 0 : index
    %c0_6 = arith.constant 0 : index
    %22 = vector.load %arg1[%c0_5, %c0_6] : memref<48x32xbf16, #tpu.memory_space<vmem>>, vector<48x32xbf16>
    %c0_7 = arith.constant 0 : index
    %c0_8 = arith.constant 0 : index
    %23 = vector.load %arg2[%c0_7, %c0_8] : memref<1x32xf32, #tpu.memory_space<vmem>>, vector<1x32xf32>
    %cst = arith.constant 0.000000e+00 : f32
    %24 = vector.broadcast %cst : f32 to vector<1x16xf32>
    %25 = vector.extract_strided_slice %21 {offsets = [0, 0], sizes = [63, 16], strides = [1, 1]} : vector<64x16xf32> to vector<63x16xf32>
    %26 = tpu.concatenate %24, %25 in 0 : vector<1x16xf32>, vector<63x16xf32> -> vector<64x16xf32>
    %cst_9 = arith.constant 0.000000e+00 : f32
    %27 = vector.shape_cast %18 : vector<64x1xi1> to vector<64x1xi1>
    %28 = vector.broadcast %27 : vector<64x1xi1> to vector<64x16xi1>
    %29 = vector.broadcast %cst_9 : f32 to vector<64x16xf32>
    %30 = arith.select %28, %29, %26 : vector<64x16xi1>, vector<64x16xf32>
    %31 = vector.extract_strided_slice %21 {offsets = [1, 0], sizes = [63, 16], strides = [1, 1]} : vector<64x16xf32> to vector<63x16xf32>
    %32 = tpu.concatenate %31, %24 in 0 : vector<63x16xf32>, vector<1x16xf32> -> vector<64x16xf32>
    %cst_10 = arith.constant 0.000000e+00 : f32
    %33 = vector.shape_cast %20 : vector<64x1xi1> to vector<64x1xi1>
    %34 = vector.broadcast %33 : vector<64x1xi1> to vector<64x16xi1>
    %35 = vector.broadcast %cst_10 : f32 to vector<64x16xf32>
    %36 = arith.select %34, %35, %32 : vector<64x16xi1>, vector<64x16xf32>
    %37 = tpu.concatenate %30, %21, %36 in 1 : vector<64x16xf32>, vector<64x16xf32>, vector<64x16xf32> -> vector<64x48xf32>
    %38 = arith.truncf %37 : vector<64x48xf32> to vector<64x48xbf16>
    %cst_11 = arith.constant dense<0.000000e+00> : vector<64x32xf32>
    %39 = tpu.matmul %38, %22, %cst_11 {dimension_numbers = #tpu.dot_dimension_numbers<[1], [0], [0], [1], [0, 0, 1, 1], [], []>} : vector<64x48xbf16>, vector<48x32xbf16>, vector<64x32xf32> -> vector<64x32xf32>
    %40 = vector.broadcast %23 : vector<1x32xf32> to vector<64x32xf32>
    %41 = arith.addf %39, %40 : vector<64x32xf32>
    %cst_12 = arith.constant 0.000000e+00 : f32
    %42 = vector.broadcast %cst_12 : f32 to vector<8x8xf32>
    %c0_13 = arith.constant 0 : index
    %c0_14 = arith.constant 0 : index
    %43 = vector.load %arg5[%c0_13, %c0_14] : memref<64x64xbf16, #tpu.memory_space<vmem>>, vector<64x64xbf16>
    %c0_15 = arith.constant 0 : index
    %c0_16 = arith.constant 0 : index
    %44 = vector.load %arg6[%c0_15, %c0_16] : memref<64x1xf32, #tpu.memory_space<vmem>>, vector<64x1xf32>
    %c0_17 = arith.constant 0 : index
    %c0_18 = arith.constant 0 : index
    %45 = vector.load %arg7[%c0_17, %c0_18] : memref<128x64xbf16, #tpu.memory_space<vmem>>, vector<128x64xbf16>
    %c0_19 = arith.constant 0 : index
    %c0_20 = arith.constant 0 : index
    %46 = vector.load %arg8[%c0_19, %c0_20] : memref<128x1xf32, #tpu.memory_space<vmem>>, vector<128x1xf32>
    %c0_21 = arith.constant 0 : index
    %c0_22 = arith.constant 0 : index
    %47 = vector.load %arg9[%c0_21, %c0_22] : memref<32x8xbf16, #tpu.memory_space<vmem>>, vector<32x8xbf16>
    %c0_23 = arith.constant 0 : index
    %c0_24 = arith.constant 0 : index
    %48 = vector.load %arg10[%c0_23, %c0_24] : memref<1x8xf32, #tpu.memory_space<vmem>>, vector<1x8xf32>
    %c0_25 = arith.constant 0 : index
    %c0_26 = arith.constant 0 : index
    %c0_27 = arith.constant 0 : index
    %49 = vector.load %arg3[%c0_25, %c0_26, %c0_27] : memref<4x96x32xbf16, #tpu.memory_space<vmem>>, vector<1x96x32xbf16>
    %50 = vector.shape_cast %49 : vector<1x96x32xbf16> to vector<96x32xbf16>
    %c0_28 = arith.constant 0 : index
    %c0_29 = arith.constant 0 : index
    %c0_30 = arith.constant 0 : index
    %51 = vector.load %arg4[%c0_28, %c0_29, %c0_30] : memref<4x1x32xf32, #tpu.memory_space<vmem>>, vector<1x1x32xf32>
    %52 = vector.shape_cast %51 : vector<1x1x32xf32> to vector<1x32xf32>
    %cst_31 = arith.constant 0.000000e+00 : f32
    %53 = vector.broadcast %cst_31 : f32 to vector<1x32xf32>
    %54 = vector.extract_strided_slice %41 {offsets = [0, 0], sizes = [63, 32], strides = [1, 1]} : vector<64x32xf32> to vector<63x32xf32>
    %55 = tpu.concatenate %53, %54 in 0 : vector<1x32xf32>, vector<63x32xf32> -> vector<64x32xf32>
    %cst_32 = arith.constant 0.000000e+00 : f32
    %56 = vector.shape_cast %18 : vector<64x1xi1> to vector<64x1xi1>
    %57 = vector.broadcast %56 : vector<64x1xi1> to vector<64x32xi1>
    %58 = vector.broadcast %cst_32 : f32 to vector<64x32xf32>
    %59 = arith.select %57, %58, %55 : vector<64x32xi1>, vector<64x32xf32>
    %60 = vector.extract_strided_slice %41 {offsets = [1, 0], sizes = [63, 32], strides = [1, 1]} : vector<64x32xf32> to vector<63x32xf32>
    %61 = tpu.concatenate %60, %53 in 0 : vector<63x32xf32>, vector<1x32xf32> -> vector<64x32xf32>
    %cst_33 = arith.constant 0.000000e+00 : f32
    %62 = vector.shape_cast %20 : vector<64x1xi1> to vector<64x1xi1>
    %63 = vector.broadcast %62 : vector<64x1xi1> to vector<64x32xi1>
    %64 = vector.broadcast %cst_33 : f32 to vector<64x32xf32>
    %65 = arith.select %63, %64, %61 : vector<64x32xi1>, vector<64x32xf32>
    %66 = tpu.concatenate %59, %41, %65 in 1 : vector<64x32xf32>, vector<64x32xf32>, vector<64x32xf32> -> vector<64x96xf32>
    %67 = arith.truncf %66 : vector<64x96xf32> to vector<64x96xbf16>
    %cst_34 = arith.constant dense<0.000000e+00> : vector<64x32xf32>
    %68 = tpu.matmul %67, %50, %cst_34 {dimension_numbers = #tpu.dot_dimension_numbers<[1], [0], [0], [1], [0, 0, 1, 1], [], []>} : vector<64x96xbf16>, vector<96x32xbf16>, vector<64x32xf32> -> vector<64x32xf32>
    %69 = vector.broadcast %52 : vector<1x32xf32> to vector<64x32xf32>
    %70 = arith.addf %68, %69 : vector<64x32xf32>
    %cst_35 = arith.constant 0.000000e+00 : f32
    %71 = vector.broadcast %cst_35 : f32 to vector<64x32xf32>
    %72 = arith.maximumf %70, %71 : vector<64x32xf32>
    %c1 = arith.constant 1 : index
    %c0_36 = arith.constant 0 : index
    %c0_37 = arith.constant 0 : index
    %73 = vector.load %arg3[%c1, %c0_36, %c0_37] : memref<4x96x32xbf16, #tpu.memory_space<vmem>>, vector<1x96x32xbf16>
    %74 = vector.shape_cast %73 : vector<1x96x32xbf16> to vector<96x32xbf16>
    %c1_38 = arith.constant 1 : index
    %c0_39 = arith.constant 0 : index
    %c0_40 = arith.constant 0 : index
    %75 = vector.load %arg4[%c1_38, %c0_39, %c0_40] : memref<4x1x32xf32, #tpu.memory_space<vmem>>, vector<1x1x32xf32>
    %76 = vector.shape_cast %75 : vector<1x1x32xf32> to vector<1x32xf32>
    %cst_41 = arith.constant 0.000000e+00 : f32
    %77 = vector.broadcast %cst_41 : f32 to vector<1x32xf32>
    %78 = vector.extract_strided_slice %72 {offsets = [0, 0], sizes = [63, 32], strides = [1, 1]} : vector<64x32xf32> to vector<63x32xf32>
    %79 = tpu.concatenate %77, %78 in 0 : vector<1x32xf32>, vector<63x32xf32> -> vector<64x32xf32>
    %cst_42 = arith.constant 0.000000e+00 : f32
    %80 = vector.shape_cast %18 : vector<64x1xi1> to vector<64x1xi1>
    %81 = vector.broadcast %80 : vector<64x1xi1> to vector<64x32xi1>
    %82 = vector.broadcast %cst_42 : f32 to vector<64x32xf32>
    %83 = arith.select %81, %82, %79 : vector<64x32xi1>, vector<64x32xf32>
    %84 = vector.extract_strided_slice %72 {offsets = [1, 0], sizes = [63, 32], strides = [1, 1]} : vector<64x32xf32> to vector<63x32xf32>
    %85 = tpu.concatenate %84, %77 in 0 : vector<63x32xf32>, vector<1x32xf32> -> vector<64x32xf32>
    %cst_43 = arith.constant 0.000000e+00 : f32
    %86 = vector.shape_cast %20 : vector<64x1xi1> to vector<64x1xi1>
    %87 = vector.broadcast %86 : vector<64x1xi1> to vector<64x32xi1>
    %88 = vector.broadcast %cst_43 : f32 to vector<64x32xf32>
    %89 = arith.select %87, %88, %85 : vector<64x32xi1>, vector<64x32xf32>
    %90 = tpu.concatenate %83, %72, %89 in 1 : vector<64x32xf32>, vector<64x32xf32>, vector<64x32xf32> -> vector<64x96xf32>
    %91 = arith.truncf %90 : vector<64x96xf32> to vector<64x96xbf16>
    %cst_44 = arith.constant dense<0.000000e+00> : vector<64x32xf32>
    %92 = tpu.matmul %91, %74, %cst_44 {dimension_numbers = #tpu.dot_dimension_numbers<[1], [0], [0], [1], [0, 0, 1, 1], [], []>} : vector<64x96xbf16>, vector<96x32xbf16>, vector<64x32xf32> -> vector<64x32xf32>
    %93 = vector.broadcast %76 : vector<1x32xf32> to vector<64x32xf32>
    %94 = arith.addf %92, %93 : vector<64x32xf32>
    %cst_45 = arith.constant 0.000000e+00 : f32
    %95 = vector.broadcast %cst_45 : f32 to vector<64x32xf32>
    %96 = arith.maximumf %94, %95 : vector<64x32xf32>
    %c2 = arith.constant 2 : index
    %c0_46 = arith.constant 0 : index
    %c0_47 = arith.constant 0 : index
    %97 = vector.load %arg3[%c2, %c0_46, %c0_47] : memref<4x96x32xbf16, #tpu.memory_space<vmem>>, vector<1x96x32xbf16>
    %98 = vector.shape_cast %97 : vector<1x96x32xbf16> to vector<96x32xbf16>
    %c2_48 = arith.constant 2 : index
    %c0_49 = arith.constant 0 : index
    %c0_50 = arith.constant 0 : index
    %99 = vector.load %arg4[%c2_48, %c0_49, %c0_50] : memref<4x1x32xf32, #tpu.memory_space<vmem>>, vector<1x1x32xf32>
    %100 = vector.shape_cast %99 : vector<1x1x32xf32> to vector<1x32xf32>
    %cst_51 = arith.constant 0.000000e+00 : f32
    %101 = vector.broadcast %cst_51 : f32 to vector<1x32xf32>
    %102 = vector.extract_strided_slice %96 {offsets = [0, 0], sizes = [63, 32], strides = [1, 1]} : vector<64x32xf32> to vector<63x32xf32>
    %103 = tpu.concatenate %101, %102 in 0 : vector<1x32xf32>, vector<63x32xf32> -> vector<64x32xf32>
    %cst_52 = arith.constant 0.000000e+00 : f32
    %104 = vector.shape_cast %18 : vector<64x1xi1> to vector<64x1xi1>
    %105 = vector.broadcast %104 : vector<64x1xi1> to vector<64x32xi1>
    %106 = vector.broadcast %cst_52 : f32 to vector<64x32xf32>
    %107 = arith.select %105, %106, %103 : vector<64x32xi1>, vector<64x32xf32>
    %108 = vector.extract_strided_slice %96 {offsets = [1, 0], sizes = [63, 32], strides = [1, 1]} : vector<64x32xf32> to vector<63x32xf32>
    %109 = tpu.concatenate %108, %101 in 0 : vector<63x32xf32>, vector<1x32xf32> -> vector<64x32xf32>
    %cst_53 = arith.constant 0.000000e+00 : f32
    %110 = vector.shape_cast %20 : vector<64x1xi1> to vector<64x1xi1>
    %111 = vector.broadcast %110 : vector<64x1xi1> to vector<64x32xi1>
    %112 = vector.broadcast %cst_53 : f32 to vector<64x32xf32>
    %113 = arith.select %111, %112, %109 : vector<64x32xi1>, vector<64x32xf32>
    %114 = tpu.concatenate %107, %96, %113 in 1 : vector<64x32xf32>, vector<64x32xf32>, vector<64x32xf32> -> vector<64x96xf32>
    %115 = arith.truncf %114 : vector<64x96xf32> to vector<64x96xbf16>
    %cst_54 = arith.constant dense<0.000000e+00> : vector<64x32xf32>
    %116 = tpu.matmul %115, %98, %cst_54 {dimension_numbers = #tpu.dot_dimension_numbers<[1], [0], [0], [1], [0, 0, 1, 1], [], []>} : vector<64x96xbf16>, vector<96x32xbf16>, vector<64x32xf32> -> vector<64x32xf32>
    %117 = vector.broadcast %100 : vector<1x32xf32> to vector<64x32xf32>
    %118 = arith.addf %116, %117 : vector<64x32xf32>
    %cst_55 = arith.constant 0.000000e+00 : f32
    %119 = vector.broadcast %cst_55 : f32 to vector<64x32xf32>
    %120 = arith.maximumf %118, %119 : vector<64x32xf32>
    %c3 = arith.constant 3 : index
    %c0_56 = arith.constant 0 : index
    %c0_57 = arith.constant 0 : index
    %121 = vector.load %arg3[%c3, %c0_56, %c0_57] : memref<4x96x32xbf16, #tpu.memory_space<vmem>>, vector<1x96x32xbf16>
    %122 = vector.shape_cast %121 : vector<1x96x32xbf16> to vector<96x32xbf16>
    %c3_58 = arith.constant 3 : index
    %c0_59 = arith.constant 0 : index
    %c0_60 = arith.constant 0 : index
    %123 = vector.load %arg4[%c3_58, %c0_59, %c0_60] : memref<4x1x32xf32, #tpu.memory_space<vmem>>, vector<1x1x32xf32>
    %124 = vector.shape_cast %123 : vector<1x1x32xf32> to vector<1x32xf32>
    %cst_61 = arith.constant 0.000000e+00 : f32
    %125 = vector.broadcast %cst_61 : f32 to vector<1x32xf32>
    %126 = vector.extract_strided_slice %120 {offsets = [0, 0], sizes = [63, 32], strides = [1, 1]} : vector<64x32xf32> to vector<63x32xf32>
    %127 = tpu.concatenate %125, %126 in 0 : vector<1x32xf32>, vector<63x32xf32> -> vector<64x32xf32>
    %cst_62 = arith.constant 0.000000e+00 : f32
    %128 = vector.shape_cast %18 : vector<64x1xi1> to vector<64x1xi1>
    %129 = vector.broadcast %128 : vector<64x1xi1> to vector<64x32xi1>
    %130 = vector.broadcast %cst_62 : f32 to vector<64x32xf32>
    %131 = arith.select %129, %130, %127 : vector<64x32xi1>, vector<64x32xf32>
    %132 = vector.extract_strided_slice %120 {offsets = [1, 0], sizes = [63, 32], strides = [1, 1]} : vector<64x32xf32> to vector<63x32xf32>
    %133 = tpu.concatenate %132, %125 in 0 : vector<63x32xf32>, vector<1x32xf32> -> vector<64x32xf32>
    %cst_63 = arith.constant 0.000000e+00 : f32
    %134 = vector.shape_cast %20 : vector<64x1xi1> to vector<64x1xi1>
    %135 = vector.broadcast %134 : vector<64x1xi1> to vector<64x32xi1>
    %136 = vector.broadcast %cst_63 : f32 to vector<64x32xf32>
    %137 = arith.select %135, %136, %133 : vector<64x32xi1>, vector<64x32xf32>
    %138 = tpu.concatenate %131, %120, %137 in 1 : vector<64x32xf32>, vector<64x32xf32>, vector<64x32xf32> -> vector<64x96xf32>
    %139 = arith.truncf %138 : vector<64x96xf32> to vector<64x96xbf16>
    %cst_64 = arith.constant dense<0.000000e+00> : vector<64x32xf32>
    %140 = tpu.matmul %139, %122, %cst_64 {dimension_numbers = #tpu.dot_dimension_numbers<[1], [0], [0], [1], [0, 0, 1, 1], [], []>} : vector<64x96xbf16>, vector<96x32xbf16>, vector<64x32xf32> -> vector<64x32xf32>
    %141 = vector.broadcast %124 : vector<1x32xf32> to vector<64x32xf32>
    %142 = arith.addf %140, %141 : vector<64x32xf32>
    %cst_65 = arith.constant 0.000000e+00 : f32
    %143 = vector.broadcast %cst_65 : f32 to vector<64x32xf32>
    %144 = arith.maximumf %142, %143 : vector<64x32xf32>
    %145 = arith.truncf %144 : vector<64x32xf32> to vector<64x32xbf16>
    %cst_66 = arith.constant dense<0.000000e+00> : vector<64x32xf32>
    %146 = tpu.matmul %43, %145, %cst_66 {dimension_numbers = #tpu.dot_dimension_numbers<[1], [0], [0], [1], [0, 0, 1, 1], [], []>} : vector<64x64xbf16>, vector<64x32xbf16>, vector<64x32xf32> -> vector<64x32xf32>
    %147 = vector.broadcast %44 : vector<64x1xf32> to vector<64x32xf32>
    %148 = arith.addf %146, %147 : vector<64x32xf32>
    %cst_67 = arith.constant 0.000000e+00 : f32
    %149 = vector.broadcast %cst_67 : f32 to vector<64x32xf32>
    %150 = arith.maximumf %148, %149 : vector<64x32xf32>
    %151 = arith.truncf %150 : vector<64x32xf32> to vector<64x32xbf16>
    %cst_68 = arith.constant dense<0.000000e+00> : vector<128x32xf32>
    %152 = tpu.matmul %45, %151, %cst_68 {dimension_numbers = #tpu.dot_dimension_numbers<[1], [0], [0], [1], [0, 0, 1, 1], [], []>} : vector<128x64xbf16>, vector<64x32xbf16>, vector<128x32xf32> -> vector<128x32xf32>
    %153 = vector.broadcast %46 : vector<128x1xf32> to vector<128x32xf32>
    %154 = arith.addf %152, %153 : vector<128x32xf32>
    %155 = vector.extract_strided_slice %154 {offsets = [0, 0], sizes = [64, 32], strides = [1, 1]} : vector<128x32xf32> to vector<64x32xf32>
    %156 = vector.extract_strided_slice %154 {offsets = [64, 0], sizes = [64, 32], strides = [1, 1]} : vector<128x32xf32> to vector<64x32xf32>
    %cst_69 = arith.constant 0.000000e+00 : f32
    %157 = vector.broadcast %cst_69 : f32 to vector<64x32xf32>
    %158 = arith.maximumf %156, %157 : vector<64x32xf32>
    %159 = vector.shape_cast %158 : vector<64x32xf32> to vector<8x8x32xf32>
    %cst_70 = arith.constant dense<0xFF800000> : vector<8x32xf32>
    %160 = vector.multi_reduction <maximumf>, %159, %cst_70 [1] : vector<8x8x32xf32> to vector<8x32xf32>
    %161 = arith.truncf %160 : vector<8x32xf32> to vector<8x32xbf16>
    %cst_71 = arith.constant dense<0.000000e+00> : vector<8x8xf32>
    %162 = tpu.matmul %161, %47, %cst_71 {dimension_numbers = #tpu.dot_dimension_numbers<[1], [0], [0], [1], [0, 0, 1, 1], [], []>} : vector<8x32xbf16>, vector<32x8xbf16>, vector<8x8xf32> -> vector<8x8xf32>
    %163 = vector.broadcast %48 : vector<1x8xf32> to vector<8x8xf32>
    %164 = arith.addf %162, %163 : vector<8x8xf32>
    %165 = arith.subf %41, %155 : vector<64x32xf32>
    %166 = arith.addf %42, %164 : vector<8x8xf32>
    %c0_72 = arith.constant 0 : index
    %c0_73 = arith.constant 0 : index
    %c0_74 = arith.constant 0 : index
    %167 = vector.load %arg3[%c0_72, %c0_73, %c0_74] : memref<4x96x32xbf16, #tpu.memory_space<vmem>>, vector<1x96x32xbf16>
    %168 = vector.shape_cast %167 : vector<1x96x32xbf16> to vector<96x32xbf16>
    %c0_75 = arith.constant 0 : index
    %c0_76 = arith.constant 0 : index
    %c0_77 = arith.constant 0 : index
    %169 = vector.load %arg4[%c0_75, %c0_76, %c0_77] : memref<4x1x32xf32, #tpu.memory_space<vmem>>, vector<1x1x32xf32>
    %170 = vector.shape_cast %169 : vector<1x1x32xf32> to vector<1x32xf32>
    %cst_78 = arith.constant 0.000000e+00 : f32
    %171 = vector.broadcast %cst_78 : f32 to vector<1x32xf32>
    %172 = vector.extract_strided_slice %165 {offsets = [0, 0], sizes = [63, 32], strides = [1, 1]} : vector<64x32xf32> to vector<63x32xf32>
    %173 = tpu.concatenate %171, %172 in 0 : vector<1x32xf32>, vector<63x32xf32> -> vector<64x32xf32>
    %cst_79 = arith.constant 0.000000e+00 : f32
    %174 = vector.shape_cast %18 : vector<64x1xi1> to vector<64x1xi1>
    %175 = vector.broadcast %174 : vector<64x1xi1> to vector<64x32xi1>
    %176 = vector.broadcast %cst_79 : f32 to vector<64x32xf32>
    %177 = arith.select %175, %176, %173 : vector<64x32xi1>, vector<64x32xf32>
    %178 = vector.extract_strided_slice %165 {offsets = [1, 0], sizes = [63, 32], strides = [1, 1]} : vector<64x32xf32> to vector<63x32xf32>
    %179 = tpu.concatenate %178, %171 in 0 : vector<63x32xf32>, vector<1x32xf32> -> vector<64x32xf32>
    %cst_80 = arith.constant 0.000000e+00 : f32
    %180 = vector.shape_cast %20 : vector<64x1xi1> to vector<64x1xi1>
    %181 = vector.broadcast %180 : vector<64x1xi1> to vector<64x32xi1>
    %182 = vector.broadcast %cst_80 : f32 to vector<64x32xf32>
    %183 = arith.select %181, %182, %179 : vector<64x32xi1>, vector<64x32xf32>
    %184 = tpu.concatenate %177, %165, %183 in 1 : vector<64x32xf32>, vector<64x32xf32>, vector<64x32xf32> -> vector<64x96xf32>
    %185 = arith.truncf %184 : vector<64x96xf32> to vector<64x96xbf16>
    %cst_81 = arith.constant dense<0.000000e+00> : vector<64x32xf32>
    %186 = tpu.matmul %185, %168, %cst_81 {dimension_numbers = #tpu.dot_dimension_numbers<[1], [0], [0], [1], [0, 0, 1, 1], [], []>} : vector<64x96xbf16>, vector<96x32xbf16>, vector<64x32xf32> -> vector<64x32xf32>
    %187 = vector.broadcast %170 : vector<1x32xf32> to vector<64x32xf32>
    %188 = arith.addf %186, %187 : vector<64x32xf32>
    %cst_82 = arith.constant 0.000000e+00 : f32
    %189 = vector.broadcast %cst_82 : f32 to vector<64x32xf32>
    %190 = arith.maximumf %188, %189 : vector<64x32xf32>
    %c1_83 = arith.constant 1 : index
    %c0_84 = arith.constant 0 : index
    %c0_85 = arith.constant 0 : index
    %191 = vector.load %arg3[%c1_83, %c0_84, %c0_85] : memref<4x96x32xbf16, #tpu.memory_space<vmem>>, vector<1x96x32xbf16>
    %192 = vector.shape_cast %191 : vector<1x96x32xbf16> to vector<96x32xbf16>
    %c1_86 = arith.constant 1 : index
    %c0_87 = arith.constant 0 : index
    %c0_88 = arith.constant 0 : index
    %193 = vector.load %arg4[%c1_86, %c0_87, %c0_88] : memref<4x1x32xf32, #tpu.memory_space<vmem>>, vector<1x1x32xf32>
    %194 = vector.shape_cast %193 : vector<1x1x32xf32> to vector<1x32xf32>
    %cst_89 = arith.constant 0.000000e+00 : f32
    %195 = vector.broadcast %cst_89 : f32 to vector<1x32xf32>
    %196 = vector.extract_strided_slice %190 {offsets = [0, 0], sizes = [63, 32], strides = [1, 1]} : vector<64x32xf32> to vector<63x32xf32>
    %197 = tpu.concatenate %195, %196 in 0 : vector<1x32xf32>, vector<63x32xf32> -> vector<64x32xf32>
    %cst_90 = arith.constant 0.000000e+00 : f32
    %198 = vector.shape_cast %18 : vector<64x1xi1> to vector<64x1xi1>
    %199 = vector.broadcast %198 : vector<64x1xi1> to vector<64x32xi1>
    %200 = vector.broadcast %cst_90 : f32 to vector<64x32xf32>
    %201 = arith.select %199, %200, %197 : vector<64x32xi1>, vector<64x32xf32>
    %202 = vector.extract_strided_slice %190 {offsets = [1, 0], sizes = [63, 32], strides = [1, 1]} : vector<64x32xf32> to vector<63x32xf32>
    %203 = tpu.concatenate %202, %195 in 0 : vector<63x32xf32>, vector<1x32xf32> -> vector<64x32xf32>
    %cst_91 = arith.constant 0.000000e+00 : f32
    %204 = vector.shape_cast %20 : vector<64x1xi1> to vector<64x1xi1>
    %205 = vector.broadcast %204 : vector<64x1xi1> to vector<64x32xi1>
    %206 = vector.broadcast %cst_91 : f32 to vector<64x32xf32>
    %207 = arith.select %205, %206, %203 : vector<64x32xi1>, vector<64x32xf32>
    %208 = tpu.concatenate %201, %190, %207 in 1 : vector<64x32xf32>, vector<64x32xf32>, vector<64x32xf32> -> vector<64x96xf32>
    %209 = arith.truncf %208 : vector<64x96xf32> to vector<64x96xbf16>
    %cst_92 = arith.constant dense<0.000000e+00> : vector<64x32xf32>
    %210 = tpu.matmul %209, %192, %cst_92 {dimension_numbers = #tpu.dot_dimension_numbers<[1], [0], [0], [1], [0, 0, 1, 1], [], []>} : vector<64x96xbf16>, vector<96x32xbf16>, vector<64x32xf32> -> vector<64x32xf32>
    %211 = vector.broadcast %194 : vector<1x32xf32> to vector<64x32xf32>
    %212 = arith.addf %210, %211 : vector<64x32xf32>
    %cst_93 = arith.constant 0.000000e+00 : f32
    %213 = vector.broadcast %cst_93 : f32 to vector<64x32xf32>
    %214 = arith.maximumf %212, %213 : vector<64x32xf32>
    %c2_94 = arith.constant 2 : index
    %c0_95 = arith.constant 0 : index
    %c0_96 = arith.constant 0 : index
    %215 = vector.load %arg3[%c2_94, %c0_95, %c0_96] : memref<4x96x32xbf16, #tpu.memory_space<vmem>>, vector<1x96x32xbf16>
    %216 = vector.shape_cast %215 : vector<1x96x32xbf16> to vector<96x32xbf16>
    %c2_97 = arith.constant 2 : index
    %c0_98 = arith.constant 0 : index
    %c0_99 = arith.constant 0 : index
    %217 = vector.load %arg4[%c2_97, %c0_98, %c0_99] : memref<4x1x32xf32, #tpu.memory_space<vmem>>, vector<1x1x32xf32>
    %218 = vector.shape_cast %217 : vector<1x1x32xf32> to vector<1x32xf32>
    %cst_100 = arith.constant 0.000000e+00 : f32
    %219 = vector.broadcast %cst_100 : f32 to vector<1x32xf32>
    %220 = vector.extract_strided_slice %214 {offsets = [0, 0], sizes = [63, 32], strides = [1, 1]} : vector<64x32xf32> to vector<63x32xf32>
    %221 = tpu.concatenate %219, %220 in 0 : vector<1x32xf32>, vector<63x32xf32> -> vector<64x32xf32>
    %cst_101 = arith.constant 0.000000e+00 : f32
    %222 = vector.shape_cast %18 : vector<64x1xi1> to vector<64x1xi1>
    %223 = vector.broadcast %222 : vector<64x1xi1> to vector<64x32xi1>
    %224 = vector.broadcast %cst_101 : f32 to vector<64x32xf32>
    %225 = arith.select %223, %224, %221 : vector<64x32xi1>, vector<64x32xf32>
    %226 = vector.extract_strided_slice %214 {offsets = [1, 0], sizes = [63, 32], strides = [1, 1]} : vector<64x32xf32> to vector<63x32xf32>
    %227 = tpu.concatenate %226, %219 in 0 : vector<63x32xf32>, vector<1x32xf32> -> vector<64x32xf32>
    %cst_102 = arith.constant 0.000000e+00 : f32
    %228 = vector.shape_cast %20 : vector<64x1xi1> to vector<64x1xi1>
    %229 = vector.broadcast %228 : vector<64x1xi1> to vector<64x32xi1>
    %230 = vector.broadcast %cst_102 : f32 to vector<64x32xf32>
    %231 = arith.select %229, %230, %227 : vector<64x32xi1>, vector<64x32xf32>
    %232 = tpu.concatenate %225, %214, %231 in 1 : vector<64x32xf32>, vector<64x32xf32>, vector<64x32xf32> -> vector<64x96xf32>
    %233 = arith.truncf %232 : vector<64x96xf32> to vector<64x96xbf16>
    %cst_103 = arith.constant dense<0.000000e+00> : vector<64x32xf32>
    %234 = tpu.matmul %233, %216, %cst_103 {dimension_numbers = #tpu.dot_dimension_numbers<[1], [0], [0], [1], [0, 0, 1, 1], [], []>} : vector<64x96xbf16>, vector<96x32xbf16>, vector<64x32xf32> -> vector<64x32xf32>
    %235 = vector.broadcast %218 : vector<1x32xf32> to vector<64x32xf32>
    %236 = arith.addf %234, %235 : vector<64x32xf32>
    %cst_104 = arith.constant 0.000000e+00 : f32
    %237 = vector.broadcast %cst_104 : f32 to vector<64x32xf32>
    %238 = arith.maximumf %236, %237 : vector<64x32xf32>
    %c3_105 = arith.constant 3 : index
    %c0_106 = arith.constant 0 : index
    %c0_107 = arith.constant 0 : index
    %239 = vector.load %arg3[%c3_105, %c0_106, %c0_107] : memref<4x96x32xbf16, #tpu.memory_space<vmem>>, vector<1x96x32xbf16>
    %240 = vector.shape_cast %239 : vector<1x96x32xbf16> to vector<96x32xbf16>
    %c3_108 = arith.constant 3 : index
    %c0_109 = arith.constant 0 : index
    %c0_110 = arith.constant 0 : index
    %241 = vector.load %arg4[%c3_108, %c0_109, %c0_110] : memref<4x1x32xf32, #tpu.memory_space<vmem>>, vector<1x1x32xf32>
    %242 = vector.shape_cast %241 : vector<1x1x32xf32> to vector<1x32xf32>
    %cst_111 = arith.constant 0.000000e+00 : f32
    %243 = vector.broadcast %cst_111 : f32 to vector<1x32xf32>
    %244 = vector.extract_strided_slice %238 {offsets = [0, 0], sizes = [63, 32], strides = [1, 1]} : vector<64x32xf32> to vector<63x32xf32>
    %245 = tpu.concatenate %243, %244 in 0 : vector<1x32xf32>, vector<63x32xf32> -> vector<64x32xf32>
    %cst_112 = arith.constant 0.000000e+00 : f32
    %246 = vector.shape_cast %18 : vector<64x1xi1> to vector<64x1xi1>
    %247 = vector.broadcast %246 : vector<64x1xi1> to vector<64x32xi1>
    %248 = vector.broadcast %cst_112 : f32 to vector<64x32xf32>
    %249 = arith.select %247, %248, %245 : vector<64x32xi1>, vector<64x32xf32>
    %250 = vector.extract_strided_slice %238 {offsets = [1, 0], sizes = [63, 32], strides = [1, 1]} : vector<64x32xf32> to vector<63x32xf32>
    %251 = tpu.concatenate %250, %243 in 0 : vector<63x32xf32>, vector<1x32xf32> -> vector<64x32xf32>
    %cst_113 = arith.constant 0.000000e+00 : f32
    %252 = vector.shape_cast %20 : vector<64x1xi1> to vector<64x1xi1>
    %253 = vector.broadcast %252 : vector<64x1xi1> to vector<64x32xi1>
    %254 = vector.broadcast %cst_113 : f32 to vector<64x32xf32>
    %255 = arith.select %253, %254, %251 : vector<64x32xi1>, vector<64x32xf32>
    %256 = tpu.concatenate %249, %238, %255 in 1 : vector<64x32xf32>, vector<64x32xf32>, vector<64x32xf32> -> vector<64x96xf32>
    %257 = arith.truncf %256 : vector<64x96xf32> to vector<64x96xbf16>
    %cst_114 = arith.constant dense<0.000000e+00> : vector<64x32xf32>
    %258 = tpu.matmul %257, %240, %cst_114 {dimension_numbers = #tpu.dot_dimension_numbers<[1], [0], [0], [1], [0, 0, 1, 1], [], []>} : vector<64x96xbf16>, vector<96x32xbf16>, vector<64x32xf32> -> vector<64x32xf32>
    %259 = vector.broadcast %242 : vector<1x32xf32> to vector<64x32xf32>
    %260 = arith.addf %258, %259 : vector<64x32xf32>
    %cst_115 = arith.constant 0.000000e+00 : f32
    %261 = vector.broadcast %cst_115 : f32 to vector<64x32xf32>
    %262 = arith.maximumf %260, %261 : vector<64x32xf32>
    %263 = arith.truncf %262 : vector<64x32xf32> to vector<64x32xbf16>
    %cst_116 = arith.constant dense<0.000000e+00> : vector<64x32xf32>
    %264 = tpu.matmul %43, %263, %cst_116 {dimension_numbers = #tpu.dot_dimension_numbers<[1], [0], [0], [1], [0, 0, 1, 1], [], []>} : vector<64x64xbf16>, vector<64x32xbf16>, vector<64x32xf32> -> vector<64x32xf32>
    %265 = vector.broadcast %44 : vector<64x1xf32> to vector<64x32xf32>
    %266 = arith.addf %264, %265 : vector<64x32xf32>
    %cst_117 = arith.constant 0.000000e+00 : f32
    %267 = vector.broadcast %cst_117 : f32 to vector<64x32xf32>
    %268 = arith.maximumf %266, %267 : vector<64x32xf32>
    %269 = arith.truncf %268 : vector<64x32xf32> to vector<64x32xbf16>
    %cst_118 = arith.constant dense<0.000000e+00> : vector<128x32xf32>
    %270 = tpu.matmul %45, %269, %cst_118 {dimension_numbers = #tpu.dot_dimension_numbers<[1], [0], [0], [1], [0, 0, 1, 1], [], []>} : vector<128x64xbf16>, vector<64x32xbf16>, vector<128x32xf32> -> vector<128x32xf32>
    %271 = vector.broadcast %46 : vector<128x1xf32> to vector<128x32xf32>
    %272 = arith.addf %270, %271 : vector<128x32xf32>
    %273 = vector.extract_strided_slice %272 {offsets = [0, 0], sizes = [64, 32], strides = [1, 1]} : vector<128x32xf32> to vector<64x32xf32>
    %274 = vector.extract_strided_slice %272 {offsets = [64, 0], sizes = [64, 32], strides = [1, 1]} : vector<128x32xf32> to vector<64x32xf32>
    %cst_119 = arith.constant 0.000000e+00 : f32
    %275 = vector.broadcast %cst_119 : f32 to vector<64x32xf32>
    %276 = arith.maximumf %274, %275 : vector<64x32xf32>
    %277 = vector.shape_cast %276 : vector<64x32xf32> to vector<8x8x32xf32>
    %cst_120 = arith.constant dense<0xFF800000> : vector<8x32xf32>
    %278 = vector.multi_reduction <maximumf>, %277, %cst_120 [1] : vector<8x8x32xf32> to vector<8x32xf32>
    %279 = arith.truncf %278 : vector<8x32xf32> to vector<8x32xbf16>
    %cst_121 = arith.constant dense<0.000000e+00> : vector<8x8xf32>
    %280 = tpu.matmul %279, %47, %cst_121 {dimension_numbers = #tpu.dot_dimension_numbers<[1], [0], [0], [1], [0, 0, 1, 1], [], []>} : vector<8x32xbf16>, vector<32x8xbf16>, vector<8x8xf32> -> vector<8x8xf32>
    %281 = vector.broadcast %48 : vector<1x8xf32> to vector<8x8xf32>
    %282 = arith.addf %280, %281 : vector<8x8xf32>
    %283 = arith.subf %165, %273 : vector<64x32xf32>
    %284 = arith.addf %166, %282 : vector<8x8xf32>
    %c0_122 = arith.constant 0 : index
    %c0_123 = arith.constant 0 : index
    %285 = vector.load %arg13[%c0_122, %c0_123] : memref<128x64xbf16, #tpu.memory_space<vmem>>, vector<128x64xbf16>
    %c0_124 = arith.constant 0 : index
    %c0_125 = arith.constant 0 : index
    %286 = vector.load %arg14[%c0_124, %c0_125] : memref<128x1xf32, #tpu.memory_space<vmem>>, vector<128x1xf32>
    %c0_126 = arith.constant 0 : index
    %c0_127 = arith.constant 0 : index
    %287 = vector.load %arg15[%c0_126, %c0_127] : memref<128x128xbf16, #tpu.memory_space<vmem>>, vector<128x128xbf16>
    %c0_128 = arith.constant 0 : index
    %c0_129 = arith.constant 0 : index
    %288 = vector.load %arg16[%c0_128, %c0_129] : memref<128x1xf32, #tpu.memory_space<vmem>>, vector<128x1xf32>
    %c0_130 = arith.constant 0 : index
    %c0_131 = arith.constant 0 : index
    %289 = vector.load %arg17[%c0_130, %c0_131] : memref<32x8xbf16, #tpu.memory_space<vmem>>, vector<32x8xbf16>
    %c0_132 = arith.constant 0 : index
    %c0_133 = arith.constant 0 : index
    %290 = vector.load %arg18[%c0_132, %c0_133] : memref<1x8xf32, #tpu.memory_space<vmem>>, vector<1x8xf32>
    %c0_134 = arith.constant 0 : index
    %c0_135 = arith.constant 0 : index
    %c0_136 = arith.constant 0 : index
    %291 = vector.load %arg11[%c0_134, %c0_135, %c0_136] : memref<4x96x32xbf16, #tpu.memory_space<vmem>>, vector<1x96x32xbf16>
    %292 = vector.shape_cast %291 : vector<1x96x32xbf16> to vector<96x32xbf16>
    %c0_137 = arith.constant 0 : index
    %c0_138 = arith.constant 0 : index
    %c0_139 = arith.constant 0 : index
    %293 = vector.load %arg12[%c0_137, %c0_138, %c0_139] : memref<4x1x32xf32, #tpu.memory_space<vmem>>, vector<1x1x32xf32>
    %294 = vector.shape_cast %293 : vector<1x1x32xf32> to vector<1x32xf32>
    %cst_140 = arith.constant 0.000000e+00 : f32
    %295 = vector.broadcast %cst_140 : f32 to vector<1x32xf32>
    %296 = vector.extract_strided_slice %283 {offsets = [0, 0], sizes = [63, 32], strides = [1, 1]} : vector<64x32xf32> to vector<63x32xf32>
    %297 = tpu.concatenate %295, %296 in 0 : vector<1x32xf32>, vector<63x32xf32> -> vector<64x32xf32>
    %cst_141 = arith.constant 0.000000e+00 : f32
    %298 = vector.shape_cast %18 : vector<64x1xi1> to vector<64x1xi1>
    %299 = vector.broadcast %298 : vector<64x1xi1> to vector<64x32xi1>
    %300 = vector.broadcast %cst_141 : f32 to vector<64x32xf32>
    %301 = arith.select %299, %300, %297 : vector<64x32xi1>, vector<64x32xf32>
    %302 = vector.extract_strided_slice %283 {offsets = [1, 0], sizes = [63, 32], strides = [1, 1]} : vector<64x32xf32> to vector<63x32xf32>
    %303 = tpu.concatenate %302, %295 in 0 : vector<63x32xf32>, vector<1x32xf32> -> vector<64x32xf32>
    %cst_142 = arith.constant 0.000000e+00 : f32
    %304 = vector.shape_cast %20 : vector<64x1xi1> to vector<64x1xi1>
    %305 = vector.broadcast %304 : vector<64x1xi1> to vector<64x32xi1>
    %306 = vector.broadcast %cst_142 : f32 to vector<64x32xf32>
    %307 = arith.select %305, %306, %303 : vector<64x32xi1>, vector<64x32xf32>
    %308 = tpu.concatenate %301, %283, %307 in 1 : vector<64x32xf32>, vector<64x32xf32>, vector<64x32xf32> -> vector<64x96xf32>
    %309 = arith.truncf %308 : vector<64x96xf32> to vector<64x96xbf16>
    %cst_143 = arith.constant dense<0.000000e+00> : vector<64x32xf32>
    %310 = tpu.matmul %309, %292, %cst_143 {dimension_numbers = #tpu.dot_dimension_numbers<[1], [0], [0], [1], [0, 0, 1, 1], [], []>} : vector<64x96xbf16>, vector<96x32xbf16>, vector<64x32xf32> -> vector<64x32xf32>
    %311 = vector.broadcast %294 : vector<1x32xf32> to vector<64x32xf32>
    %312 = arith.addf %310, %311 : vector<64x32xf32>
    %cst_144 = arith.constant 0.000000e+00 : f32
    %313 = vector.broadcast %cst_144 : f32 to vector<64x32xf32>
    %314 = arith.maximumf %312, %313 : vector<64x32xf32>
    %c1_145 = arith.constant 1 : index
    %c0_146 = arith.constant 0 : index
    %c0_147 = arith.constant 0 : index
    %315 = vector.load %arg11[%c1_145, %c0_146, %c0_147] : memref<4x96x32xbf16, #tpu.memory_space<vmem>>, vector<1x96x32xbf16>
    %316 = vector.shape_cast %315 : vector<1x96x32xbf16> to vector<96x32xbf16>
    %c1_148 = arith.constant 1 : index
    %c0_149 = arith.constant 0 : index
    %c0_150 = arith.constant 0 : index
    %317 = vector.load %arg12[%c1_148, %c0_149, %c0_150] : memref<4x1x32xf32, #tpu.memory_space<vmem>>, vector<1x1x32xf32>
    %318 = vector.shape_cast %317 : vector<1x1x32xf32> to vector<1x32xf32>
    %cst_151 = arith.constant 0.000000e+00 : f32
    %319 = vector.broadcast %cst_151 : f32 to vector<1x32xf32>
    %320 = vector.extract_strided_slice %314 {offsets = [0, 0], sizes = [63, 32], strides = [1, 1]} : vector<64x32xf32> to vector<63x32xf32>
    %321 = tpu.concatenate %319, %320 in 0 : vector<1x32xf32>, vector<63x32xf32> -> vector<64x32xf32>
    %cst_152 = arith.constant 0.000000e+00 : f32
    %322 = vector.shape_cast %18 : vector<64x1xi1> to vector<64x1xi1>
    %323 = vector.broadcast %322 : vector<64x1xi1> to vector<64x32xi1>
    %324 = vector.broadcast %cst_152 : f32 to vector<64x32xf32>
    %325 = arith.select %323, %324, %321 : vector<64x32xi1>, vector<64x32xf32>
    %326 = vector.extract_strided_slice %314 {offsets = [1, 0], sizes = [63, 32], strides = [1, 1]} : vector<64x32xf32> to vector<63x32xf32>
    %327 = tpu.concatenate %326, %319 in 0 : vector<63x32xf32>, vector<1x32xf32> -> vector<64x32xf32>
    %cst_153 = arith.constant 0.000000e+00 : f32
    %328 = vector.shape_cast %20 : vector<64x1xi1> to vector<64x1xi1>
    %329 = vector.broadcast %328 : vector<64x1xi1> to vector<64x32xi1>
    %330 = vector.broadcast %cst_153 : f32 to vector<64x32xf32>
    %331 = arith.select %329, %330, %327 : vector<64x32xi1>, vector<64x32xf32>
    %332 = tpu.concatenate %325, %314, %331 in 1 : vector<64x32xf32>, vector<64x32xf32>, vector<64x32xf32> -> vector<64x96xf32>
    %333 = arith.truncf %332 : vector<64x96xf32> to vector<64x96xbf16>
    %cst_154 = arith.constant dense<0.000000e+00> : vector<64x32xf32>
    %334 = tpu.matmul %333, %316, %cst_154 {dimension_numbers = #tpu.dot_dimension_numbers<[1], [0], [0], [1], [0, 0, 1, 1], [], []>} : vector<64x96xbf16>, vector<96x32xbf16>, vector<64x32xf32> -> vector<64x32xf32>
    %335 = vector.broadcast %318 : vector<1x32xf32> to vector<64x32xf32>
    %336 = arith.addf %334, %335 : vector<64x32xf32>
    %cst_155 = arith.constant 0.000000e+00 : f32
    %337 = vector.broadcast %cst_155 : f32 to vector<64x32xf32>
    %338 = arith.maximumf %336, %337 : vector<64x32xf32>
    %c2_156 = arith.constant 2 : index
    %c0_157 = arith.constant 0 : index
    %c0_158 = arith.constant 0 : index
    %339 = vector.load %arg11[%c2_156, %c0_157, %c0_158] : memref<4x96x32xbf16, #tpu.memory_space<vmem>>, vector<1x96x32xbf16>
    %340 = vector.shape_cast %339 : vector<1x96x32xbf16> to vector<96x32xbf16>
    %c2_159 = arith.constant 2 : index
    %c0_160 = arith.constant 0 : index
    %c0_161 = arith.constant 0 : index
    %341 = vector.load %arg12[%c2_159, %c0_160, %c0_161] : memref<4x1x32xf32, #tpu.memory_space<vmem>>, vector<1x1x32xf32>
    %342 = vector.shape_cast %341 : vector<1x1x32xf32> to vector<1x32xf32>
    %cst_162 = arith.constant 0.000000e+00 : f32
    %343 = vector.broadcast %cst_162 : f32 to vector<1x32xf32>
    %344 = vector.extract_strided_slice %338 {offsets = [0, 0], sizes = [63, 32], strides = [1, 1]} : vector<64x32xf32> to vector<63x32xf32>
    %345 = tpu.concatenate %343, %344 in 0 : vector<1x32xf32>, vector<63x32xf32> -> vector<64x32xf32>
    %cst_163 = arith.constant 0.000000e+00 : f32
    %346 = vector.shape_cast %18 : vector<64x1xi1> to vector<64x1xi1>
    %347 = vector.broadcast %346 : vector<64x1xi1> to vector<64x32xi1>
    %348 = vector.broadcast %cst_163 : f32 to vector<64x32xf32>
    %349 = arith.select %347, %348, %345 : vector<64x32xi1>, vector<64x32xf32>
    %350 = vector.extract_strided_slice %338 {offsets = [1, 0], sizes = [63, 32], strides = [1, 1]} : vector<64x32xf32> to vector<63x32xf32>
    %351 = tpu.concatenate %350, %343 in 0 : vector<63x32xf32>, vector<1x32xf32> -> vector<64x32xf32>
    %cst_164 = arith.constant 0.000000e+00 : f32
    %352 = vector.shape_cast %20 : vector<64x1xi1> to vector<64x1xi1>
    %353 = vector.broadcast %352 : vector<64x1xi1> to vector<64x32xi1>
    %354 = vector.broadcast %cst_164 : f32 to vector<64x32xf32>
    %355 = arith.select %353, %354, %351 : vector<64x32xi1>, vector<64x32xf32>
    %356 = tpu.concatenate %349, %338, %355 in 1 : vector<64x32xf32>, vector<64x32xf32>, vector<64x32xf32> -> vector<64x96xf32>
    %357 = arith.truncf %356 : vector<64x96xf32> to vector<64x96xbf16>
    %cst_165 = arith.constant dense<0.000000e+00> : vector<64x32xf32>
    %358 = tpu.matmul %357, %340, %cst_165 {dimension_numbers = #tpu.dot_dimension_numbers<[1], [0], [0], [1], [0, 0, 1, 1], [], []>} : vector<64x96xbf16>, vector<96x32xbf16>, vector<64x32xf32> -> vector<64x32xf32>
    %359 = vector.broadcast %342 : vector<1x32xf32> to vector<64x32xf32>
    %360 = arith.addf %358, %359 : vector<64x32xf32>
    %cst_166 = arith.constant 0.000000e+00 : f32
    %361 = vector.broadcast %cst_166 : f32 to vector<64x32xf32>
    %362 = arith.maximumf %360, %361 : vector<64x32xf32>
    %c3_167 = arith.constant 3 : index
    %c0_168 = arith.constant 0 : index
    %c0_169 = arith.constant 0 : index
    %363 = vector.load %arg11[%c3_167, %c0_168, %c0_169] : memref<4x96x32xbf16, #tpu.memory_space<vmem>>, vector<1x96x32xbf16>
    %364 = vector.shape_cast %363 : vector<1x96x32xbf16> to vector<96x32xbf16>
    %c3_170 = arith.constant 3 : index
    %c0_171 = arith.constant 0 : index
    %c0_172 = arith.constant 0 : index
    %365 = vector.load %arg12[%c3_170, %c0_171, %c0_172] : memref<4x1x32xf32, #tpu.memory_space<vmem>>, vector<1x1x32xf32>
    %366 = vector.shape_cast %365 : vector<1x1x32xf32> to vector<1x32xf32>
    %cst_173 = arith.constant 0.000000e+00 : f32
    %367 = vector.broadcast %cst_173 : f32 to vector<1x32xf32>
    %368 = vector.extract_strided_slice %362 {offsets = [0, 0], sizes = [63, 32], strides = [1, 1]} : vector<64x32xf32> to vector<63x32xf32>
    %369 = tpu.concatenate %367, %368 in 0 : vector<1x32xf32>, vector<63x32xf32> -> vector<64x32xf32>
    %cst_174 = arith.constant 0.000000e+00 : f32
    %370 = vector.shape_cast %18 : vector<64x1xi1> to vector<64x1xi1>
    %371 = vector.broadcast %370 : vector<64x1xi1> to vector<64x32xi1>
    %372 = vector.broadcast %cst_174 : f32 to vector<64x32xf32>
    %373 = arith.select %371, %372, %369 : vector<64x32xi1>, vector<64x32xf32>
    %374 = vector.extract_strided_slice %362 {offsets = [1, 0], sizes = [63, 32], strides = [1, 1]} : vector<64x32xf32> to vector<63x32xf32>
    %375 = tpu.concatenate %374, %367 in 0 : vector<63x32xf32>, vector<1x32xf32> -> vector<64x32xf32>
    %cst_175 = arith.constant 0.000000e+00 : f32
    %376 = vector.shape_cast %20 : vector<64x1xi1> to vector<64x1xi1>
    %377 = vector.broadcast %376 : vector<64x1xi1> to vector<64x32xi1>
    %378 = vector.broadcast %cst_175 : f32 to vector<64x32xf32>
    %379 = arith.select %377, %378, %375 : vector<64x32xi1>, vector<64x32xf32>
    %380 = tpu.concatenate %373, %362, %379 in 1 : vector<64x32xf32>, vector<64x32xf32>, vector<64x32xf32> -> vector<64x96xf32>
    %381 = arith.truncf %380 : vector<64x96xf32> to vector<64x96xbf16>
    %cst_176 = arith.constant dense<0.000000e+00> : vector<64x32xf32>
    %382 = tpu.matmul %381, %364, %cst_176 {dimension_numbers = #tpu.dot_dimension_numbers<[1], [0], [0], [1], [0, 0, 1, 1], [], []>} : vector<64x96xbf16>, vector<96x32xbf16>, vector<64x32xf32> -> vector<64x32xf32>
    %383 = vector.broadcast %366 : vector<1x32xf32> to vector<64x32xf32>
    %384 = arith.addf %382, %383 : vector<64x32xf32>
    %cst_177 = arith.constant 0.000000e+00 : f32
    %385 = vector.broadcast %cst_177 : f32 to vector<64x32xf32>
    %386 = arith.maximumf %384, %385 : vector<64x32xf32>
    %387 = arith.truncf %386 : vector<64x32xf32> to vector<64x32xbf16>
    %cst_178 = arith.constant dense<0.000000e+00> : vector<128x32xf32>
    %388 = tpu.matmul %285, %387, %cst_178 {dimension_numbers = #tpu.dot_dimension_numbers<[1], [0], [0], [1], [0, 0, 1, 1], [], []>} : vector<128x64xbf16>, vector<64x32xbf16>, vector<128x32xf32> -> vector<128x32xf32>
    %389 = vector.broadcast %286 : vector<128x1xf32> to vector<128x32xf32>
    %390 = arith.addf %388, %389 : vector<128x32xf32>
    %cst_179 = arith.constant 0.000000e+00 : f32
    %391 = vector.broadcast %cst_179 : f32 to vector<128x32xf32>
    %392 = arith.maximumf %390, %391 : vector<128x32xf32>
    %393 = arith.truncf %392 : vector<128x32xf32> to vector<128x32xbf16>
    %cst_180 = arith.constant dense<0.000000e+00> : vector<128x32xf32>
    %394 = tpu.matmul %287, %393, %cst_180 {dimension_numbers = #tpu.dot_dimension_numbers<[1], [0], [0], [1], [0, 0, 1, 1], [], []>} : vector<128x128xbf16>, vector<128x32xbf16>, vector<128x32xf32> -> vector<128x32xf32>
    %395 = vector.broadcast %288 : vector<128x1xf32> to vector<128x32xf32>
    %396 = arith.addf %394, %395 : vector<128x32xf32>
    %397 = vector.extract_strided_slice %396 {offsets = [0, 0], sizes = [64, 32], strides = [1, 1]} : vector<128x32xf32> to vector<64x32xf32>
    %398 = vector.extract_strided_slice %396 {offsets = [64, 0], sizes = [64, 32], strides = [1, 1]} : vector<128x32xf32> to vector<64x32xf32>
    %cst_181 = arith.constant 0.000000e+00 : f32
    %399 = vector.broadcast %cst_181 : f32 to vector<64x32xf32>
    %400 = arith.maximumf %398, %399 : vector<64x32xf32>
    %401 = vector.shape_cast %400 : vector<64x32xf32> to vector<8x8x32xf32>
    %cst_182 = arith.constant dense<0xFF800000> : vector<8x32xf32>
    %402 = vector.multi_reduction <maximumf>, %401, %cst_182 [1] : vector<8x8x32xf32> to vector<8x32xf32>
    %403 = arith.truncf %402 : vector<8x32xf32> to vector<8x32xbf16>
    %cst_183 = arith.constant dense<0.000000e+00> : vector<8x8xf32>
    %404 = tpu.matmul %403, %289, %cst_183 {dimension_numbers = #tpu.dot_dimension_numbers<[1], [0], [0], [1], [0, 0, 1, 1], [], []>} : vector<8x32xbf16>, vector<32x8xbf16>, vector<8x8xf32> -> vector<8x8xf32>
    %405 = vector.broadcast %290 : vector<1x8xf32> to vector<8x8xf32>
    %406 = arith.addf %404, %405 : vector<8x8xf32>
    %407 = arith.subf %283, %397 : vector<64x32xf32>
    %408 = arith.addf %284, %406 : vector<8x8xf32>
    %c0_184 = arith.constant 0 : index
    %c0_185 = arith.constant 0 : index
    %c0_186 = arith.constant 0 : index
    %409 = vector.load %arg11[%c0_184, %c0_185, %c0_186] : memref<4x96x32xbf16, #tpu.memory_space<vmem>>, vector<1x96x32xbf16>
    %410 = vector.shape_cast %409 : vector<1x96x32xbf16> to vector<96x32xbf16>
    %c0_187 = arith.constant 0 : index
    %c0_188 = arith.constant 0 : index
    %c0_189 = arith.constant 0 : index
    %411 = vector.load %arg12[%c0_187, %c0_188, %c0_189] : memref<4x1x32xf32, #tpu.memory_space<vmem>>, vector<1x1x32xf32>
    %412 = vector.shape_cast %411 : vector<1x1x32xf32> to vector<1x32xf32>
    %cst_190 = arith.constant 0.000000e+00 : f32
    %413 = vector.broadcast %cst_190 : f32 to vector<1x32xf32>
    %414 = vector.extract_strided_slice %407 {offsets = [0, 0], sizes = [63, 32], strides = [1, 1]} : vector<64x32xf32> to vector<63x32xf32>
    %415 = tpu.concatenate %413, %414 in 0 : vector<1x32xf32>, vector<63x32xf32> -> vector<64x32xf32>
    %cst_191 = arith.constant 0.000000e+00 : f32
    %416 = vector.shape_cast %18 : vector<64x1xi1> to vector<64x1xi1>
    %417 = vector.broadcast %416 : vector<64x1xi1> to vector<64x32xi1>
    %418 = vector.broadcast %cst_191 : f32 to vector<64x32xf32>
    %419 = arith.select %417, %418, %415 : vector<64x32xi1>, vector<64x32xf32>
    %420 = vector.extract_strided_slice %407 {offsets = [1, 0], sizes = [63, 32], strides = [1, 1]} : vector<64x32xf32> to vector<63x32xf32>
    %421 = tpu.concatenate %420, %413 in 0 : vector<63x32xf32>, vector<1x32xf32> -> vector<64x32xf32>
    %cst_192 = arith.constant 0.000000e+00 : f32
    %422 = vector.shape_cast %20 : vector<64x1xi1> to vector<64x1xi1>
    %423 = vector.broadcast %422 : vector<64x1xi1> to vector<64x32xi1>
    %424 = vector.broadcast %cst_192 : f32 to vector<64x32xf32>
    %425 = arith.select %423, %424, %421 : vector<64x32xi1>, vector<64x32xf32>
    %426 = tpu.concatenate %419, %407, %425 in 1 : vector<64x32xf32>, vector<64x32xf32>, vector<64x32xf32> -> vector<64x96xf32>
    %427 = arith.truncf %426 : vector<64x96xf32> to vector<64x96xbf16>
    %cst_193 = arith.constant dense<0.000000e+00> : vector<64x32xf32>
    %428 = tpu.matmul %427, %410, %cst_193 {dimension_numbers = #tpu.dot_dimension_numbers<[1], [0], [0], [1], [0, 0, 1, 1], [], []>} : vector<64x96xbf16>, vector<96x32xbf16>, vector<64x32xf32> -> vector<64x32xf32>
    %429 = vector.broadcast %412 : vector<1x32xf32> to vector<64x32xf32>
    %430 = arith.addf %428, %429 : vector<64x32xf32>
    %cst_194 = arith.constant 0.000000e+00 : f32
    %431 = vector.broadcast %cst_194 : f32 to vector<64x32xf32>
    %432 = arith.maximumf %430, %431 : vector<64x32xf32>
    %c1_195 = arith.constant 1 : index
    %c0_196 = arith.constant 0 : index
    %c0_197 = arith.constant 0 : index
    %433 = vector.load %arg11[%c1_195, %c0_196, %c0_197] : memref<4x96x32xbf16, #tpu.memory_space<vmem>>, vector<1x96x32xbf16>
    %434 = vector.shape_cast %433 : vector<1x96x32xbf16> to vector<96x32xbf16>
    %c1_198 = arith.constant 1 : index
    %c0_199 = arith.constant 0 : index
    %c0_200 = arith.constant 0 : index
    %435 = vector.load %arg12[%c1_198, %c0_199, %c0_200] : memref<4x1x32xf32, #tpu.memory_space<vmem>>, vector<1x1x32xf32>
    %436 = vector.shape_cast %435 : vector<1x1x32xf32> to vector<1x32xf32>
    %cst_201 = arith.constant 0.000000e+00 : f32
    %437 = vector.broadcast %cst_201 : f32 to vector<1x32xf32>
    %438 = vector.extract_strided_slice %432 {offsets = [0, 0], sizes = [63, 32], strides = [1, 1]} : vector<64x32xf32> to vector<63x32xf32>
    %439 = tpu.concatenate %437, %438 in 0 : vector<1x32xf32>, vector<63x32xf32> -> vector<64x32xf32>
    %cst_202 = arith.constant 0.000000e+00 : f32
    %440 = vector.shape_cast %18 : vector<64x1xi1> to vector<64x1xi1>
    %441 = vector.broadcast %440 : vector<64x1xi1> to vector<64x32xi1>
    %442 = vector.broadcast %cst_202 : f32 to vector<64x32xf32>
    %443 = arith.select %441, %442, %439 : vector<64x32xi1>, vector<64x32xf32>
    %444 = vector.extract_strided_slice %432 {offsets = [1, 0], sizes = [63, 32], strides = [1, 1]} : vector<64x32xf32> to vector<63x32xf32>
    %445 = tpu.concatenate %444, %437 in 0 : vector<63x32xf32>, vector<1x32xf32> -> vector<64x32xf32>
    %cst_203 = arith.constant 0.000000e+00 : f32
    %446 = vector.shape_cast %20 : vector<64x1xi1> to vector<64x1xi1>
    %447 = vector.broadcast %446 : vector<64x1xi1> to vector<64x32xi1>
    %448 = vector.broadcast %cst_203 : f32 to vector<64x32xf32>
    %449 = arith.select %447, %448, %445 : vector<64x32xi1>, vector<64x32xf32>
    %450 = tpu.concatenate %443, %432, %449 in 1 : vector<64x32xf32>, vector<64x32xf32>, vector<64x32xf32> -> vector<64x96xf32>
    %451 = arith.truncf %450 : vector<64x96xf32> to vector<64x96xbf16>
    %cst_204 = arith.constant dense<0.000000e+00> : vector<64x32xf32>
    %452 = tpu.matmul %451, %434, %cst_204 {dimension_numbers = #tpu.dot_dimension_numbers<[1], [0], [0], [1], [0, 0, 1, 1], [], []>} : vector<64x96xbf16>, vector<96x32xbf16>, vector<64x32xf32> -> vector<64x32xf32>
    %453 = vector.broadcast %436 : vector<1x32xf32> to vector<64x32xf32>
    %454 = arith.addf %452, %453 : vector<64x32xf32>
    %cst_205 = arith.constant 0.000000e+00 : f32
    %455 = vector.broadcast %cst_205 : f32 to vector<64x32xf32>
    %456 = arith.maximumf %454, %455 : vector<64x32xf32>
    %c2_206 = arith.constant 2 : index
    %c0_207 = arith.constant 0 : index
    %c0_208 = arith.constant 0 : index
    %457 = vector.load %arg11[%c2_206, %c0_207, %c0_208] : memref<4x96x32xbf16, #tpu.memory_space<vmem>>, vector<1x96x32xbf16>
    %458 = vector.shape_cast %457 : vector<1x96x32xbf16> to vector<96x32xbf16>
    %c2_209 = arith.constant 2 : index
    %c0_210 = arith.constant 0 : index
    %c0_211 = arith.constant 0 : index
    %459 = vector.load %arg12[%c2_209, %c0_210, %c0_211] : memref<4x1x32xf32, #tpu.memory_space<vmem>>, vector<1x1x32xf32>
    %460 = vector.shape_cast %459 : vector<1x1x32xf32> to vector<1x32xf32>
    %cst_212 = arith.constant 0.000000e+00 : f32
    %461 = vector.broadcast %cst_212 : f32 to vector<1x32xf32>
    %462 = vector.extract_strided_slice %456 {offsets = [0, 0], sizes = [63, 32], strides = [1, 1]} : vector<64x32xf32> to vector<63x32xf32>
    %463 = tpu.concatenate %461, %462 in 0 : vector<1x32xf32>, vector<63x32xf32> -> vector<64x32xf32>
    %cst_213 = arith.constant 0.000000e+00 : f32
    %464 = vector.shape_cast %18 : vector<64x1xi1> to vector<64x1xi1>
    %465 = vector.broadcast %464 : vector<64x1xi1> to vector<64x32xi1>
    %466 = vector.broadcast %cst_213 : f32 to vector<64x32xf32>
    %467 = arith.select %465, %466, %463 : vector<64x32xi1>, vector<64x32xf32>
    %468 = vector.extract_strided_slice %456 {offsets = [1, 0], sizes = [63, 32], strides = [1, 1]} : vector<64x32xf32> to vector<63x32xf32>
    %469 = tpu.concatenate %468, %461 in 0 : vector<63x32xf32>, vector<1x32xf32> -> vector<64x32xf32>
    %cst_214 = arith.constant 0.000000e+00 : f32
    %470 = vector.shape_cast %20 : vector<64x1xi1> to vector<64x1xi1>
    %471 = vector.broadcast %470 : vector<64x1xi1> to vector<64x32xi1>
    %472 = vector.broadcast %cst_214 : f32 to vector<64x32xf32>
    %473 = arith.select %471, %472, %469 : vector<64x32xi1>, vector<64x32xf32>
    %474 = tpu.concatenate %467, %456, %473 in 1 : vector<64x32xf32>, vector<64x32xf32>, vector<64x32xf32> -> vector<64x96xf32>
    %475 = arith.truncf %474 : vector<64x96xf32> to vector<64x96xbf16>
    %cst_215 = arith.constant dense<0.000000e+00> : vector<64x32xf32>
    %476 = tpu.matmul %475, %458, %cst_215 {dimension_numbers = #tpu.dot_dimension_numbers<[1], [0], [0], [1], [0, 0, 1, 1], [], []>} : vector<64x96xbf16>, vector<96x32xbf16>, vector<64x32xf32> -> vector<64x32xf32>
    %477 = vector.broadcast %460 : vector<1x32xf32> to vector<64x32xf32>
    %478 = arith.addf %476, %477 : vector<64x32xf32>
    %cst_216 = arith.constant 0.000000e+00 : f32
    %479 = vector.broadcast %cst_216 : f32 to vector<64x32xf32>
    %480 = arith.maximumf %478, %479 : vector<64x32xf32>
    %c3_217 = arith.constant 3 : index
    %c0_218 = arith.constant 0 : index
    %c0_219 = arith.constant 0 : index
    %481 = vector.load %arg11[%c3_217, %c0_218, %c0_219] : memref<4x96x32xbf16, #tpu.memory_space<vmem>>, vector<1x96x32xbf16>
    %482 = vector.shape_cast %481 : vector<1x96x32xbf16> to vector<96x32xbf16>
    %c3_220 = arith.constant 3 : index
    %c0_221 = arith.constant 0 : index
    %c0_222 = arith.constant 0 : index
    %483 = vector.load %arg12[%c3_220, %c0_221, %c0_222] : memref<4x1x32xf32, #tpu.memory_space<vmem>>, vector<1x1x32xf32>
    %484 = vector.shape_cast %483 : vector<1x1x32xf32> to vector<1x32xf32>
    %cst_223 = arith.constant 0.000000e+00 : f32
    %485 = vector.broadcast %cst_223 : f32 to vector<1x32xf32>
    %486 = vector.extract_strided_slice %480 {offsets = [0, 0], sizes = [63, 32], strides = [1, 1]} : vector<64x32xf32> to vector<63x32xf32>
    %487 = tpu.concatenate %485, %486 in 0 : vector<1x32xf32>, vector<63x32xf32> -> vector<64x32xf32>
    %cst_224 = arith.constant 0.000000e+00 : f32
    %488 = vector.shape_cast %18 : vector<64x1xi1> to vector<64x1xi1>
    %489 = vector.broadcast %488 : vector<64x1xi1> to vector<64x32xi1>
    %490 = vector.broadcast %cst_224 : f32 to vector<64x32xf32>
    %491 = arith.select %489, %490, %487 : vector<64x32xi1>, vector<64x32xf32>
    %492 = vector.extract_strided_slice %480 {offsets = [1, 0], sizes = [63, 32], strides = [1, 1]} : vector<64x32xf32> to vector<63x32xf32>
    %493 = tpu.concatenate %492, %485 in 0 : vector<63x32xf32>, vector<1x32xf32> -> vector<64x32xf32>
    %cst_225 = arith.constant 0.000000e+00 : f32
    %494 = vector.shape_cast %20 : vector<64x1xi1> to vector<64x1xi1>
    %495 = vector.broadcast %494 : vector<64x1xi1> to vector<64x32xi1>
    %496 = vector.broadcast %cst_225 : f32 to vector<64x32xf32>
    %497 = arith.select %495, %496, %493 : vector<64x32xi1>, vector<64x32xf32>
    %498 = tpu.concatenate %491, %480, %497 in 1 : vector<64x32xf32>, vector<64x32xf32>, vector<64x32xf32> -> vector<64x96xf32>
    %499 = arith.truncf %498 : vector<64x96xf32> to vector<64x96xbf16>
    %cst_226 = arith.constant dense<0.000000e+00> : vector<64x32xf32>
    %500 = tpu.matmul %499, %482, %cst_226 {dimension_numbers = #tpu.dot_dimension_numbers<[1], [0], [0], [1], [0, 0, 1, 1], [], []>} : vector<64x96xbf16>, vector<96x32xbf16>, vector<64x32xf32> -> vector<64x32xf32>
    %501 = vector.broadcast %484 : vector<1x32xf32> to vector<64x32xf32>
    %502 = arith.addf %500, %501 : vector<64x32xf32>
    %cst_227 = arith.constant 0.000000e+00 : f32
    %503 = vector.broadcast %cst_227 : f32 to vector<64x32xf32>
    %504 = arith.maximumf %502, %503 : vector<64x32xf32>
    %505 = arith.truncf %504 : vector<64x32xf32> to vector<64x32xbf16>
    %cst_228 = arith.constant dense<0.000000e+00> : vector<128x32xf32>
    %506 = tpu.matmul %285, %505, %cst_228 {dimension_numbers = #tpu.dot_dimension_numbers<[1], [0], [0], [1], [0, 0, 1, 1], [], []>} : vector<128x64xbf16>, vector<64x32xbf16>, vector<128x32xf32> -> vector<128x32xf32>
    %507 = vector.broadcast %286 : vector<128x1xf32> to vector<128x32xf32>
    %508 = arith.addf %506, %507 : vector<128x32xf32>
    %cst_229 = arith.constant 0.000000e+00 : f32
    %509 = vector.broadcast %cst_229 : f32 to vector<128x32xf32>
    %510 = arith.maximumf %508, %509 : vector<128x32xf32>
    %511 = arith.truncf %510 : vector<128x32xf32> to vector<128x32xbf16>
    %cst_230 = arith.constant dense<0.000000e+00> : vector<128x32xf32>
    %512 = tpu.matmul %287, %511, %cst_230 {dimension_numbers = #tpu.dot_dimension_numbers<[1], [0], [0], [1], [0, 0, 1, 1], [], []>} : vector<128x128xbf16>, vector<128x32xbf16>, vector<128x32xf32> -> vector<128x32xf32>
    %513 = vector.broadcast %288 : vector<128x1xf32> to vector<128x32xf32>
    %514 = arith.addf %512, %513 : vector<128x32xf32>
    %515 = vector.extract_strided_slice %514 {offsets = [64, 0], sizes = [64, 32], strides = [1, 1]} : vector<128x32xf32> to vector<64x32xf32>
    %cst_231 = arith.constant 0.000000e+00 : f32
    %516 = vector.broadcast %cst_231 : f32 to vector<64x32xf32>
    %517 = arith.maximumf %515, %516 : vector<64x32xf32>
    %518 = vector.shape_cast %517 : vector<64x32xf32> to vector<8x8x32xf32>
    %cst_232 = arith.constant dense<0xFF800000> : vector<8x32xf32>
    %519 = vector.multi_reduction <maximumf>, %518, %cst_232 [1] : vector<8x8x32xf32> to vector<8x32xf32>
    %520 = arith.truncf %519 : vector<8x32xf32> to vector<8x32xbf16>
    %cst_233 = arith.constant dense<0.000000e+00> : vector<8x8xf32>
    %521 = tpu.matmul %520, %289, %cst_233 {dimension_numbers = #tpu.dot_dimension_numbers<[1], [0], [0], [1], [0, 0, 1, 1], [], []>} : vector<8x32xbf16>, vector<32x8xbf16>, vector<8x8xf32> -> vector<8x8xf32>
    %522 = vector.broadcast %290 : vector<1x8xf32> to vector<8x8xf32>
    %523 = arith.addf %521, %522 : vector<8x8xf32>
    %524 = arith.addf %408, %523 : vector<8x8xf32>
    %c0_234 = arith.constant 0 : index
    %c0_235 = arith.constant 0 : index
    %525 = vector.load %arg19[%c0_234, %c0_235] : memref<8x8xf32, #tpu.memory_space<vmem>>, vector<8x8xf32>
    tpu.vector_store %arg19[%c0_234, %c0_235], %524 {strides = array<i32>} : memref<8x8xf32, #tpu.memory_space<vmem>>, vector<8x8xf32>,
    return
  }
}

</mosaic_0001>

<llo_original>
// kernel: tpu_custom_call.1
$region0: #{tpu_custom_call.1}
  #allocation0 [shape = 'u32[]', space=smem, size = 0x4, offset = 0x4, fixed_abs, tag = 'smem constant byte address 0x4 - core index']
  #allocation1 [shape = 'u32[72,128]{1,0:T(1,128)}', space=vmem, size = 0x9000, scoped, tag = 'internal scratch']
  %s0 = inlined_call_operand.vmem [shape: f32[64,16], index: 0, kind: input, shape index: {}]
  %s1 = inlined_call_operand.vmem [shape: bf16[48,32], index: 1, kind: input, shape index: {}]
  %s2 = inlined_call_operand.vmem [shape: f32[1,32], index: 2, kind: input, shape index: {}]
  %s3 = inlined_call_operand.vmem [shape: bf16[4,96,32], index: 3, kind: input, shape index: {}]
  %s4 = inlined_call_operand.vmem [shape: f32[4,1,32], index: 4, kind: input, shape index: {}]
  %s5 = inlined_call_operand.vmem [shape: bf16[64,64], index: 5, kind: input, shape index: {}]
  %s6 = inlined_call_operand.vmem [shape: f32[64,1], index: 6, kind: input, shape index: {}]
  %s7 = inlined_call_operand.vmem [shape: bf16[128,64], index: 7, kind: input, shape index: {}]
  %s8 = inlined_call_operand.vmem [shape: f32[128,1], index: 8, kind: input, shape index: {}]
  %s9 = inlined_call_operand.vmem [shape: bf16[32,8], index: 9, kind: input, shape index: {}]
  %s10 = inlined_call_operand.vmem [shape: f32[1,8], index: 10, kind: input, shape index: {}]
  %s11 = inlined_call_operand.vmem [shape: bf16[4,96,32], index: 11, kind: input, shape index: {}]
  %s12 = inlined_call_operand.vmem [shape: f32[4,1,32], index: 12, kind: input, shape index: {}]
  %s13 = inlined_call_operand.vmem [shape: bf16[128,64], index: 13, kind: input, shape index: {}]
  %s14 = inlined_call_operand.vmem [shape: f32[128,1], index: 14, kind: input, shape index: {}]
  %s15 = inlined_call_operand.vmem [shape: bf16[128,128], index: 15, kind: input, shape index: {}]
  %s16 = inlined_call_operand.vmem [shape: f32[128,1], index: 16, kind: input, shape index: {}]
  %s17 = inlined_call_operand.vmem [shape: bf16[32,8], index: 17, kind: input, shape index: {}]
  %s18 = inlined_call_operand.vmem [shape: f32[1,8], index: 18, kind: input, shape index: {}]
  %s19 = inlined_call_operand.hbm [shape: f32[8,8], index: 19, kind: output, shape index: {}]
  %s20 = sld [smem:[#allocation0]]
  $region86: #{tpu_custom_call.1} parent=0
    _
  %s22 = ssub.s32 1, %s20
  %s23 = scalar_select 0, %s22, %s20
  $region1: #{tpu_custom_call.1} parent=0
    #allocation2 [shape = 'u8[4096]{0}', space=vmem, size = 0x1000, scoped, tag = 'output window, operand 0, single buffered']
    #allocation3 [shape = 's32[1]{0}', space=sflag, size = 0x4, scoped, tag = 'scoped memory for tpu_custom_call.1']
    %24 = vsyncpa [#allocation3], 0
    // Predicated region
    $region2: #{tpu_custom_call.1} parent=1 // pred_check
      _
    $region3: #{tpu_custom_call.1} parent=1 // pred_check_branch
      %26 = sbr.rel (0) target = $region5
    $region4: #{tpu_custom_call.1} parent=1 // pred_region
      _
    $region5: #{tpu_custom_call.1} parent=1 // pred_fallthru
      _
    // Predicated region
    $region6: #{tpu_custom_call.1} parent=1 // pred_check
      _
    $region7: #{tpu_custom_call.1} parent=1 // pred_check_branch
      %28 = sbr.rel (0) target = $region9
    $region8: #{tpu_custom_call.1} parent=1 // pred_region
      _
    $region9: #{tpu_custom_call.1} parent=1 // pred_fallthru
      _
    // Predicated region
    $region10: #{tpu_custom_call.1} parent=1 // pred_check
      _
    $region11: #{tpu_custom_call.1} parent=1 // pred_check_branch
      %30 = sbr.rel (0) target = $region13
    $region12: #{tpu_custom_call.1} parent=1 // pred_region
      _
    $region13: #{tpu_custom_call.1} parent=1 // pred_fallthru
      _
    // Predicated region
    $region14: #{tpu_custom_call.1} parent=1 // pred_check
      _
    $region15: #{tpu_custom_call.1} parent=1 // pred_check_branch
      %32 = sbr.rel (0) target = $region17
    $region16: #{tpu_custom_call.1} parent=1 // pred_region
      _
    $region17: #{tpu_custom_call.1} parent=1 // pred_fallthru
      _
    // Predicated region
    $region18: #{tpu_custom_call.1} parent=1 // pred_check
      _
    $region19: #{tpu_custom_call.1} parent=1 // pred_check_branch
      %34 = sbr.rel (0) target = $region21
    $region20: #{tpu_custom_call.1} parent=1 // pred_region
      _
    $region21: #{tpu_custom_call.1} parent=1 // pred_fallthru
      _
    // Predicated region
    $region22: #{tpu_custom_call.1} parent=1 // pred_check
      _
    $region23: #{tpu_custom_call.1} parent=1 // pred_check_branch
      %36 = sbr.rel (0) target = $region25
    $region24: #{tpu_custom_call.1} parent=1 // pred_region
      _
    $region25: #{tpu_custom_call.1} parent=1 // pred_fallthru
      _
    // Predicated region
    $region26: #{tpu_custom_call.1} parent=1 // pred_check
      _
    $region27: #{tpu_custom_call.1} parent=1 // pred_check_branch
      %38 = sbr.rel (0) target = $region29
    $region28: #{tpu_custom_call.1} parent=1 // pred_region
      _
    $region29: #{tpu_custom_call.1} parent=1 // pred_fallthru
      _
    // Predicated region
    $region30: #{tpu_custom_call.1} parent=1 // pred_check
      _
    $region31: #{tpu_custom_call.1} parent=1 // pred_check_branch
      %40 = sbr.rel (0) target = $region33
    $region32: #{tpu_custom_call.1} parent=1 // pred_region
      _
    $region33: #{tpu_custom_call.1} parent=1 // pred_fallthru
      _
    // Predicated region
    $region34: #{tpu_custom_call.1} parent=1 // pred_check
      _
    $region35: #{tpu_custom_call.1} parent=1 // pred_check_branch
      %42 = sbr.rel (0) target = $region37
    $region36: #{tpu_custom_call.1} parent=1 // pred_region
      _
    $region37: #{tpu_custom_call.1} parent=1 // pred_fallthru
      _
    // Predicated region
    $region38: #{tpu_custom_call.1} parent=1 // pred_check
      _
    $region39: #{tpu_custom_call.1} parent=1 // pred_check_branch
      %44 = sbr.rel (0) target = $region41
    $region40: #{tpu_custom_call.1} parent=1 // pred_region
      _
    $region41: #{tpu_custom_call.1} parent=1 // pred_fallthru
      _
    // Predicated region
    $region42: #{tpu_custom_call.1} parent=1 // pred_check
      _
    $region43: #{tpu_custom_call.1} parent=1 // pred_check_branch
      %46 = sbr.rel (0) target = $region45
    $region44: #{tpu_custom_call.1} parent=1 // pred_region
      _
    $region45: #{tpu_custom_call.1} parent=1 // pred_fallthru
      _
    // Predicated region
    $region46: #{tpu_custom_call.1} parent=1 // pred_check
      _
    $region47: #{tpu_custom_call.1} parent=1 // pred_check_branch
      %48 = sbr.rel (0) target = $region49
    $region48: #{tpu_custom_call.1} parent=1 // pred_region
      _
    $region49: #{tpu_custom_call.1} parent=1 // pred_fallthru
      _
    // Predicated region
    $region50: #{tpu_custom_call.1} parent=1 // pred_check
      _
    $region51: #{tpu_custom_call.1} parent=1 // pred_check_branch
      %50 = sbr.rel (0) target = $region53
    $region52: #{tpu_custom_call.1} parent=1 // pred_region
      _
    $region53: #{tpu_custom_call.1} parent=1 // pred_fallthru
      _
    // Predicated region
    $region54: #{tpu_custom_call.1} parent=1 // pred_check
      _
    $region55: #{tpu_custom_call.1} parent=1 // pred_check_branch
      %52 = sbr.rel (0) target = $region57
    $region56: #{tpu_custom_call.1} parent=1 // pred_region
      _
    $region57: #{tpu_custom_call.1} parent=1 // pred_fallthru
      _
    // Predicated region
    $region58: #{tpu_custom_call.1} parent=1 // pred_check
      _
    $region59: #{tpu_custom_call.1} parent=1 // pred_check_branch
      %54 = sbr.rel (0) target = $region61
    $region60: #{tpu_custom_call.1} parent=1 // pred_region
      _
    $region61: #{tpu_custom_call.1} parent=1 // pred_fallthru
      _
    // Predicated region
    $region62: #{tpu_custom_call.1} parent=1 // pred_check
      _
    $region63: #{tpu_custom_call.1} parent=1 // pred_check_branch
      %56 = sbr.rel (0) target = $region65
    $region64: #{tpu_custom_call.1} parent=1 // pred_region
      _
    $region65: #{tpu_custom_call.1} parent=1 // pred_fallthru
      _
    // Predicated region
    $region66: #{tpu_custom_call.1} parent=1 // pred_check
      _
    $region67: #{tpu_custom_call.1} parent=1 // pred_check_branch
      %58 = sbr.rel (0) target = $region69
    $region68: #{tpu_custom_call.1} parent=1 // pred_region
      _
    $region69: #{tpu_custom_call.1} parent=1 // pred_fallthru
      _
    // Predicated region
    $region70: #{tpu_custom_call.1} parent=1 // pred_check
      _
    $region71: #{tpu_custom_call.1} parent=1 // pred_check_branch
      %60 = sbr.rel (0) target = $region73
    $region72: #{tpu_custom_call.1} parent=1 // pred_region
      _
    $region73: #{tpu_custom_call.1} parent=1 // pred_fallthru
      _
    // Predicated region
    $region74: #{tpu_custom_call.1} parent=1 // pred_check
      _
    $region75: #{tpu_custom_call.1} parent=1 // pred_check_branch
      %62 = sbr.rel (0) target = $region77
    $region76: #{tpu_custom_call.1} parent=1 // pred_region
      _
    $region77: #{tpu_custom_call.1} parent=1 // pred_fallthru
      _
    %v64 = vlaneseq
    %v65 = vshrl.u32 %v64, 7
    %v66 = vadd.s32 %v65, 8
    %v67 = vadd.s32 %v65, 16
    %v68 = vadd.s32 %v65, 24
    %v69 = vadd.s32 %v65, 32
    %v70 = vadd.s32 %v65, 40
    %v71 = vadd.s32 %v65, 48
    %v72 = vadd.s32 %v65, 56
    %vm73 = vcmp.lt.s32.totalorder %v65, 0
    %v74 = vsub.s32 0, %v65
    %v75 = vsel %vm73, %v74, %v65
    %v76 = vshrl.u32 %v75, 3
    %v77 = vand.u32 %v75, 7
    %v78 = vsub.s32 0, %v77
    %v79 = vsel %vm73, %v78, %v77
    %vm80 = vcmp.lt.s32.totalorder %v66, 0
    %v81 = vsub.s32 0, %v66
    %v82 = vsel %vm80, %v81, %v66
    %v83 = vshrl.u32 %v82, 3
    %v84 = vand.u32 %v82, 7
    %v85 = vsub.s32 0, %v84
    %v86 = vsel %vm80, %v85, %v84
    %vm87 = vcmp.lt.s32.totalorder %v67, 0
    %v88 = vsub.s32 0, %v67
    %v89 = vsel %vm87, %v88, %v67
    %v90 = vshrl.u32 %v89, 3
    %v91 = vand.u32 %v89, 7
    %v92 = vsub.s32 0, %v91
    %v93 = vsel %vm87, %v92, %v91
    %vm94 = vcmp.lt.s32.totalorder %v68, 0
    %v95 = vsub.s32 0, %v68
    %v96 = vsel %vm94, %v95, %v68
    %v97 = vshrl.u32 %v96, 3
    %v98 = vand.u32 %v96, 7
    %v99 = vsub.s32 0, %v98
    %v100 = vsel %vm94, %v99, %v98
    %vm101 = vcmp.lt.s32.totalorder %v69, 0
    %v102 = vsub.s32 0, %v69
    %v103 = vsel %vm101, %v102, %v69
    %v104 = vshrl.u32 %v103, 3
    %v105 = vand.u32 %v103, 7
    %v106 = vsub.s32 0, %v105
    %v107 = vsel %vm101, %v106, %v105
    %vm108 = vcmp.lt.s32.totalorder %v70, 0
    %v109 = vsub.s32 0, %v70
    %v110 = vsel %vm108, %v109, %v70
    %v111 = vshrl.u32 %v110, 3
    %v112 = vand.u32 %v110, 7
    %v113 = vsub.s32 0, %v112
    %v114 = vsel %vm108, %v113, %v112
    %vm115 = vcmp.lt.s32.totalorder %v71, 0
    %v116 = vsub.s32 0, %v71
    %v117 = vsel %vm115, %v116, %v71
    %v118 = vshrl.u32 %v117, 3
    %v119 = vand.u32 %v117, 7
    %v120 = vsub.s32 0, %v119
    %v121 = vsel %vm115, %v120, %v119
    %vm122 = vcmp.lt.s32.totalorder %v72, 0
    %v123 = vsub.s32 0, %v72
    %v124 = vsel %vm122, %v123, %v72
    %v125 = vshrl.u32 %v124, 3
    %v126 = vand.u32 %v124, 7
    %v127 = vsub.s32 0, %v126
    %v128 = vsel %vm122, %v127, %v126
    %vm129 = vcmp.ne.s32.totalorder %v79, 0
    %vm130 = vcmp.ne.s32.totalorder %v86, 0
    %vm131 = vcmp.ne.s32.totalorder %v93, 0
    %vm132 = vcmp.ne.s32.totalorder %v100, 0
    %vm133 = vcmp.ne.s32.totalorder %v107, 0
    %vm134 = vcmp.ne.s32.totalorder %v114, 0
    %vm135 = vcmp.ne.s32.totalorder %v121, 0
    %vm136 = vcmp.ne.s32.totalorder %v128, 0
    %vm137 = vcmp.lt.s32.totalorder %v79, 0
    %vm138 = vcmp.lt.s32.totalorder %v86, 0
    %vm139 = vcmp.lt.s32.totalorder %v93, 0
    %vm140 = vcmp.lt.s32.totalorder %v100, 0
    %vm141 = vcmp.lt.s32.totalorder %v107, 0
    %vm142 = vcmp.lt.s32.totalorder %v114, 0
    %vm143 = vcmp.lt.s32.totalorder %v121, 0
    %vm144 = vcmp.lt.s32.totalorder %v128, 0
    %vm145 = vmand %vm137, %vm129
    %vm146 = vmand %vm138, %vm130
    %vm147 = vmand %vm139, %vm131
    %vm148 = vmand %vm140, %vm132
    %vm149 = vmand %vm141, %vm133
    %vm150 = vmand %vm142, %vm134
    %vm151 = vmand %vm143, %vm135
    %vm152 = vmand %vm144, %vm136
    %v153 = vadd.s32 %v79, 8
    %v154 = vadd.s32 %v86, 8
    %v155 = vadd.s32 %v93, 8
    %v156 = vadd.s32 %v100, 8
    %v157 = vadd.s32 %v107, 8
    %v158 = vadd.s32 %v114, 8
    %v159 = vadd.s32 %v121, 8
    %v160 = vadd.s32 %v128, 8
    %v161 = vsel %vm145, %v153, %v79
    %v162 = vsel %vm146, %v154, %v86
    %v163 = vsel %vm147, %v155, %v93
    %v164 = vsel %vm148, %v156, %v100
    %v165 = vsel %vm149, %v157, %v107
    %v166 = vsel %vm150, %v158, %v114
    %v167 = vsel %vm151, %v159, %v121
    %v168 = vsel %vm152, %v160, %v128
    %vm169 = vcmp.eq.s32.totalorder %v161, 0
    %vm170 = vcmp.eq.s32.totalorder %v162, 0
    %vm171 = vcmp.eq.s32.totalorder %v163, 0
    %vm172 = vcmp.eq.s32.totalorder %v164, 0
    %vm173 = vcmp.eq.s32.totalorder %v165, 0
    %vm174 = vcmp.eq.s32.totalorder %v166, 0
    %vm175 = vcmp.eq.s32.totalorder %v167, 0
    %vm176 = vcmp.eq.s32.totalorder %v168, 0
    %vm177 = vcmp.eq.s32.totalorder %v161, 7
    %vm178 = vcmp.eq.s32.totalorder %v162, 7
    %vm179 = vcmp.eq.s32.totalorder %v163, 7
    %vm180 = vcmp.eq.s32.totalorder %v164, 7
    %vm181 = vcmp.eq.s32.totalorder %v165, 7
    %vm182 = vcmp.eq.s32.totalorder %v166, 7
    %vm183 = vcmp.eq.s32.totalorder %v167, 7
    %vm184 = vcmp.eq.s32.totalorder %v168, 7
    %v185 = vld [vmem:[%s0] sm:$0xff]
    %v186 = vld [vmem:[%s0 + $0x8] sm:$0xff]
    %v187 = vld [vmem:[%s0 + $0x10] sm:$0xff]
    %v188 = vld [vmem:[%s0 + $0x18] sm:$0xff]
    %v189 = vld [vmem:[%s0 + $0x20] sm:$0xff]
    %v190 = vld [vmem:[%s0 + $0x28] sm:$0xff]
    %v191 = vld [vmem:[%s0 + $0x30] sm:$0xff]
    %v192 = vld [vmem:[%s0 + $0x38] sm:$0xff]
    %v193 = vld [vmem:[%s1] sm:$0xf]
    %v194 = vld [vmem:[%s1 + $0x4] sm:$0xf]
    %v195 = vld [vmem:[%s1 + $0x8] sm:$0xf]
    %v196 = vld [vmem:[%s1 + $0xc] sm:$0xf]
    %v197 = vld [vmem:[%s1 + $0x10] sm:$0xf]
    %v198 = vld [vmem:[%s1 + $0x14] sm:$0xf]
    %v199 = vld [vmem:[%s2] sm:$0x1]
    %vm208 = vcmask 1040384
    %v209 = vrot.slane %v185, 7
    %v210 = vrot.slane %v186, 7
    %v211 = vsel %vm208, %v209, %v210
    %v212 = vrot.slane %v187, 7
    %v213 = vsel %vm208, %v210, %v212
    %v214 = vrot.slane %v188, 7
    %v215 = vsel %vm208, %v212, %v214
    %v216 = vrot.slane %v189, 7
    %v217 = vsel %vm208, %v214, %v216
    %v218 = vrot.slane %v190, 7
    %v219 = vsel %vm208, %v216, %v218
    %v220 = vrot.slane %v191, 7
    %v221 = vsel %vm208, %v218, %v220
    %v222 = vrot.slane %v192, 7
    %v223 = vsel %vm208, %v220, %v222
    %v232 = vsel %vm208, 0.0, %v209
    %v233 = vsel %vm169, 1, 0
    %v234 = vsel %vm170, 1, 0
    %v235 = vsel %vm171, 1, 0
    %v236 = vsel %vm172, 1, 0
    %v237 = vsel %vm173, 1, 0
    %v238 = vsel %vm174, 1, 0
    %v239 = vsel %vm175, 1, 0
    %v240 = vsel %vm176, 1, 0
    %vm241 = vcmp.eq.s32.totalorder %v233, 1
    %vm242 = vcmp.eq.s32.totalorder %v234, 1
    %vm243 = vcmp.eq.s32.totalorder %v235, 1
    %vm244 = vcmp.eq.s32.totalorder %v236, 1
    %vm245 = vcmp.eq.s32.totalorder %v237, 1
    %vm246 = vcmp.eq.s32.totalorder %v238, 1
    %vm247 = vcmp.eq.s32.totalorder %v239, 1
    %vm248 = vcmp.eq.s32.totalorder %v240, 1
    %v249 = vsel %vm241, 0.0, %v232
    %v250 = vsel %vm242, 0.0, %v211
    %v251 = vsel %vm243, 0.0, %v213
    %v252 = vsel %vm244, 0.0, %v215
    %v253 = vsel %vm245, 0.0, %v217
    %v254 = vsel %vm246, 0.0, %v219
    %v255 = vsel %vm247, 0.0, %v221
    %v256 = vsel %vm248, 0.0, %v223
    %vm257 = vcmask 1046528
    %v258 = vrot.slane %v185, 1
    %v259 = vrot.slane %v186, 1
    %v260 = vsel %vm257, %v258, %v259
    %v261 = vrot.slane %v187, 1
    %v262 = vsel %vm257, %v259, %v261
    %v263 = vrot.slane %v188, 1
    %v264 = vsel %vm257, %v261, %v263
    %v265 = vrot.slane %v189, 1
    %v266 = vsel %vm257, %v263, %v265
    %v267 = vrot.slane %v190, 1
    %v268 = vsel %vm257, %v265, %v267
    %v269 = vrot.slane %v191, 1
    %v270 = vsel %vm257, %v267, %v269
    %v271 = vrot.slane %v192, 1
    %v272 = vsel %vm257, %v269, %v271
    %v281 = vsel %vm257, %v271, 0.0
    %v282 = vsel %vm177, 1, 0
    %v283 = vsel %vm178, 1, 0
    %v284 = vsel %vm179, 1, 0
    %v285 = vsel %vm180, 1, 0
    %v286 = vsel %vm181, 1, 0
    %v287 = vsel %vm182, 1, 0
    %v288 = vsel %vm183, 1, 0
    %v289 = vsel %vm184, 1, 0
    %vm290 = vcmp.eq.s32.totalorder %v282, 1
    %vm291 = vcmp.eq.s32.totalorder %v283, 1
    %vm292 = vcmp.eq.s32.totalorder %v284, 1
    %vm293 = vcmp.eq.s32.totalorder %v285, 1
    %vm294 = vcmp.eq.s32.totalorder %v286, 1
    %vm295 = vcmp.eq.s32.totalorder %v287, 1
    %vm296 = vcmp.eq.s32.totalorder %v288, 1
    %vm297 = vcmp.eq.s32.totalorder %v289, 1
    %v298 = vsel %vm290, 0.0, %v260
    %v299 = vsel %vm291, 0.0, %v262
    %v300 = vsel %vm292, 0.0, %v264
    %v301 = vsel %vm293, 0.0, %v266
    %v302 = vsel %vm294, 0.0, %v268
    %v303 = vsel %vm295, 0.0, %v270
    %v304 = vsel %vm296, 0.0, %v272
    %v305 = vsel %vm297, 0.0, %v281
    %306 = vrot.lane.b32.xlu0 %v185, 16
    %v307 = vpop.permute.xlu0 %306
    %308 = vrot.lane.b32.xlu0 %v186, 16
    %v309 = vpop.permute.xlu0 %308
    %310 = vrot.lane.b32.xlu0 %v187, 16
    %v311 = vpop.permute.xlu0 %310
    %312 = vrot.lane.b32.xlu0 %v188, 16
    %v313 = vpop.permute.xlu0 %312
    %314 = vrot.lane.b32.xlu0 %v189, 16
    %v315 = vpop.permute.xlu0 %314
    %316 = vrot.lane.b32.xlu0 %v190, 16
    %v317 = vpop.permute.xlu0 %316
    %318 = vrot.lane.b32.xlu0 %v191, 16
    %v319 = vpop.permute.xlu0 %318
    %320 = vrot.lane.b32.xlu0 %v192, 16
    %v321 = vpop.permute.xlu0 %320
    %338 = vrot.lane.b32.xlu0 %v298, 32
    %v339 = vpop.permute.xlu0 %338
    %340 = vrot.lane.b32.xlu0 %v299, 32
    %v341 = vpop.permute.xlu0 %340
    %342 = vrot.lane.b32.xlu0 %v300, 32
    %v343 = vpop.permute.xlu0 %342
    %344 = vrot.lane.b32.xlu0 %v301, 32
    %v345 = vpop.permute.xlu0 %344
    %346 = vrot.lane.b32.xlu0 %v302, 32
    %v347 = vpop.permute.xlu0 %346
    %348 = vrot.lane.b32.xlu0 %v303, 32
    %v349 = vpop.permute.xlu0 %348
    %350 = vrot.lane.b32.xlu0 %v304, 32
    %v351 = vpop.permute.xlu0 %350
    %352 = vrot.lane.b32.xlu0 %v305, 32
    %v353 = vpop.permute.xlu0 %352
    %vm362 = vcmask 130048
    %v363 = vsel %vm362, %v249, %v307
    %v364 = vsel %vm362, %v250, %v309
    %v365 = vsel %vm362, %v251, %v311
    %v366 = vsel %vm362, %v252, %v313
    %v367 = vsel %vm362, %v253, %v315
    %v368 = vsel %vm362, %v254, %v317
    %v369 = vsel %vm362, %v255, %v319
    %v370 = vsel %vm362, %v256, %v321
    %vm371 = vcmask 261120
    %v372 = vsel %vm371, %v363, %v339
    %v373 = vsel %vm371, %v364, %v341
    %v374 = vsel %vm371, %v365, %v343
    %v375 = vsel %vm371, %v366, %v345
    %v376 = vsel %vm371, %v367, %v347
    %v377 = vsel %vm371, %v368, %v349
    %v378 = vsel %vm371, %v369, %v351
    %v379 = vsel %vm371, %v370, %v353
    %v380 = vpack.c.bf16 %v373, %v372
    %v381 = vpack.c.bf16 %v375, %v374
    %v382 = vpack.c.bf16 %v377, %v376
    %v383 = vpack.c.bf16 %v379, %v378
    %v385 = vperm.slane %v199, 0
    %v393 = vunpack.c.l.b16 %v193
    %v394 = vunpack.c.l.b16 %v194
    %v395 = vunpack.c.l.b16 %v195
    %v396 = vunpack.c.l.b16 %v196
    %v397 = vunpack.c.l.b16 %v197
    %v398 = vunpack.c.l.b16 %v198
    %v399 = vpack.c.b16 %v394, %v393
    %v400 = vpack.c.b16 %v396, %v395
    %v401 = vpack.c.b16 %v398, %v397
    %vm405 = vcmask 392192
    %v407 = vsel %vm405, %v380, 0
    %v410 = vsel %vm405, %v381, 0
    %v413 = vsel %vm405, %v382, 0
    %v416 = vsel %vm405, %v383, 0
    %418 = vmatpush.bf16.msra.mxu0 0
    %419 = vmatpush.bf16.msra.mxu0 0
    %420 = vmatpush.bf16.msra.mxu0 0
    %421 = vmatpush.bf16.msra.mxu0 0
    %422 = vmatpush.bf16.msra.mxu0 0
    %423 = vmatpush.bf16.msra.mxu0 %v401
    %424 = vmatpush.bf16.msra.mxu0 %v400
    %425 = vmatpush.bf16.msra.mxu0 %v399
    %426 = vmatmul.bf16.gmra.mxu0 %v407
    %v427 = vpop.f32.mrf.mxu0
    %v428 = vadd.f32 %v385, %v427
    %v429 = vpop.f32.mrf.mxu0
    %v430 = vadd.f32 %v385, %v429
    %431 = vmatmul.bf16.gmra.mxu0 %v410
    %v432 = vpop.f32.mrf.mxu0
    %v433 = vadd.f32 %v385, %v432
    %v434 = vpop.f32.mrf.mxu0
    %v435 = vadd.f32 %v385, %v434
    %436 = vmatmul.bf16.gmra.mxu0 %v413
    %v437 = vpop.f32.mrf.mxu0
    %v438 = vadd.f32 %v385, %v437
    %v439 = vpop.f32.mrf.mxu0
    %v440 = vadd.f32 %v385, %v439
    %441 = vmatmul.bf16.gmra.mxu0 %v416
    %v442 = vpop.f32.mrf.mxu0
    %v443 = vadd.f32 %v385, %v442
    %v444 = vpop.f32.mrf.mxu0
    %v445 = vadd.f32 %v385, %v444
    %446 = vdwg.mxu0
    %v447 = vld [vmem:[%s5] sm:$0xf]
    %v448 = vld [vmem:[%s5 + $0x4] sm:$0xf]
    %v449 = vld [vmem:[%s5 + $0x8] sm:$0xf]
    %v450 = vld [vmem:[%s5 + $0xc] sm:$0xf]
    %v451 = vld [vmem:[%s5 + $0x10] sm:$0xf]
    %v452 = vld [vmem:[%s5 + $0x14] sm:$0xf]
    %v453 = vld [vmem:[%s5 + $0x18] sm:$0xf]
    %v454 = vld [vmem:[%s5 + $0x1c] sm:$0xf]
    %v455 = vld [vmem:[%s6] sm:$0xff]
    %v456 = vld [vmem:[%s6 + $0x8] sm:$0xff]
    %v457 = vld [vmem:[%s6 + $0x10] sm:$0xff]
    %v458 = vld [vmem:[%s6 + $0x18] sm:$0xff]
    %v459 = vld [vmem:[%s6 + $0x20] sm:$0xff]
    %v460 = vld [vmem:[%s6 + $0x28] sm:$0xff]
    %v461 = vld [vmem:[%s6 + $0x30] sm:$0xff]
    %v462 = vld [vmem:[%s6 + $0x38] sm:$0xff]
    %v463 = vld [vmem:[%s7] sm:$0xf]
    %v464 = vld [vmem:[%s7 + $0x4] sm:$0xf]
    %v465 = vld [vmem:[%s7 + $0x8] sm:$0xf]
    %v466 = vld [vmem:[%s7 + $0xc] sm:$0xf]
    %v467 = vld [vmem:[%s7 + $0x10] sm:$0xf]
    %v468 = vld [vmem:[%s7 + $0x14] sm:$0xf]
    %v469 = vld [vmem:[%s7 + $0x18] sm:$0xf]
    %v470 = vld [vmem:[%s7 + $0x1c] sm:$0xf]
    %v471 = vld [vmem:[%s7 + $0x20] sm:$0xf]
    %v472 = vld [vmem:[%s7 + $0x24] sm:$0xf]
    %v473 = vld [vmem:[%s7 + $0x28] sm:$0xf]
    %v474 = vld [vmem:[%s7 + $0x2c] sm:$0xf]
    %v475 = vld [vmem:[%s7 + $0x30] sm:$0xf]
    %v476 = vld [vmem:[%s7 + $0x34] sm:$0xf]
    %v477 = vld [vmem:[%s7 + $0x38] sm:$0xf]
    %v478 = vld [vmem:[%s7 + $0x3c] sm:$0xf]
    %v479 = vld [vmem:[%s8] sm:$0xff]
    %v480 = vld [vmem:[%s8 + $0x8] sm:$0xff]
    %v481 = vld [vmem:[%s8 + $0x10] sm:$0xff]
    %v482 = vld [vmem:[%s8 + $0x18] sm:$0xff]
    %v483 = vld [vmem:[%s8 + $0x20] sm:$0xff]
    %v484 = vld [vmem:[%s8 + $0x28] sm:$0xff]
    %v485 = vld [vmem:[%s8 + $0x30] sm:$0xff]
    %v486 = vld [vmem:[%s8 + $0x38] sm:$0xff]
    %v487 = vld [vmem:[%s8 + $0x40] sm:$0xff]
    %v488 = vld [vmem:[%s8 + $0x48] sm:$0xff]
    %v489 = vld [vmem:[%s8 + $0x50] sm:$0xff]
    %v490 = vld [vmem:[%s8 + $0x58] sm:$0xff]
    %v491 = vld [vmem:[%s8 + $0x60] sm:$0xff]
    %v492 = vld [vmem:[%s8 + $0x68] sm:$0xff]
    %v493 = vld [vmem:[%s8 + $0x70] sm:$0xff]
    %v494 = vld [vmem:[%s8 + $0x78] sm:$0xff]
    %v495 = vld [vmem:[%s9] sm:$0xf]
    %v496 = vld [vmem:[%s9 + $0x4] sm:$0xf]
    %v497 = vld [vmem:[%s9 + $0x8] sm:$0xf]
    %v498 = vld [vmem:[%s9 + $0xc] sm:$0xf]
    %v499 = vld [vmem:[%s10] sm:$0x1]
    %v500 = vld [vmem:[%s3] sm:$0xf]
    %v501 = vld [vmem:[%s3 + $0x4] sm:$0xf]
    %v502 = vld [vmem:[%s3 + $0x8] sm:$0xf]
    %v503 = vld [vmem:[%s3 + $0xc] sm:$0xf]
    %v504 = vld [vmem:[%s3 + $0x10] sm:$0xf]
    %v505 = vld [vmem:[%s3 + $0x14] sm:$0xf]
    %v506 = vld [vmem:[%s3 + $0x18] sm:$0xf]
    %v507 = vld [vmem:[%s3 + $0x1c] sm:$0xf]
    %v508 = vld [vmem:[%s3 + $0x20] sm:$0xf]
    %v509 = vld [vmem:[%s3 + $0x24] sm:$0xf]
    %v510 = vld [vmem:[%s3 + $0x28] sm:$0xf]
    %v511 = vld [vmem:[%s3 + $0x2c] sm:$0xf]
    %v512 = vld [vmem:[%s4] sm:$0x1]
    %v521 = vrot.slane %v428, 7
    %v522 = vrot.slane %v430, 7
    %v523 = vsel %vm208, %v521, %v522
    %v524 = vrot.slane %v433, 7
    %v525 = vsel %vm208, %v522, %v524
    %v526 = vrot.slane %v435, 7
    %v527 = vsel %vm208, %v524, %v526
    %v528 = vrot.slane %v438, 7
    %v529 = vsel %vm208, %v526, %v528
    %v530 = vrot.slane %v440, 7
    %v531 = vsel %vm208, %v528, %v530
    %v532 = vrot.slane %v443, 7
    %v533 = vsel %vm208, %v530, %v532
    %v534 = vrot.slane %v445, 7
    %v535 = vsel %vm208, %v532, %v534
    %v544 = vsel %vm208, 0.0, %v521
    %v545 = vsel %vm241, 0.0, %v544
    %v546 = vsel %vm242, 0.0, %v523
    %v547 = vsel %vm243, 0.0, %v525
    %v548 = vsel %vm244, 0.0, %v527
    %v549 = vsel %vm245, 0.0, %v529
    %v550 = vsel %vm246, 0.0, %v531
    %v551 = vsel %vm247, 0.0, %v533
    %v552 = vsel %vm248, 0.0, %v535
    %v553 = vrot.slane %v428, 1
    %v554 = vrot.slane %v430, 1
    %v555 = vsel %vm257, %v553, %v554
    %v556 = vrot.slane %v433, 1
    %v557 = vsel %vm257, %v554, %v556
    %v558 = vrot.slane %v435, 1
    %v559 = vsel %vm257, %v556, %v558
    %v560 = vrot.slane %v438, 1
    %v561 = vsel %vm257, %v558, %v560
    %v562 = vrot.slane %v440, 1
    %v563 = vsel %vm257, %v560, %v562
    %v564 = vrot.slane %v443, 1
    %v565 = vsel %vm257, %v562, %v564
    %v566 = vrot.slane %v445, 1
    %v567 = vsel %vm257, %v564, %v566
    %v576 = vsel %vm257, %v566, 0.0
    %v577 = vsel %vm290, 0.0, %v555
    %v578 = vsel %vm291, 0.0, %v557
    %v579 = vsel %vm292, 0.0, %v559
    %v580 = vsel %vm293, 0.0, %v561
    %v581 = vsel %vm294, 0.0, %v563
    %v582 = vsel %vm295, 0.0, %v565
    %v583 = vsel %vm296, 0.0, %v567
    %v584 = vsel %vm297, 0.0, %v576
    %585 = vrot.lane.b32.xlu0 %v428, 32
    %v586 = vpop.permute.xlu0 %585
    %587 = vrot.lane.b32.xlu0 %v430, 32
    %v588 = vpop.permute.xlu0 %587
    %589 = vrot.lane.b32.xlu0 %v433, 32
    %v590 = vpop.permute.xlu0 %589
    %591 = vrot.lane.b32.xlu0 %v435, 32
    %v592 = vpop.permute.xlu0 %591
    %593 = vrot.lane.b32.xlu0 %v438, 32
    %v594 = vpop.permute.xlu0 %593
    %595 = vrot.lane.b32.xlu0 %v440, 32
    %v596 = vpop.permute.xlu0 %595
    %597 = vrot.lane.b32.xlu0 %v443, 32
    %v598 = vpop.permute.xlu0 %597
    %599 = vrot.lane.b32.xlu0 %v445, 32
    %v600 = vpop.permute.xlu0 %599
    %617 = vrot.lane.b32.xlu0 %v577, 64
    %v618 = vpop.permute.xlu0 %617
    %619 = vrot.lane.b32.xlu0 %v578, 64
    %v620 = vpop.permute.xlu0 %619
    %621 = vrot.lane.b32.xlu0 %v579, 64
    %v622 = vpop.permute.xlu0 %621
    %623 = vrot.lane.b32.xlu0 %v580, 64
    %v624 = vpop.permute.xlu0 %623
    %625 = vrot.lane.b32.xlu0 %v581, 64
    %v626 = vpop.permute.xlu0 %625
    %627 = vrot.lane.b32.xlu0 %v582, 64
    %v628 = vpop.permute.xlu0 %627
    %629 = vrot.lane.b32.xlu0 %v583, 64
    %v630 = vpop.permute.xlu0 %629
    %631 = vrot.lane.b32.xlu0 %v584, 64
    %v632 = vpop.permute.xlu0 %631
    %v641 = vsel %vm371, %v545, %v586
    %v642 = vsel %vm371, %v546, %v588
    %v643 = vsel %vm371, %v547, %v590
    %v644 = vsel %vm371, %v548, %v592
    %v645 = vsel %vm371, %v549, %v594
    %v646 = vsel %vm371, %v550, %v596
    %v647 = vsel %vm371, %v551, %v598
    %v648 = vsel %vm371, %v552, %v600
    %vm649 = vcmask 523264
    %v650 = vsel %vm649, %v641, %v618
    %v651 = vsel %vm649, %v642, %v620
    %v652 = vsel %vm649, %v643, %v622
    %v653 = vsel %vm649, %v644, %v624
    %v654 = vsel %vm649, %v645, %v626
    %v655 = vsel %vm649, %v646, %v628
    %v656 = vsel %vm649, %v647, %v630
    %v657 = vsel %vm649, %v648, %v632
    %v658 = vpack.c.bf16 %v651, %v650
    %v659 = vpack.c.bf16 %v653, %v652
    %v660 = vpack.c.bf16 %v655, %v654
    %v661 = vpack.c.bf16 %v657, %v656
    %v663 = vperm.slane %v512, 0
    %v677 = vunpack.c.l.b16 %v500
    %v678 = vunpack.c.l.b16 %v501
    %v679 = vunpack.c.l.b16 %v502
    %v680 = vunpack.c.l.b16 %v503
    %v681 = vunpack.c.l.b16 %v504
    %v682 = vunpack.c.l.b16 %v505
    %v683 = vunpack.c.l.b16 %v506
    %v684 = vunpack.c.l.b16 %v507
    %v685 = vunpack.c.l.b16 %v508
    %v686 = vunpack.c.l.b16 %v509
    %v687 = vunpack.c.l.b16 %v510
    %v688 = vunpack.c.l.b16 %v511
    %v689 = vpack.c.b16 %v678, %v677
    %v690 = vpack.c.b16 %v680, %v679
    %v691 = vpack.c.b16 %v682, %v681
    %v692 = vpack.c.b16 %v684, %v683
    %v693 = vpack.c.b16 %v686, %v685
    %v694 = vpack.c.b16 %v688, %v687
    %vm701 = vcmask 785408
    %v703 = vsel %vm701, %v658, 0
    %v706 = vsel %vm701, %v659, 0
    %v709 = vsel %vm701, %v660, 0
    %v712 = vsel %vm701, %v661, 0
    %714 = vmatpush.bf16.msra.mxu0 0
    %715 = vmatpush.bf16.msra.mxu0 0
    %716 = vmatpush.bf16.msra.mxu0 %v694
    %717 = vmatpush.bf16.msra.mxu0 %v693
    %718 = vmatpush.bf16.msra.mxu0 %v692
    %719 = vmatpush.bf16.msra.mxu0 %v691
    %720 = vmatpush.bf16.msra.mxu0 %v690
    %721 = vmatpush.bf16.msra.mxu0 %v689
    %722 = vmatmul.bf16.gmra.mxu0 %v703
    %v723 = vpop.f32.mrf.mxu0
    %v724 = vadd.f32 %v663, %v723
    %v725 = vpop.f32.mrf.mxu0
    %v726 = vadd.f32 %v663, %v725
    %727 = vmatmul.bf16.gmra.mxu0 %v706
    %v728 = vpop.f32.mrf.mxu0
    %v729 = vadd.f32 %v663, %v728
    %v730 = vpop.f32.mrf.mxu0
    %v731 = vadd.f32 %v663, %v730
    %732 = vmatmul.bf16.gmra.mxu0 %v709
    %v733 = vpop.f32.mrf.mxu0
    %v734 = vadd.f32 %v663, %v733
    %v735 = vpop.f32.mrf.mxu0
    %v736 = vadd.f32 %v663, %v735
    %737 = vmatmul.bf16.gmra.mxu0 %v712
    %v738 = vpop.f32.mrf.mxu0
    %v739 = vadd.f32 %v663, %v738
    %v740 = vpop.f32.mrf.mxu0
    %v741 = vadd.f32 %v663, %v740
    %742 = vdwg.mxu0
    %v743 = vmax.f32 %v724, 0.0
    %v744 = vmax.f32 %v726, 0.0
    %v745 = vmax.f32 %v729, 0.0
    %v746 = vmax.f32 %v731, 0.0
    %v747 = vmax.f32 %v734, 0.0
    %v748 = vmax.f32 %v736, 0.0
    %v749 = vmax.f32 %v739, 0.0
    %v750 = vmax.f32 %v741, 0.0
    %s751 = scalar_lea.vmem %s3, 48
    %v752 = vld [vmem:[%s751] sm:$0xf]
    %v753 = vld [vmem:[%s751 + $0x4] sm:$0xf]
    %v754 = vld [vmem:[%s751 + $0x8] sm:$0xf]
    %v755 = vld [vmem:[%s751 + $0xc] sm:$0xf]
    %v756 = vld [vmem:[%s751 + $0x10] sm:$0xf]
    %v757 = vld [vmem:[%s751 + $0x14] sm:$0xf]
    %v758 = vld [vmem:[%s751 + $0x18] sm:$0xf]
    %v759 = vld [vmem:[%s751 + $0x1c] sm:$0xf]
    %v760 = vld [vmem:[%s751 + $0x20] sm:$0xf]
    %v761 = vld [vmem:[%s751 + $0x24] sm:$0xf]
    %v762 = vld [vmem:[%s751 + $0x28] sm:$0xf]
    %v763 = vld [vmem:[%s751 + $0x2c] sm:$0xf]
    %s764 = scalar_lea.vmem %s4, 1
    %v765 = vld [vmem:[%s764] sm:$0x1]
    %v774 = vrot.slane %v743, 7
    %v775 = vrot.slane %v744, 7
    %v776 = vsel %vm208, %v774, %v775
    %v777 = vrot.slane %v745, 7
    %v778 = vsel %vm208, %v775, %v777
    %v779 = vrot.slane %v746, 7
    %v780 = vsel %vm208, %v777, %v779
    %v781 = vrot.slane %v747, 7
    %v782 = vsel %vm208, %v779, %v781
    %v783 = vrot.slane %v748, 7
    %v784 = vsel %vm208, %v781, %v783
    %v785 = vrot.slane %v749, 7
    %v786 = vsel %vm208, %v783, %v785
    %v787 = vrot.slane %v750, 7
    %v788 = vsel %vm208, %v785, %v787
    %v797 = vsel %vm208, 0.0, %v774
    %v798 = vsel %vm241, 0.0, %v797
    %v799 = vsel %vm242, 0.0, %v776
    %v800 = vsel %vm243, 0.0, %v778
    %v801 = vsel %vm244, 0.0, %v780
    %v802 = vsel %vm245, 0.0, %v782
    %v803 = vsel %vm246, 0.0, %v784
    %v804 = vsel %vm247, 0.0, %v786
    %v805 = vsel %vm248, 0.0, %v788
    %v806 = vrot.slane %v743, 1
    %v807 = vrot.slane %v744, 1
    %v808 = vsel %vm257, %v806, %v807
    %v809 = vrot.slane %v745, 1
    %v810 = vsel %vm257, %v807, %v809
    %v811 = vrot.slane %v746, 1
    %v812 = vsel %vm257, %v809, %v811
    %v813 = vrot.slane %v747, 1
    %v814 = vsel %vm257, %v811, %v813
    %v815 = vrot.slane %v748, 1
    %v816 = vsel %vm257, %v813, %v815
    %v817 = vrot.slane %v749, 1
    %v818 = vsel %vm257, %v815, %v817
    %v819 = vrot.slane %v750, 1
    %v820 = vsel %vm257, %v817, %v819
    %v829 = vsel %vm257, %v819, 0.0
    %v830 = vsel %vm290, 0.0, %v808
    %v831 = vsel %vm291, 0.0, %v810
    %v832 = vsel %vm292, 0.0, %v812
    %v833 = vsel %vm293, 0.0, %v814
    %v834 = vsel %vm294, 0.0, %v816
    %v835 = vsel %vm295, 0.0, %v818
    %v836 = vsel %vm296, 0.0, %v820
    %v837 = vsel %vm297, 0.0, %v829
    %838 = vrot.lane.b32.xlu0 %v743, 32
    %v839 = vpop.permute.xlu0 %838
    %840 = vrot.lane.b32.xlu0 %v744, 32
    %v841 = vpop.permute.xlu0 %840
    %842 = vrot.lane.b32.xlu0 %v745, 32
    %v843 = vpop.permute.xlu0 %842
    %844 = vrot.lane.b32.xlu0 %v746, 32
    %v845 = vpop.permute.xlu0 %844
    %846 = vrot.lane.b32.xlu0 %v747, 32
    %v847 = vpop.permute.xlu0 %846
    %848 = vrot.lane.b32.xlu0 %v748, 32
    %v849 = vpop.permute.xlu0 %848
    %850 = vrot.lane.b32.xlu0 %v749, 32
    %v851 = vpop.permute.xlu0 %850
    %852 = vrot.lane.b32.xlu0 %v750, 32
    %v853 = vpop.permute.xlu0 %852
    %870 = vrot.lane.b32.xlu0 %v830, 64
    %v871 = vpop.permute.xlu0 %870
    %872 = vrot.lane.b32.xlu0 %v831, 64
    %v873 = vpop.permute.xlu0 %872
    %874 = vrot.lane.b32.xlu0 %v832, 64
    %v875 = vpop.permute.xlu0 %874
    %876 = vrot.lane.b32.xlu0 %v833, 64
    %v877 = vpop.permute.xlu0 %876
    %878 = vrot.lane.b32.xlu0 %v834, 64
    %v879 = vpop.permute.xlu0 %878
    %880 = vrot.lane.b32.xlu0 %v835, 64
    %v881 = vpop.permute.xlu0 %880
    %882 = vrot.lane.b32.xlu0 %v836, 64
    %v883 = vpop.permute.xlu0 %882
    %884 = vrot.lane.b32.xlu0 %v837, 64
    %v885 = vpop.permute.xlu0 %884
    %v894 = vsel %vm371, %v798, %v839
    %v895 = vsel %vm371, %v799, %v841
    %v896 = vsel %vm371, %v800, %v843
    %v897 = vsel %vm371, %v801, %v845
    %v898 = vsel %vm371, %v802, %v847
    %v899 = vsel %vm371, %v803, %v849
    %v900 = vsel %vm371, %v804, %v851
    %v901 = vsel %vm371, %v805, %v853
    %v902 = vsel %vm649, %v894, %v871
    %v903 = vsel %vm649, %v895, %v873
    %v904 = vsel %vm649, %v896, %v875
    %v905 = vsel %vm649, %v897, %v877
    %v906 = vsel %vm649, %v898, %v879
    %v907 = vsel %vm649, %v899, %v881
    %v908 = vsel %vm649, %v900, %v883
    %v909 = vsel %vm649, %v901, %v885
    %v910 = vpack.c.bf16 %v903, %v902
    %v911 = vpack.c.bf16 %v905, %v904
    %v912 = vpack.c.bf16 %v907, %v906
    %v913 = vpack.c.bf16 %v909, %v908
    %v915 = vperm.slane %v765, 0
    %v929 = vunpack.c.l.b16 %v752
    %v930 = vunpack.c.l.b16 %v753
    %v931 = vunpack.c.l.b16 %v754
    %v932 = vunpack.c.l.b16 %v755
    %v933 = vunpack.c.l.b16 %v756
    %v934 = vunpack.c.l.b16 %v757
    %v935 = vunpack.c.l.b16 %v758
    %v936 = vunpack.c.l.b16 %v759
    %v937 = vunpack.c.l.b16 %v760
    %v938 = vunpack.c.l.b16 %v761
    %v939 = vunpack.c.l.b16 %v762
    %v940 = vunpack.c.l.b16 %v763
    %v941 = vpack.c.b16 %v930, %v929
    %v942 = vpack.c.b16 %v932, %v931
    %v943 = vpack.c.b16 %v934, %v933
    %v944 = vpack.c.b16 %v936, %v935
    %v945 = vpack.c.b16 %v938, %v937
    %v946 = vpack.c.b16 %v940, %v939
    %v954 = vsel %vm701, %v910, 0
    %v957 = vsel %vm701, %v911, 0
    %v960 = vsel %vm701, %v912, 0
    %v963 = vsel %vm701, %v913, 0
    %965 = vmatpush.bf16.msra.mxu0 0
    %966 = vmatpush.bf16.msra.mxu0 0
    %967 = vmatpush.bf16.msra.mxu0 %v946
    %968 = vmatpush.bf16.msra.mxu0 %v945
    %969 = vmatpush.bf16.msra.mxu0 %v944
    %970 = vmatpush.bf16.msra.mxu0 %v943
    %971 = vmatpush.bf16.msra.mxu0 %v942
    %972 = vmatpush.bf16.msra.mxu0 %v941
    %973 = vmatmul.bf16.gmra.mxu0 %v954
    %v974 = vpop.f32.mrf.mxu0
    %v975 = vadd.f32 %v915, %v974
    %v976 = vpop.f32.mrf.mxu0
    %v977 = vadd.f32 %v915, %v976
    %978 = vmatmul.bf16.gmra.mxu0 %v957
    %v979 = vpop.f32.mrf.mxu0
    %v980 = vadd.f32 %v915, %v979
    %v981 = vpop.f32.mrf.mxu0
    %v982 = vadd.f32 %v915, %v981
    %983 = vmatmul.bf16.gmra.mxu0 %v960
    %v984 = vpop.f32.mrf.mxu0
    %v985 = vadd.f32 %v915, %v984
    %v986 = vpop.f32.mrf.mxu0
    %v987 = vadd.f32 %v915, %v986
    %988 = vmatmul.bf16.gmra.mxu0 %v963
    %v989 = vpop.f32.mrf.mxu0
    %v990 = vadd.f32 %v915, %v989
    %v991 = vpop.f32.mrf.mxu0
    %v992 = vadd.f32 %v915, %v991
    %993 = vdwg.mxu0
    %v994 = vmax.f32 %v975, 0.0
    %v995 = vmax.f32 %v977, 0.0
    %v996 = vmax.f32 %v980, 0.0
    %v997 = vmax.f32 %v982, 0.0
    %v998 = vmax.f32 %v985, 0.0
    %v999 = vmax.f32 %v987, 0.0
    %v1000 = vmax.f32 %v990, 0.0
    %v1001 = vmax.f32 %v992, 0.0
    %s1002 = scalar_lea.vmem %s3, 96
    %v1003 = vld [vmem:[%s1002] sm:$0xf]
    %v1004 = vld [vmem:[%s1002 + $0x4] sm:$0xf]
    %v1005 = vld [vmem:[%s1002 + $0x8] sm:$0xf]
    %v1006 = vld [vmem:[%s1002 + $0xc] sm:$0xf]
    %v1007 = vld [vmem:[%s1002 + $0x10] sm:$0xf]
    %v1008 = vld [vmem:[%s1002 + $0x14] sm:$0xf]
    %v1009 = vld [vmem:[%s1002 + $0x18] sm:$0xf]
    %v1010 = vld [vmem:[%s1002 + $0x1c] sm:$0xf]
    %v1011 = vld [vmem:[%s1002 + $0x20] sm:$0xf]
    %v1012 = vld [vmem:[%s1002 + $0x24] sm:$0xf]
    %v1013 = vld [vmem:[%s1002 + $0x28] sm:$0xf]
    %v1014 = vld [vmem:[%s1002 + $0x2c] sm:$0xf]
    %s1015 = scalar_lea.vmem %s4, 2
    %v1016 = vld [vmem:[%s1015] sm:$0x1]
    %v1025 = vrot.slane %v994, 7
    %v1026 = vrot.slane %v995, 7
    %v1027 = vsel %vm208, %v1025, %v1026
    %v1028 = vrot.slane %v996, 7
    %v1029 = vsel %vm208, %v1026, %v1028
    %v1030 = vrot.slane %v997, 7
    %v1031 = vsel %vm208, %v1028, %v1030
    %v1032 = vrot.slane %v998, 7
    %v1033 = vsel %vm208, %v1030, %v1032
    %v1034 = vrot.slane %v999, 7
    %v1035 = vsel %vm208, %v1032, %v1034
    %v1036 = vrot.slane %v1000, 7
    %v1037 = vsel %vm208, %v1034, %v1036
    %v1038 = vrot.slane %v1001, 7
    %v1039 = vsel %vm208, %v1036, %v1038
    %v1048 = vsel %vm208, 0.0, %v1025
    %v1049 = vsel %vm241, 0.0, %v1048
    %v1050 = vsel %vm242, 0.0, %v1027
    %v1051 = vsel %vm243, 0.0, %v1029
    %v1052 = vsel %vm244, 0.0, %v1031
    %v1053 = vsel %vm245, 0.0, %v1033
    %v1054 = vsel %vm246, 0.0, %v1035
    %v1055 = vsel %vm247, 0.0, %v1037
    %v1056 = vsel %vm248, 0.0, %v1039
    %v1057 = vrot.slane %v994, 1
    %v1058 = vrot.slane %v995, 1
    %v1059 = vsel %vm257, %v1057, %v1058
    %v1060 = vrot.slane %v996, 1
    %v1061 = vsel %vm257, %v1058, %v1060
    %v1062 = vrot.slane %v997, 1
    %v1063 = vsel %vm257, %v1060, %v1062
    %v1064 = vrot.slane %v998, 1
    %v1065 = vsel %vm257, %v1062, %v1064
    %v1066 = vrot.slane %v999, 1
    %v1067 = vsel %vm257, %v1064, %v1066
    %v1068 = vrot.slane %v1000, 1
    %v1069 = vsel %vm257, %v1066, %v1068
    %v1070 = vrot.slane %v1001, 1
    %v1071 = vsel %vm257, %v1068, %v1070
    %v1080 = vsel %vm257, %v1070, 0.0
    %v1081 = vsel %vm290, 0.0, %v1059
    %v1082 = vsel %vm291, 0.0, %v1061
    %v1083 = vsel %vm292, 0.0, %v1063
    %v1084 = vsel %vm293, 0.0, %v1065
    %v1085 = vsel %vm294, 0.0, %v1067
    %v1086 = vsel %vm295, 0.0, %v1069
    %v1087 = vsel %vm296, 0.0, %v1071
    %v1088 = vsel %vm297, 0.0, %v1080
    %1089 = vrot.lane.b32.xlu0 %v994, 32
    %v1090 = vpop.permute.xlu0 %1089
    %1091 = vrot.lane.b32.xlu0 %v995, 32
    %v1092 = vpop.permute.xlu0 %1091
    %1093 = vrot.lane.b32.xlu0 %v996, 32
    %v1094 = vpop.permute.xlu0 %1093
    %1095 = vrot.lane.b32.xlu0 %v997, 32
    %v1096 = vpop.permute.xlu0 %1095
    %1097 = vrot.lane.b32.xlu0 %v998, 32
    %v1098 = vpop.permute.xlu0 %1097
    %1099 = vrot.lane.b32.xlu0 %v999, 32
    %v1100 = vpop.permute.xlu0 %1099
    %1101 = vrot.lane.b32.xlu0 %v1000, 32
    %v1102 = vpop.permute.xlu0 %1101
    %1103 = vrot.lane.b32.xlu0 %v1001, 32
    %v1104 = vpop.permute.xlu0 %1103
    %1121 = vrot.lane.b32.xlu0 %v1081, 64
    %v1122 = vpop.permute.xlu0 %1121
    %1123 = vrot.lane.b32.xlu0 %v1082, 64
    %v1124 = vpop.permute.xlu0 %1123
    %1125 = vrot.lane.b32.xlu0 %v1083, 64
    %v1126 = vpop.permute.xlu0 %1125
    %1127 = vrot.lane.b32.xlu0 %v1084, 64
    %v1128 = vpop.permute.xlu0 %1127
    %1129 = vrot.lane.b32.xlu0 %v1085, 64
    %v1130 = vpop.permute.xlu0 %1129
    %1131 = vrot.lane.b32.xlu0 %v1086, 64
    %v1132 = vpop.permute.xlu0 %1131
    %1133 = vrot.lane.b32.xlu0 %v1087, 64
    %v1134 = vpop.permute.xlu0 %1133
    %1135 = vrot.lane.b32.xlu0 %v1088, 64
    %v1136 = vpop.permute.xlu0 %1135
    %v1145 = vsel %vm371, %v1049, %v1090
    %v1146 = vsel %vm371, %v1050, %v1092
    %v1147 = vsel %vm371, %v1051, %v1094
    %v1148 = vsel %vm371, %v1052, %v1096
    %v1149 = vsel %vm371, %v1053, %v1098
    %v1150 = vsel %vm371, %v1054, %v1100
    %v1151 = vsel %vm371, %v1055, %v1102
    %v1152 = vsel %vm371, %v1056, %v1104
    %v1153 = vsel %vm649, %v1145, %v1122
    %v1154 = vsel %vm649, %v1146, %v1124
    %v1155 = vsel %vm649, %v1147, %v1126
    %v1156 = vsel %vm649, %v1148, %v1128
    %v1157 = vsel %vm649, %v1149, %v1130
    %v1158 = vsel %vm649, %v1150, %v1132
    %v1159 = vsel %vm649, %v1151, %v1134
    %v1160 = vsel %vm649, %v1152, %v1136
    %v1161 = vpack.c.bf16 %v1154, %v1153
    %v1162 = vpack.c.bf16 %v1156, %v1155
    %v1163 = vpack.c.bf16 %v1158, %v1157
    %v1164 = vpack.c.bf16 %v1160, %v1159
    %v1166 = vperm.slane %v1016, 0
    %v1180 = vunpack.c.l.b16 %v1003
    %v1181 = vunpack.c.l.b16 %v1004
    %v1182 = vunpack.c.l.b16 %v1005
    %v1183 = vunpack.c.l.b16 %v1006
    %v1184 = vunpack.c.l.b16 %v1007
    %v1185 = vunpack.c.l.b16 %v1008
    %v1186 = vunpack.c.l.b16 %v1009
    %v1187 = vunpack.c.l.b16 %v1010
    %v1188 = vunpack.c.l.b16 %v1011
    %v1189 = vunpack.c.l.b16 %v1012
    %v1190 = vunpack.c.l.b16 %v1013
    %v1191 = vunpack.c.l.b16 %v1014
    %v1192 = vpack.c.b16 %v1181, %v1180
    %v1193 = vpack.c.b16 %v1183, %v1182
    %v1194 = vpack.c.b16 %v1185, %v1184
    %v1195 = vpack.c.b16 %v1187, %v1186
    %v1196 = vpack.c.b16 %v1189, %v1188
    %v1197 = vpack.c.b16 %v1191, %v1190
    %v1205 = vsel %vm701, %v1161, 0
    %v1208 = vsel %vm701, %v1162, 0
    %v1211 = vsel %vm701, %v1163, 0
    %v1214 = vsel %vm701, %v1164, 0
    %1216 = vmatpush.bf16.msra.mxu0 0
    %1217 = vmatpush.bf16.msra.mxu0 0
    %1218 = vmatpush.bf16.msra.mxu0 %v1197
    %1219 = vmatpush.bf16.msra.mxu0 %v1196
    %1220 = vmatpush.bf16.msra.mxu0 %v1195
    %1221 = vmatpush.bf16.msra.mxu0 %v1194
    %1222 = vmatpush.bf16.msra.mxu0 %v1193
    %1223 = vmatpush.bf16.msra.mxu0 %v1192
    %1224 = vmatmul.bf16.gmra.mxu0 %v1205
    %v1225 = vpop.f32.mrf.mxu0
    %v1226 = vadd.f32 %v1166, %v1225
    %v1227 = vpop.f32.mrf.mxu0
    %v1228 = vadd.f32 %v1166, %v1227
    %1229 = vmatmul.bf16.gmra.mxu0 %v1208
    %v1230 = vpop.f32.mrf.mxu0
    %v1231 = vadd.f32 %v1166, %v1230
    %v1232 = vpop.f32.mrf.mxu0
    %v1233 = vadd.f32 %v1166, %v1232
    %1234 = vmatmul.bf16.gmra.mxu0 %v1211
    %v1235 = vpop.f32.mrf.mxu0
    %v1236 = vadd.f32 %v1166, %v1235
    %v1237 = vpop.f32.mrf.mxu0
    %v1238 = vadd.f32 %v1166, %v1237
    %1239 = vmatmul.bf16.gmra.mxu0 %v1214
    %v1240 = vpop.f32.mrf.mxu0
    %v1241 = vadd.f32 %v1166, %v1240
    %v1242 = vpop.f32.mrf.mxu0
    %v1243 = vadd.f32 %v1166, %v1242
    %1244 = vdwg.mxu0
    %v1245 = vmax.f32 %v1226, 0.0
    %v1246 = vmax.f32 %v1228, 0.0
    %v1247 = vmax.f32 %v1231, 0.0
    %v1248 = vmax.f32 %v1233, 0.0
    %v1249 = vmax.f32 %v1236, 0.0
    %v1250 = vmax.f32 %v1238, 0.0
    %v1251 = vmax.f32 %v1241, 0.0
    %v1252 = vmax.f32 %v1243, 0.0
    %s1253 = scalar_lea.vmem %s3, 144
    %v1254 = vld [vmem:[%s1253] sm:$0xf]
    %v1255 = vld [vmem:[%s1253 + $0x4] sm:$0xf]
    %v1256 = vld [vmem:[%s1253 + $0x8] sm:$0xf]
    %v1257 = vld [vmem:[%s1253 + $0xc] sm:$0xf]
    %v1258 = vld [vmem:[%s1253 + $0x10] sm:$0xf]
    %v1259 = vld [vmem:[%s1253 + $0x14] sm:$0xf]
    %v1260 = vld [vmem:[%s1253 + $0x18] sm:$0xf]
    %v1261 = vld [vmem:[%s1253 + $0x1c] sm:$0xf]
    %v1262 = vld [vmem:[%s1253 + $0x20] sm:$0xf]
    %v1263 = vld [vmem:[%s1253 + $0x24] sm:$0xf]
    %v1264 = vld [vmem:[%s1253 + $0x28] sm:$0xf]
    %v1265 = vld [vmem:[%s1253 + $0x2c] sm:$0xf]
    %s1266 = scalar_lea.vmem %s4, 3
    %v1267 = vld [vmem:[%s1266] sm:$0x1]
    %v1276 = vrot.slane %v1245, 7
    %v1277 = vrot.slane %v1246, 7
    %v1278 = vsel %vm208, %v1276, %v1277
    %v1279 = vrot.slane %v1247, 7
    %v1280 = vsel %vm208, %v1277, %v1279
    %v1281 = vrot.slane %v1248, 7
    %v1282 = vsel %vm208, %v1279, %v1281
    %v1283 = vrot.slane %v1249, 7
    %v1284 = vsel %vm208, %v1281, %v1283
    %v1285 = vrot.slane %v1250, 7
    %v1286 = vsel %vm208, %v1283, %v1285
    %v1287 = vrot.slane %v1251, 7
    %v1288 = vsel %vm208, %v1285, %v1287
    %v1289 = vrot.slane %v1252, 7
    %v1290 = vsel %vm208, %v1287, %v1289
    %v1299 = vsel %vm208, 0.0, %v1276
    %v1300 = vsel %vm241, 0.0, %v1299
    %v1301 = vsel %vm242, 0.0, %v1278
    %v1302 = vsel %vm243, 0.0, %v1280
    %v1303 = vsel %vm244, 0.0, %v1282
    %v1304 = vsel %vm245, 0.0, %v1284
    %v1305 = vsel %vm246, 0.0, %v1286
    %v1306 = vsel %vm247, 0.0, %v1288
    %v1307 = vsel %vm248, 0.0, %v1290
    %v1308 = vrot.slane %v1245, 1
    %v1309 = vrot.slane %v1246, 1
    %v1310 = vsel %vm257, %v1308, %v1309
    %v1311 = vrot.slane %v1247, 1
    %v1312 = vsel %vm257, %v1309, %v1311
    %v1313 = vrot.slane %v1248, 1
    %v1314 = vsel %vm257, %v1311, %v1313
    %v1315 = vrot.slane %v1249, 1
    %v1316 = vsel %vm257, %v1313, %v1315
    %v1317 = vrot.slane %v1250, 1
    %v1318 = vsel %vm257, %v1315, %v1317
    %v1319 = vrot.slane %v1251, 1
    %v1320 = vsel %vm257, %v1317, %v1319
    %v1321 = vrot.slane %v1252, 1
    %v1322 = vsel %vm257, %v1319, %v1321
    %v1331 = vsel %vm257, %v1321, 0.0
    %v1332 = vsel %vm290, 0.0, %v1310
    %v1333 = vsel %vm291, 0.0, %v1312
    %v1334 = vsel %vm292, 0.0, %v1314
    %v1335 = vsel %vm293, 0.0, %v1316
    %v1336 = vsel %vm294, 0.0, %v1318
    %v1337 = vsel %vm295, 0.0, %v1320
    %v1338 = vsel %vm296, 0.0, %v1322
    %v1339 = vsel %vm297, 0.0, %v1331
    %1340 = vrot.lane.b32.xlu0 %v1245, 32
    %v1341 = vpop.permute.xlu0 %1340
    %1342 = vrot.lane.b32.xlu0 %v1246, 32
    %v1343 = vpop.permute.xlu0 %1342
    %1344 = vrot.lane.b32.xlu0 %v1247, 32
    %v1345 = vpop.permute.xlu0 %1344
    %1346 = vrot.lane.b32.xlu0 %v1248, 32
    %v1347 = vpop.permute.xlu0 %1346
    %1348 = vrot.lane.b32.xlu0 %v1249, 32
    %v1349 = vpop.permute.xlu0 %1348
    %1350 = vrot.lane.b32.xlu0 %v1250, 32
    %v1351 = vpop.permute.xlu0 %1350
    %1352 = vrot.lane.b32.xlu0 %v1251, 32
    %v1353 = vpop.permute.xlu0 %1352
    %1354 = vrot.lane.b32.xlu0 %v1252, 32
    %v1355 = vpop.permute.xlu0 %1354
    %1372 = vrot.lane.b32.xlu0 %v1332, 64
    %v1373 = vpop.permute.xlu0 %1372
    %1374 = vrot.lane.b32.xlu0 %v1333, 64
    %v1375 = vpop.permute.xlu0 %1374
    %1376 = vrot.lane.b32.xlu0 %v1334, 64
    %v1377 = vpop.permute.xlu0 %1376
    %1378 = vrot.lane.b32.xlu0 %v1335, 64
    %v1379 = vpop.permute.xlu0 %1378
    %1380 = vrot.lane.b32.xlu0 %v1336, 64
    %v1381 = vpop.permute.xlu0 %1380
    %1382 = vrot.lane.b32.xlu0 %v1337, 64
    %v1383 = vpop.permute.xlu0 %1382
    %1384 = vrot.lane.b32.xlu0 %v1338, 64
    %v1385 = vpop.permute.xlu0 %1384
    %1386 = vrot.lane.b32.xlu0 %v1339, 64
    %v1387 = vpop.permute.xlu0 %1386
    %v1396 = vsel %vm371, %v1300, %v1341
    %v1397 = vsel %vm371, %v1301, %v1343
    %v1398 = vsel %vm371, %v1302, %v1345
    %v1399 = vsel %vm371, %v1303, %v1347
    %v1400 = vsel %vm371, %v1304, %v1349
    %v1401 = vsel %vm371, %v1305, %v1351
    %v1402 = vsel %vm371, %v1306, %v1353
    %v1403 = vsel %vm371, %v1307, %v1355
    %v1404 = vsel %vm649, %v1396, %v1373
    %v1405 = vsel %vm649, %v1397, %v1375
    %v1406 = vsel %vm649, %v1398, %v1377
    %v1407 = vsel %vm649, %v1399, %v1379
    %v1408 = vsel %vm649, %v1400, %v1381
    %v1409 = vsel %vm649, %v1401, %v1383
    %v1410 = vsel %vm649, %v1402, %v1385
    %v1411 = vsel %vm649, %v1403, %v1387
    %v1412 = vpack.c.bf16 %v1405, %v1404
    %v1413 = vpack.c.bf16 %v1407, %v1406
    %v1414 = vpack.c.bf16 %v1409, %v1408
    %v1415 = vpack.c.bf16 %v1411, %v1410
    %v1417 = vperm.slane %v1267, 0
    %v1431 = vunpack.c.l.b16 %v1254
    %v1432 = vunpack.c.l.b16 %v1255
    %v1433 = vunpack.c.l.b16 %v1256
    %v1434 = vunpack.c.l.b16 %v1257
    %v1435 = vunpack.c.l.b16 %v1258
    %v1436 = vunpack.c.l.b16 %v1259
    %v1437 = vunpack.c.l.b16 %v1260
    %v1438 = vunpack.c.l.b16 %v1261
    %v1439 = vunpack.c.l.b16 %v1262
    %v1440 = vunpack.c.l.b16 %v1263
    %v1441 = vunpack.c.l.b16 %v1264
    %v1442 = vunpack.c.l.b16 %v1265
    %v1443 = vpack.c.b16 %v1432, %v1431
    %v1444 = vpack.c.b16 %v1434, %v1433
    %v1445 = vpack.c.b16 %v1436, %v1435
    %v1446 = vpack.c.b16 %v1438, %v1437
    %v1447 = vpack.c.b16 %v1440, %v1439
    %v1448 = vpack.c.b16 %v1442, %v1441
    %v1456 = vsel %vm701, %v1412, 0
    %v1459 = vsel %vm701, %v1413, 0
    %v1462 = vsel %vm701, %v1414, 0
    %v1465 = vsel %vm701, %v1415, 0
    %1467 = vmatpush.bf16.msra.mxu0 0
    %1468 = vmatpush.bf16.msra.mxu0 0
    %1469 = vmatpush.bf16.msra.mxu0 %v1448
    %1470 = vmatpush.bf16.msra.mxu0 %v1447
    %1471 = vmatpush.bf16.msra.mxu0 %v1446
    %1472 = vmatpush.bf16.msra.mxu0 %v1445
    %1473 = vmatpush.bf16.msra.mxu0 %v1444
    %1474 = vmatpush.bf16.msra.mxu0 %v1443
    %1475 = vmatmul.bf16.gmra.mxu0 %v1456
    %v1476 = vpop.f32.mrf.mxu0
    %v1477 = vadd.f32 %v1417, %v1476
    %v1478 = vpop.f32.mrf.mxu0
    %v1479 = vadd.f32 %v1417, %v1478
    %1480 = vmatmul.bf16.gmra.mxu0 %v1459
    %v1481 = vpop.f32.mrf.mxu0
    %v1482 = vadd.f32 %v1417, %v1481
    %v1483 = vpop.f32.mrf.mxu0
    %v1484 = vadd.f32 %v1417, %v1483
    %1485 = vmatmul.bf16.gmra.mxu0 %v1462
    %v1486 = vpop.f32.mrf.mxu0
    %v1487 = vadd.f32 %v1417, %v1486
    %v1488 = vpop.f32.mrf.mxu0
    %v1489 = vadd.f32 %v1417, %v1488
    %1490 = vmatmul.bf16.gmra.mxu0 %v1465
    %v1491 = vpop.f32.mrf.mxu0
    %v1492 = vadd.f32 %v1417, %v1491
    %v1493 = vpop.f32.mrf.mxu0
    %v1494 = vadd.f32 %v1417, %v1493
    %1495 = vdwg.mxu0
    %v1496 = vmax.f32 %v1477, 0.0
    %v1497 = vmax.f32 %v1479, 0.0
    %v1498 = vmax.f32 %v1482, 0.0
    %v1499 = vmax.f32 %v1484, 0.0
    %v1500 = vmax.f32 %v1487, 0.0
    %v1501 = vmax.f32 %v1489, 0.0
    %v1502 = vmax.f32 %v1492, 0.0
    %v1503 = vmax.f32 %v1494, 0.0
    %v1504 = vpack.c.bf16 %v1497, %v1496
    %v1505 = vpack.c.bf16 %v1499, %v1498
    %v1506 = vpack.c.bf16 %v1501, %v1500
    %v1507 = vpack.c.bf16 %v1503, %v1502
    %1509 = vset.pattern.permute.xlu0 0
    %1510 = vperm.xlu0 %1509, %v455
    %v1511 = vpop.permute.xlu0 %1510
    %1514 = vset.pattern.permute.xlu0 0
    %1515 = vperm.xlu0 %1514, %v456
    %v1516 = vpop.permute.xlu0 %1515
    %1519 = vset.pattern.permute.xlu0 0
    %1520 = vperm.xlu0 %1519, %v457
    %v1521 = vpop.permute.xlu0 %1520
    %1524 = vset.pattern.permute.xlu0 0
    %1525 = vperm.xlu0 %1524, %v458
    %v1526 = vpop.permute.xlu0 %1525
    %1529 = vset.pattern.permute.xlu0 0
    %1530 = vperm.xlu0 %1529, %v459
    %v1531 = vpop.permute.xlu0 %1530
    %1534 = vset.pattern.permute.xlu0 0
    %1535 = vperm.xlu0 %1534, %v460
    %v1536 = vpop.permute.xlu0 %1535
    %1539 = vset.pattern.permute.xlu0 0
    %1540 = vperm.xlu0 %1539, %v461
    %v1541 = vpop.permute.xlu0 %1540
    %1544 = vset.pattern.permute.xlu0 0
    %1545 = vperm.xlu0 %1544, %v462
    %v1546 = vpop.permute.xlu0 %1545
    %v1556 = vunpack.c.l.b16 %v447
    %v1557 = vunpack.c.l.b16 %v448
    %v1558 = vunpack.c.l.b16 %v449
    %v1559 = vunpack.c.l.b16 %v450
    %v1560 = vunpack.c.l.b16 %v451
    %v1561 = vunpack.c.l.b16 %v452
    %v1562 = vunpack.c.l.b16 %v453
    %v1563 = vunpack.c.l.b16 %v454
    %v1564 = vpack.c.b16 %v1557, %v1556
    %v1565 = vpack.c.b16 %v1559, %v1558
    %v1566 = vpack.c.b16 %v1561, %v1560
    %v1567 = vpack.c.b16 %v1563, %v1562
    %v1569 = vsel %vm649, %v1564, 0
    %v1572 = vsel %vm649, %v1565, 0
    %v1575 = vsel %vm649, %v1566, 0
    %v1578 = vsel %vm649, %v1567, 0
    %1580 = vmatpush.bf16.msra.mxu0 0
    %1581 = vmatpush.bf16.msra.mxu0 0
    %1582 = vmatpush.bf16.msra.mxu0 0
    %1583 = vmatpush.bf16.msra.mxu0 0
    %1584 = vmatpush.bf16.msra.mxu0 %v1507
    %1585 = vmatpush.bf16.msra.mxu0 %v1506
    %1586 = vmatpush.bf16.msra.mxu0 %v1505
    %1587 = vmatpush.bf16.msra.mxu0 %v1504
    %1588 = vmatmul.bf16.gmra.mxu0 %v1569
    %v1589 = vpop.f32.mrf.mxu0
    %v1590 = vadd.f32 %v1511, %v1589
    %v1591 = vpop.f32.mrf.mxu0
    %v1592 = vadd.f32 %v1516, %v1591
    %1593 = vmatmul.bf16.gmra.mxu0 %v1572
    %v1594 = vpop.f32.mrf.mxu0
    %v1595 = vadd.f32 %v1521, %v1594
    %v1596 = vpop.f32.mrf.mxu0
    %v1597 = vadd.f32 %v1526, %v1596
    %1598 = vmatmul.bf16.gmra.mxu0 %v1575
    %v1599 = vpop.f32.mrf.mxu0
    %v1600 = vadd.f32 %v1531, %v1599
    %v1601 = vpop.f32.mrf.mxu0
    %v1602 = vadd.f32 %v1536, %v1601
    %1603 = vmatmul.bf16.gmra.mxu0 %v1578
    %v1604 = vpop.f32.mrf.mxu0
    %v1605 = vadd.f32 %v1541, %v1604
    %v1606 = vpop.f32.mrf.mxu0
    %v1607 = vadd.f32 %v1546, %v1606
    %1608 = vdwg.mxu0
    %v1609 = vmax.f32 %v1590, 0.0
    %v1610 = vmax.f32 %v1592, 0.0
    %v1611 = vmax.f32 %v1595, 0.0
    %v1612 = vmax.f32 %v1597, 0.0
    %v1613 = vmax.f32 %v1600, 0.0
    %v1614 = vmax.f32 %v1602, 0.0
    %v1615 = vmax.f32 %v1605, 0.0
    %v1616 = vmax.f32 %v1607, 0.0
    %v1617 = vpack.c.bf16 %v1610, %v1609
    %v1618 = vpack.c.bf16 %v1612, %v1611
    %v1619 = vpack.c.bf16 %v1614, %v1613
    %v1620 = vpack.c.bf16 %v1616, %v1615
    %1622 = vset.pattern.permute.xlu0 0
    %1623 = vperm.xlu0 %1622, %v479
    %v1624 = vpop.permute.xlu0 %1623
    %1627 = vset.pattern.permute.xlu0 0
    %1628 = vperm.xlu0 %1627, %v480
    %v1629 = vpop.permute.xlu0 %1628
    %1632 = vset.pattern.permute.xlu0 0
    %1633 = vperm.xlu0 %1632, %v481
    %v1634 = vpop.permute.xlu0 %1633
    %1637 = vset.pattern.permute.xlu0 0
    %1638 = vperm.xlu0 %1637, %v482
    %v1639 = vpop.permute.xlu0 %1638
    %1642 = vset.pattern.permute.xlu0 0
    %1643 = vperm.xlu0 %1642, %v483
    %v1644 = vpop.permute.xlu0 %1643
    %1647 = vset.pattern.permute.xlu0 0
    %1648 = vperm.xlu0 %1647, %v484
    %v1649 = vpop.permute.xlu0 %1648
    %1652 = vset.pattern.permute.xlu0 0
    %1653 = vperm.xlu0 %1652, %v485
    %v1654 = vpop.permute.xlu0 %1653
    %1657 = vset.pattern.permute.xlu0 0
    %1658 = vperm.xlu0 %1657, %v486
    %v1659 = vpop.permute.xlu0 %1658
    %1662 = vset.pattern.permute.xlu0 0
    %1663 = vperm.xlu0 %1662, %v487
    %v1664 = vpop.permute.xlu0 %1663
    %1667 = vset.pattern.permute.xlu0 0
    %1668 = vperm.xlu0 %1667, %v488
    %v1669 = vpop.permute.xlu0 %1668
    %1672 = vset.pattern.permute.xlu0 0
    %1673 = vperm.xlu0 %1672, %v489
    %v1674 = vpop.permute.xlu0 %1673
    %1677 = vset.pattern.permute.xlu0 0
    %1678 = vperm.xlu0 %1677, %v490
    %v1679 = vpop.permute.xlu0 %1678
    %1682 = vset.pattern.permute.xlu0 0
    %1683 = vperm.xlu0 %1682, %v491
    %v1684 = vpop.permute.xlu0 %1683
    %1687 = vset.pattern.permute.xlu0 0
    %1688 = vperm.xlu0 %1687, %v492
    %v1689 = vpop.permute.xlu0 %1688
    %1692 = vset.pattern.permute.xlu0 0
    %1693 = vperm.xlu0 %1692, %v493
    %v1694 = vpop.permute.xlu0 %1693
    %1697 = vset.pattern.permute.xlu0 0
    %1698 = vperm.xlu0 %1697, %v494
    %v1699 = vpop.permute.xlu0 %1698
    %v1717 = vunpack.c.l.b16 %v463
    %v1718 = vunpack.c.l.b16 %v464
    %v1719 = vunpack.c.l.b16 %v465
    %v1720 = vunpack.c.l.b16 %v466
    %v1721 = vunpack.c.l.b16 %v467
    %v1722 = vunpack.c.l.b16 %v468
    %v1723 = vunpack.c.l.b16 %v469
    %v1724 = vunpack.c.l.b16 %v470
    %v1725 = vunpack.c.l.b16 %v471
    %v1726 = vunpack.c.l.b16 %v472
    %v1727 = vunpack.c.l.b16 %v473
    %v1728 = vunpack.c.l.b16 %v474
    %v1729 = vunpack.c.l.b16 %v475
    %v1730 = vunpack.c.l.b16 %v476
    %v1731 = vunpack.c.l.b16 %v477
    %v1732 = vunpack.c.l.b16 %v478
    %v1733 = vpack.c.b16 %v1718, %v1717
    %v1734 = vpack.c.b16 %v1720, %v1719
    %v1735 = vpack.c.b16 %v1722, %v1721
    %v1736 = vpack.c.b16 %v1724, %v1723
    %v1737 = vpack.c.b16 %v1726, %v1725
    %v1738 = vpack.c.b16 %v1728, %v1727
    %v1739 = vpack.c.b16 %v1730, %v1729
    %v1740 = vpack.c.b16 %v1732, %v1731
    %v1742 = vsel %vm649, %v1733, 0
    %v1745 = vsel %vm649, %v1734, 0
    %v1748 = vsel %vm649, %v1735, 0
    %v1751 = vsel %vm649, %v1736, 0
    %v1754 = vsel %vm649, %v1737, 0
    %v1757 = vsel %vm649, %v1738, 0
    %v1760 = vsel %vm649, %v1739, 0
    %v1763 = vsel %vm649, %v1740, 0
    %1765 = vmatpush.bf16.msra.mxu0 0
    %1766 = vmatpush.bf16.msra.mxu0 0
    %1767 = vmatpush.bf16.msra.mxu0 0
    %1768 = vmatpush.bf16.msra.mxu0 0
    %1769 = vmatpush.bf16.msra.mxu0 %v1620
    %1770 = vmatpush.bf16.msra.mxu0 %v1619
    %1771 = vmatpush.bf16.msra.mxu0 %v1618
    %1772 = vmatpush.bf16.msra.mxu0 %v1617
    %1773 = vmatmul.bf16.gmra.mxu0 %v1742
    %v1774 = vpop.f32.mrf.mxu0
    %v1775 = vadd.f32 %v1624, %v1774
    %v1776 = vpop.f32.mrf.mxu0
    %v1777 = vadd.f32 %v1629, %v1776
    %1778 = vmatmul.bf16.gmra.mxu0 %v1745
    %v1779 = vpop.f32.mrf.mxu0
    %v1780 = vadd.f32 %v1634, %v1779
    %v1781 = vpop.f32.mrf.mxu0
    %v1782 = vadd.f32 %v1639, %v1781
    %1783 = vmatmul.bf16.gmra.mxu0 %v1748
    %v1784 = vpop.f32.mrf.mxu0
    %v1785 = vadd.f32 %v1644, %v1784
    %v1786 = vpop.f32.mrf.mxu0
    %v1787 = vadd.f32 %v1649, %v1786
    %1788 = vmatmul.bf16.gmra.mxu0 %v1751
    %v1789 = vpop.f32.mrf.mxu0
    %v1790 = vadd.f32 %v1654, %v1789
    %v1791 = vpop.f32.mrf.mxu0
    %v1792 = vadd.f32 %v1659, %v1791
    %1793 = vmatmul.bf16.gmra.mxu0 %v1754
    %v1794 = vpop.f32.mrf.mxu0
    %v1795 = vadd.f32 %v1664, %v1794
    %v1796 = vpop.f32.mrf.mxu0
    %v1797 = vadd.f32 %v1669, %v1796
    %1798 = vmatmul.bf16.gmra.mxu0 %v1757
    %v1799 = vpop.f32.mrf.mxu0
    %v1800 = vadd.f32 %v1674, %v1799
    %v1801 = vpop.f32.mrf.mxu0
    %v1802 = vadd.f32 %v1679, %v1801
    %1803 = vmatmul.bf16.gmra.mxu0 %v1760
    %v1804 = vpop.f32.mrf.mxu0
    %v1805 = vadd.f32 %v1684, %v1804
    %v1806 = vpop.f32.mrf.mxu0
    %v1807 = vadd.f32 %v1689, %v1806
    %1808 = vmatmul.bf16.gmra.mxu0 %v1763
    %v1809 = vpop.f32.mrf.mxu0
    %v1810 = vadd.f32 %v1694, %v1809
    %v1811 = vpop.f32.mrf.mxu0
    %v1812 = vadd.f32 %v1699, %v1811
    %1813 = vdwg.mxu0
    %v1814 = vmax.f32 %v1795, 0.0
    %v1815 = vmax.f32 %v1797, 0.0
    %v1816 = vmax.f32 %v1800, 0.0
    %v1817 = vmax.f32 %v1802, 0.0
    %v1818 = vmax.f32 %v1805, 0.0
    %v1819 = vmax.f32 %v1807, 0.0
    %v1820 = vmax.f32 %v1810, 0.0
    %v1821 = vmax.f32 %v1812, 0.0
    %v1822 = vsel %vm371, %v1814, -inf
    %v1823 = vrot.slane %v1822, 4
    %v1824 = vmax.f32 %v1822, %v1823
    %v1825 = vrot.slane %v1824, 2
    %v1826 = vmax.f32 %v1824, %v1825
    %v1827 = vrot.slane %v1826, 1
    %v1828 = vmax.f32 %v1826, %v1827
    %v1829 = vsel %vm371, %v1815, -inf
    %v1830 = vrot.slane %v1829, 4
    %v1831 = vmax.f32 %v1829, %v1830
    %v1832 = vrot.slane %v1831, 2
    %v1833 = vmax.f32 %v1831, %v1832
    %v1834 = vrot.slane %v1833, 1
    %v1835 = vmax.f32 %v1833, %v1834
    %v1836 = vsel %vm371, %v1816, -inf
    %v1837 = vrot.slane %v1836, 4
    %v1838 = vmax.f32 %v1836, %v1837
    %v1839 = vrot.slane %v1838, 2
    %v1840 = vmax.f32 %v1838, %v1839
    %v1841 = vrot.slane %v1840, 1
    %v1842 = vmax.f32 %v1840, %v1841
    %v1843 = vsel %vm371, %v1817, -inf
    %v1844 = vrot.slane %v1843, 4
    %v1845 = vmax.f32 %v1843, %v1844
    %v1846 = vrot.slane %v1845, 2
    %v1847 = vmax.f32 %v1845, %v1846
    %v1848 = vrot.slane %v1847, 1
    %v1849 = vmax.f32 %v1847, %v1848
    %v1850 = vsel %vm371, %v1818, -inf
    %v1851 = vrot.slane %v1850, 4
    %v1852 = vmax.f32 %v1850, %v1851
    %v1853 = vrot.slane %v1852, 2
    %v1854 = vmax.f32 %v1852, %v1853
    %v1855 = vrot.slane %v1854, 1
    %v1856 = vmax.f32 %v1854, %v1855
    %v1857 = vsel %vm371, %v1819, -inf
    %v1858 = vrot.slane %v1857, 4
    %v1859 = vmax.f32 %v1857, %v1858
    %v1860 = vrot.slane %v1859, 2
    %v1861 = vmax.f32 %v1859, %v1860
    %v1862 = vrot.slane %v1861, 1
    %v1863 = vmax.f32 %v1861, %v1862
    %v1864 = vsel %vm371, %v1820, -inf
    %v1865 = vrot.slane %v1864, 4
    %v1866 = vmax.f32 %v1864, %v1865
    %v1867 = vrot.slane %v1866, 2
    %v1868 = vmax.f32 %v1866, %v1867
    %v1869 = vrot.slane %v1868, 1
    %v1870 = vmax.f32 %v1868, %v1869
    %v1871 = vsel %vm371, %v1821, -inf
    %v1872 = vrot.slane %v1871, 4
    %v1873 = vmax.f32 %v1871, %v1872
    %v1874 = vrot.slane %v1873, 2
    %v1875 = vmax.f32 %v1873, %v1874
    %v1876 = vrot.slane %v1875, 1
    %v1877 = vmax.f32 %v1875, %v1876
    %v1878 = vpack.c.bf16 %v1828, %v1828
    %v1879 = vpack.c.bf16 %v1835, %v1835
    %v1880 = vpack.c.bf16 %v1842, %v1842
    %v1881 = vpack.c.bf16 %v1849, %v1849
    %v1882 = vpack.c.bf16 %v1856, %v1856
    %v1883 = vpack.c.bf16 %v1863, %v1863
    %v1884 = vpack.c.bf16 %v1870, %v1870
    %v1885 = vpack.c.bf16 %v1877, %v1877
    %v1887 = vperm.slane %v499, 0
    %v1897 = vunpack.c.l.b16 %v1878
    %v1898 = vunpack.c.l.b16 %v1879
    %v1899 = vunpack.c.l.b16 %v1880
    %v1900 = vunpack.c.l.b16 %v1881
    %v1901 = vunpack.c.l.b16 %v1882
    %v1902 = vunpack.c.l.b16 %v1883
    %v1903 = vunpack.c.l.b16 %v1884
    %v1904 = vunpack.c.l.b16 %v1885
    %vm1905 = vcmask 1041409
    %v1906 = vsel %vm1905, %v1898, %v1897
    %vm1907 = vcmask 1042434
    %v1908 = vsel %vm1907, %v1899, %v1906
    %vm1909 = vcmask 1043459
    %v1910 = vsel %vm1909, %v1900, %v1908
    %vm1911 = vcmask 1044484
    %v1912 = vsel %vm1911, %v1901, %v1910
    %vm1913 = vcmask 1045509
    %v1914 = vsel %vm1913, %v1902, %v1912
    %vm1915 = vcmask 1046534
    %v1916 = vsel %vm1915, %v1903, %v1914
    %vm1917 = vcmask 1047559
    %v1918 = vsel %vm1917, %v1904, %v1916
    %v1919 = vpack.c.b16 %v1918, %v1918
    %v1924 = vunpack.c.l.b16 %v495
    %v1925 = vunpack.c.l.b16 %v496
    %v1926 = vunpack.c.l.b16 %v497
    %v1927 = vunpack.c.l.b16 %v498
    %v1928 = vpack.c.b16 %v1925, %v1924
    %v1929 = vpack.c.b16 %v1927, %v1926
    %v1933 = vsel %vm371, %v1919, 0
    %1935 = vmatpush.bf16.msra.mxu0 0
    %1936 = vmatpush.bf16.msra.mxu0 0
    %1937 = vmatpush.bf16.msra.mxu0 0
    %1938 = vmatpush.bf16.msra.mxu0 0
    %1939 = vmatpush.bf16.msra.mxu0 0
    %1940 = vmatpush.bf16.msra.mxu0 0
    %1941 = vmatpush.bf16.msra.mxu0 %v1929
    %1942 = vmatpush.bf16.msra.mxu0 %v1928
    %1943 = vmatmul.bf16.gmra.mxu0 %v1933
    %v1944 = vpop.f32.mrf.mxu0
    %v1945 = vadd.f32 %v1887, %v1944
    %v1946 = vpop.f32.mrf.mxu0
    %1947 = vdwg.mxu0
    %v1948 = vsub.f32 %v428, %v1775
    %v1949 = vsub.f32 %v430, %v1777
    %v1950 = vsub.f32 %v433, %v1780
    %v1951 = vsub.f32 %v435, %v1782
    %v1952 = vsub.f32 %v438, %v1785
    %v1953 = vsub.f32 %v440, %v1787
    %v1954 = vsub.f32 %v443, %v1790
    %v1955 = vsub.f32 %v445, %v1792
    %v1956 = vadd.f32 %v1945, 0.0
    %v1965 = vrot.slane %v1948, 7
    %v1966 = vrot.slane %v1949, 7
    %v1967 = vsel %vm208, %v1965, %v1966
    %v1968 = vrot.slane %v1950, 7
    %v1969 = vsel %vm208, %v1966, %v1968
    %v1970 = vrot.slane %v1951, 7
    %v1971 = vsel %vm208, %v1968, %v1970
    %v1972 = vrot.slane %v1952, 7
    %v1973 = vsel %vm208, %v1970, %v1972
    %v1974 = vrot.slane %v1953, 7
    %v1975 = vsel %vm208, %v1972, %v1974
    %v1976 = vrot.slane %v1954, 7
    %v1977 = vsel %vm208, %v1974, %v1976
    %v1978 = vrot.slane %v1955, 7
    %v1979 = vsel %vm208, %v1976, %v1978
    %v1988 = vsel %vm208, 0.0, %v1965
    %v1989 = vsel %vm241, 0.0, %v1988
    %v1990 = vsel %vm242, 0.0, %v1967
    %v1991 = vsel %vm243, 0.0, %v1969
    %v1992 = vsel %vm244, 0.0, %v1971
    %v1993 = vsel %vm245, 0.0, %v1973
    %v1994 = vsel %vm246, 0.0, %v1975
    %v1995 = vsel %vm247, 0.0, %v1977
    %v1996 = vsel %vm248, 0.0, %v1979
    %v1997 = vrot.slane %v1948, 1
    %v1998 = vrot.slane %v1949, 1
    %v1999 = vsel %vm257, %v1997, %v1998
    %v2000 = vrot.slane %v1950, 1
    %v2001 = vsel %vm257, %v1998, %v2000
    %v2002 = vrot.slane %v1951, 1
    %v2003 = vsel %vm257, %v2000, %v2002
    %v2004 = vrot.slane %v1952, 1
    %v2005 = vsel %vm257, %v2002, %v2004
    %v2006 = vrot.slane %v1953, 1
    %v2007 = vsel %vm257, %v2004, %v2006
    %v2008 = vrot.slane %v1954, 1
    %v2009 = vsel %vm257, %v2006, %v2008
    %v2010 = vrot.slane %v1955, 1
    %v2011 = vsel %vm257, %v2008, %v2010
    %v2020 = vsel %vm257, %v2010, 0.0
    %v2021 = vsel %vm290, 0.0, %v1999
    %v2022 = vsel %vm291, 0.0, %v2001
    %v2023 = vsel %vm292, 0.0, %v2003
    %v2024 = vsel %vm293, 0.0, %v2005
    %v2025 = vsel %vm294, 0.0, %v2007
    %v2026 = vsel %vm295, 0.0, %v2009
    %v2027 = vsel %vm296, 0.0, %v2011
    %v2028 = vsel %vm297, 0.0, %v2020
    %2029 = vrot.lane.b32.xlu0 %v1948, 32
    %v2030 = vpop.permute.xlu0 %2029
    %2031 = vrot.lane.b32.xlu0 %v1949, 32
    %v2032 = vpop.permute.xlu0 %2031
    %2033 = vrot.lane.b32.xlu0 %v1950, 32
    %v2034 = vpop.permute.xlu0 %2033
    %2035 = vrot.lane.b32.xlu0 %v1951, 32
    %v2036 = vpop.permute.xlu0 %2035
    %2037 = vrot.lane.b32.xlu0 %v1952, 32
    %v2038 = vpop.permute.xlu0 %2037
    %2039 = vrot.lane.b32.xlu0 %v1953, 32
    %v2040 = vpop.permute.xlu0 %2039
    %2041 = vrot.lane.b32.xlu0 %v1954, 32
    %v2042 = vpop.permute.xlu0 %2041
    %2043 = vrot.lane.b32.xlu0 %v1955, 32
    %v2044 = vpop.permute.xlu0 %2043
    %2061 = vrot.lane.b32.xlu0 %v2021, 64
    %v2062 = vpop.permute.xlu0 %2061
    %2063 = vrot.lane.b32.xlu0 %v2022, 64
    %v2064 = vpop.permute.xlu0 %2063
    %2065 = vrot.lane.b32.xlu0 %v2023, 64
    %v2066 = vpop.permute.xlu0 %2065
    %2067 = vrot.lane.b32.xlu0 %v2024, 64
    %v2068 = vpop.permute.xlu0 %2067
    %2069 = vrot.lane.b32.xlu0 %v2025, 64
    %v2070 = vpop.permute.xlu0 %2069
    %2071 = vrot.lane.b32.xlu0 %v2026, 64
    %v2072 = vpop.permute.xlu0 %2071
    %2073 = vrot.lane.b32.xlu0 %v2027, 64
    %v2074 = vpop.permute.xlu0 %2073
    %2075 = vrot.lane.b32.xlu0 %v2028, 64
    %v2076 = vpop.permute.xlu0 %2075
    %v2085 = vsel %vm371, %v1989, %v2030
    %v2086 = vsel %vm371, %v1990, %v2032
    %v2087 = vsel %vm371, %v1991, %v2034
    %v2088 = vsel %vm371, %v1992, %v2036
    %v2089 = vsel %vm371, %v1993, %v2038
    %v2090 = vsel %vm371, %v1994, %v2040
    %v2091 = vsel %vm371, %v1995, %v2042
    %v2092 = vsel %vm371, %v1996, %v2044
    %v2093 = vsel %vm649, %v2085, %v2062
    %v2094 = vsel %vm649, %v2086, %v2064
    %v2095 = vsel %vm649, %v2087, %v2066
    %v2096 = vsel %vm649, %v2088, %v2068
    %v2097 = vsel %vm649, %v2089, %v2070
    %v2098 = vsel %vm649, %v2090, %v2072
    %v2099 = vsel %vm649, %v2091, %v2074
    %v2100 = vsel %vm649, %v2092, %v2076
    %v2101 = vpack.c.bf16 %v2094, %v2093
    %v2102 = vpack.c.bf16 %v2096, %v2095
    %v2103 = vpack.c.bf16 %v2098, %v2097
    %v2104 = vpack.c.bf16 %v2100, %v2099
    %v2106 = vsel %vm701, %v2101, 0
    %v2109 = vsel %vm701, %v2102, 0
    %v2112 = vsel %vm701, %v2103, 0
    %v2115 = vsel %vm701, %v2104, 0
    %2117 = vmatpush.bf16.msra.mxu0 0
    %2118 = vmatpush.bf16.msra.mxu0 0
    %2119 = vmatpush.bf16.msra.mxu0 %v694
    %2120 = vmatpush.bf16.msra.mxu0 %v693
    %2121 = vmatpush.bf16.msra.mxu0 %v692
    %2122 = vmatpush.bf16.msra.mxu0 %v691
    %2123 = vmatpush.bf16.msra.mxu0 %v690
    %2124 = vmatpush.bf16.msra.mxu0 %v689
    %2125 = vmatmul.bf16.gmra.mxu0 %v2106
    %v2126 = vpop.f32.mrf.mxu0
    %v2127 = vadd.f32 %v663, %v2126
    %v2128 = vpop.f32.mrf.mxu0
    %v2129 = vadd.f32 %v663, %v2128
    %2130 = vmatmul.bf16.gmra.mxu0 %v2109
    %v2131 = vpop.f32.mrf.mxu0
    %v2132 = vadd.f32 %v663, %v2131
    %v2133 = vpop.f32.mrf.mxu0
    %v2134 = vadd.f32 %v663, %v2133
    %2135 = vmatmul.bf16.gmra.mxu0 %v2112
    %v2136 = vpop.f32.mrf.mxu0
    %v2137 = vadd.f32 %v663, %v2136
    %v2138 = vpop.f32.mrf.mxu0
    %v2139 = vadd.f32 %v663, %v2138
    %2140 = vmatmul.bf16.gmra.mxu0 %v2115
    %v2141 = vpop.f32.mrf.mxu0
    %v2142 = vadd.f32 %v663, %v2141
    %v2143 = vpop.f32.mrf.mxu0
    %v2144 = vadd.f32 %v663, %v2143
    %2145 = vdwg.mxu0
    %v2146 = vmax.f32 %v2127, 0.0
    %v2147 = vmax.f32 %v2129, 0.0
    %v2148 = vmax.f32 %v2132, 0.0
    %v2149 = vmax.f32 %v2134, 0.0
    %v2150 = vmax.f32 %v2137, 0.0
    %v2151 = vmax.f32 %v2139, 0.0
    %v2152 = vmax.f32 %v2142, 0.0
    %v2153 = vmax.f32 %v2144, 0.0
    %v2162 = vrot.slane %v2146, 7
    %v2163 = vrot.slane %v2147, 7
    %v2164 = vsel %vm208, %v2162, %v2163
    %v2165 = vrot.slane %v2148, 7
    %v2166 = vsel %vm208, %v2163, %v2165
    %v2167 = vrot.slane %v2149, 7
    %v2168 = vsel %vm208, %v2165, %v2167
    %v2169 = vrot.slane %v2150, 7
    %v2170 = vsel %vm208, %v2167, %v2169
    %v2171 = vrot.slane %v2151, 7
    %v2172 = vsel %vm208, %v2169, %v2171
    %v2173 = vrot.slane %v2152, 7
    %v2174 = vsel %vm208, %v2171, %v2173
    %v2175 = vrot.slane %v2153, 7
    %v2176 = vsel %vm208, %v2173, %v2175
    %v2185 = vsel %vm208, 0.0, %v2162
    %v2186 = vsel %vm241, 0.0, %v2185
    %v2187 = vsel %vm242, 0.0, %v2164
    %v2188 = vsel %vm243, 0.0, %v2166
    %v2189 = vsel %vm244, 0.0, %v2168
    %v2190 = vsel %vm245, 0.0, %v2170
    %v2191 = vsel %vm246, 0.0, %v2172
    %v2192 = vsel %vm247, 0.0, %v2174
    %v2193 = vsel %vm248, 0.0, %v2176
    %v2194 = vrot.slane %v2146, 1
    %v2195 = vrot.slane %v2147, 1
    %v2196 = vsel %vm257, %v2194, %v2195
    %v2197 = vrot.slane %v2148, 1
    %v2198 = vsel %vm257, %v2195, %v2197
    %v2199 = vrot.slane %v2149, 1
    %v2200 = vsel %vm257, %v2197, %v2199
    %v2201 = vrot.slane %v2150, 1
    %v2202 = vsel %vm257, %v2199, %v2201
    %v2203 = vrot.slane %v2151, 1
    %v2204 = vsel %vm257, %v2201, %v2203
    %v2205 = vrot.slane %v2152, 1
    %v2206 = vsel %vm257, %v2203, %v2205
    %v2207 = vrot.slane %v2153, 1
    %v2208 = vsel %vm257, %v2205, %v2207
    %v2217 = vsel %vm257, %v2207, 0.0
    %v2218 = vsel %vm290, 0.0, %v2196
    %v2219 = vsel %vm291, 0.0, %v2198
    %v2220 = vsel %vm292, 0.0, %v2200
    %v2221 = vsel %vm293, 0.0, %v2202
    %v2222 = vsel %vm294, 0.0, %v2204
    %v2223 = vsel %vm295, 0.0, %v2206
    %v2224 = vsel %vm296, 0.0, %v2208
    %v2225 = vsel %vm297, 0.0, %v2217
    %2226 = vrot.lane.b32.xlu0 %v2146, 32
    %v2227 = vpop.permute.xlu0 %2226
    %2228 = vrot.lane.b32.xlu0 %v2147, 32
    %v2229 = vpop.permute.xlu0 %2228
    %2230 = vrot.lane.b32.xlu0 %v2148, 32
    %v2231 = vpop.permute.xlu0 %2230
    %2232 = vrot.lane.b32.xlu0 %v2149, 32
    %v2233 = vpop.permute.xlu0 %2232
    %2234 = vrot.lane.b32.xlu0 %v2150, 32
    %v2235 = vpop.permute.xlu0 %2234
    %2236 = vrot.lane.b32.xlu0 %v2151, 32
    %v2237 = vpop.permute.xlu0 %2236
    %2238 = vrot.lane.b32.xlu0 %v2152, 32
    %v2239 = vpop.permute.xlu0 %2238
    %2240 = vrot.lane.b32.xlu0 %v2153, 32
    %v2241 = vpop.permute.xlu0 %2240
    %2258 = vrot.lane.b32.xlu0 %v2218, 64
    %v2259 = vpop.permute.xlu0 %2258
    %2260 = vrot.lane.b32.xlu0 %v2219, 64
    %v2261 = vpop.permute.xlu0 %2260
    %2262 = vrot.lane.b32.xlu0 %v2220, 64
    %v2263 = vpop.permute.xlu0 %2262
    %2264 = vrot.lane.b32.xlu0 %v2221, 64
    %v2265 = vpop.permute.xlu0 %2264
    %2266 = vrot.lane.b32.xlu0 %v2222, 64
    %v2267 = vpop.permute.xlu0 %2266
    %2268 = vrot.lane.b32.xlu0 %v2223, 64
    %v2269 = vpop.permute.xlu0 %2268
    %2270 = vrot.lane.b32.xlu0 %v2224, 64
    %v2271 = vpop.permute.xlu0 %2270
    %2272 = vrot.lane.b32.xlu0 %v2225, 64
    %v2273 = vpop.permute.xlu0 %2272
    %v2282 = vsel %vm371, %v2186, %v2227
    %v2283 = vsel %vm371, %v2187, %v2229
    %v2284 = vsel %vm371, %v2188, %v2231
    %v2285 = vsel %vm371, %v2189, %v2233
    %v2286 = vsel %vm371, %v2190, %v2235
    %v2287 = vsel %vm371, %v2191, %v2237
    %v2288 = vsel %vm371, %v2192, %v2239
    %v2289 = vsel %vm371, %v2193, %v2241
    %v2290 = vsel %vm649, %v2282, %v2259
    %v2291 = vsel %vm649, %v2283, %v2261
    %v2292 = vsel %vm649, %v2284, %v2263
    %v2293 = vsel %vm649, %v2285, %v2265
    %v2294 = vsel %vm649, %v2286, %v2267
    %v2295 = vsel %vm649, %v2287, %v2269
    %v2296 = vsel %vm649, %v2288, %v2271
    %v2297 = vsel %vm649, %v2289, %v2273
    %v2298 = vpack.c.bf16 %v2291, %v2290
    %v2299 = vpack.c.bf16 %v2293, %v2292
    %v2300 = vpack.c.bf16 %v2295, %v2294
    %v2301 = vpack.c.bf16 %v2297, %v2296
    %v2303 = vsel %vm701, %v2298, 0
    %v2306 = vsel %vm701, %v2299, 0
    %v2309 = vsel %vm701, %v2300, 0
    %v2312 = vsel %vm701, %v2301, 0
    %2314 = vmatpush.bf16.msra.mxu0 0
    %2315 = vmatpush.bf16.msra.mxu0 0
    %2316 = vmatpush.bf16.msra.mxu0 %v946
    %2317 = vmatpush.bf16.msra.mxu0 %v945
    %2318 = vmatpush.bf16.msra.mxu0 %v944
    %2319 = vmatpush.bf16.msra.mxu0 %v943
    %2320 = vmatpush.bf16.msra.mxu0 %v942
    %2321 = vmatpush.bf16.msra.mxu0 %v941
    %2322 = vmatmul.bf16.gmra.mxu0 %v2303
    %v2323 = vpop.f32.mrf.mxu0
    %v2324 = vadd.f32 %v915, %v2323
    %v2325 = vpop.f32.mrf.mxu0
    %v2326 = vadd.f32 %v915, %v2325
    %2327 = vmatmul.bf16.gmra.mxu0 %v2306
    %v2328 = vpop.f32.mrf.mxu0
    %v2329 = vadd.f32 %v915, %v2328
    %v2330 = vpop.f32.mrf.mxu0
    %v2331 = vadd.f32 %v915, %v2330
    %2332 = vmatmul.bf16.gmra.mxu0 %v2309
    %v2333 = vpop.f32.mrf.mxu0
    %v2334 = vadd.f32 %v915, %v2333
    %v2335 = vpop.f32.mrf.mxu0
    %v2336 = vadd.f32 %v915, %v2335
    %2337 = vmatmul.bf16.gmra.mxu0 %v2312
    %v2338 = vpop.f32.mrf.mxu0
    %v2339 = vadd.f32 %v915, %v2338
    %v2340 = vpop.f32.mrf.mxu0
    %v2341 = vadd.f32 %v915, %v2340
    %2342 = vdwg.mxu0
    %v2343 = vmax.f32 %v2324, 0.0
    %v2344 = vmax.f32 %v2326, 0.0
    %v2345 = vmax.f32 %v2329, 0.0
    %v2346 = vmax.f32 %v2331, 0.0
    %v2347 = vmax.f32 %v2334, 0.0
    %v2348 = vmax.f32 %v2336, 0.0
    %v2349 = vmax.f32 %v2339, 0.0
    %v2350 = vmax.f32 %v2341, 0.0
    %v2359 = vrot.slane %v2343, 7
    %v2360 = vrot.slane %v2344, 7
    %v2361 = vsel %vm208, %v2359, %v2360
    %v2362 = vrot.slane %v2345, 7
    %v2363 = vsel %vm208, %v2360, %v2362
    %v2364 = vrot.slane %v2346, 7
    %v2365 = vsel %vm208, %v2362, %v2364
    %v2366 = vrot.slane %v2347, 7
    %v2367 = vsel %vm208, %v2364, %v2366
    %v2368 = vrot.slane %v2348, 7
    %v2369 = vsel %vm208, %v2366, %v2368
    %v2370 = vrot.slane %v2349, 7
    %v2371 = vsel %vm208, %v2368, %v2370
    %v2372 = vrot.slane %v2350, 7
    %v2373 = vsel %vm208, %v2370, %v2372
    %v2382 = vsel %vm208, 0.0, %v2359
    %v2383 = vsel %vm241, 0.0, %v2382
    %v2384 = vsel %vm242, 0.0, %v2361
    %v2385 = vsel %vm243, 0.0, %v2363
    %v2386 = vsel %vm244, 0.0, %v2365
    %v2387 = vsel %vm245, 0.0, %v2367
    %v2388 = vsel %vm246, 0.0, %v2369
    %v2389 = vsel %vm247, 0.0, %v2371
    %v2390 = vsel %vm248, 0.0, %v2373
    %v2391 = vrot.slane %v2343, 1
    %v2392 = vrot.slane %v2344, 1
    %v2393 = vsel %vm257, %v2391, %v2392
    %v2394 = vrot.slane %v2345, 1
    %v2395 = vsel %vm257, %v2392, %v2394
    %v2396 = vrot.slane %v2346, 1
    %v2397 = vsel %vm257, %v2394, %v2396
    %v2398 = vrot.slane %v2347, 1
    %v2399 = vsel %vm257, %v2396, %v2398
    %v2400 = vrot.slane %v2348, 1
    %v2401 = vsel %vm257, %v2398, %v2400
    %v2402 = vrot.slane %v2349, 1
    %v2403 = vsel %vm257, %v2400, %v2402
    %v2404 = vrot.slane %v2350, 1
    %v2405 = vsel %vm257, %v2402, %v2404
    %v2414 = vsel %vm257, %v2404, 0.0
    %v2415 = vsel %vm290, 0.0, %v2393
    %v2416 = vsel %vm291, 0.0, %v2395
    %v2417 = vsel %vm292, 0.0, %v2397
    %v2418 = vsel %vm293, 0.0, %v2399
    %v2419 = vsel %vm294, 0.0, %v2401
    %v2420 = vsel %vm295, 0.0, %v2403
    %v2421 = vsel %vm296, 0.0, %v2405
    %v2422 = vsel %vm297, 0.0, %v2414
    %2423 = vrot.lane.b32.xlu0 %v2343, 32
    %v2424 = vpop.permute.xlu0 %2423
    %2425 = vrot.lane.b32.xlu0 %v2344, 32
    %v2426 = vpop.permute.xlu0 %2425
    %2427 = vrot.lane.b32.xlu0 %v2345, 32
    %v2428 = vpop.permute.xlu0 %2427
    %2429 = vrot.lane.b32.xlu0 %v2346, 32
    %v2430 = vpop.permute.xlu0 %2429
    %2431 = vrot.lane.b32.xlu0 %v2347, 32
    %v2432 = vpop.permute.xlu0 %2431
    %2433 = vrot.lane.b32.xlu0 %v2348, 32
    %v2434 = vpop.permute.xlu0 %2433
    %2435 = vrot.lane.b32.xlu0 %v2349, 32
    %v2436 = vpop.permute.xlu0 %2435
    %2437 = vrot.lane.b32.xlu0 %v2350, 32
    %v2438 = vpop.permute.xlu0 %2437
    %2455 = vrot.lane.b32.xlu0 %v2415, 64
    %v2456 = vpop.permute.xlu0 %2455
    %2457 = vrot.lane.b32.xlu0 %v2416, 64
    %v2458 = vpop.permute.xlu0 %2457
    %2459 = vrot.lane.b32.xlu0 %v2417, 64
    %v2460 = vpop.permute.xlu0 %2459
    %2461 = vrot.lane.b32.xlu0 %v2418, 64
    %v2462 = vpop.permute.xlu0 %2461
    %2463 = vrot.lane.b32.xlu0 %v2419, 64
    %v2464 = vpop.permute.xlu0 %2463
    %2465 = vrot.lane.b32.xlu0 %v2420, 64
    %v2466 = vpop.permute.xlu0 %2465
    %2467 = vrot.lane.b32.xlu0 %v2421, 64
    %v2468 = vpop.permute.xlu0 %2467
    %2469 = vrot.lane.b32.xlu0 %v2422, 64
    %v2470 = vpop.permute.xlu0 %2469
    %v2479 = vsel %vm371, %v2383, %v2424
    %v2480 = vsel %vm371, %v2384, %v2426
    %v2481 = vsel %vm371, %v2385, %v2428
    %v2482 = vsel %vm371, %v2386, %v2430
    %v2483 = vsel %vm371, %v2387, %v2432
    %v2484 = vsel %vm371, %v2388, %v2434
    %v2485 = vsel %vm371, %v2389, %v2436
    %v2486 = vsel %vm371, %v2390, %v2438
    %v2487 = vsel %vm649, %v2479, %v2456
    %v2488 = vsel %vm649, %v2480, %v2458
    %v2489 = vsel %vm649, %v2481, %v2460
    %v2490 = vsel %vm649, %v2482, %v2462
    %v2491 = vsel %vm649, %v2483, %v2464
    %v2492 = vsel %vm649, %v2484, %v2466
    %v2493 = vsel %vm649, %v2485, %v2468
    %v2494 = vsel %vm649, %v2486, %v2470
    %v2495 = vpack.c.bf16 %v2488, %v2487
    %v2496 = vpack.c.bf16 %v2490, %v2489
    %v2497 = vpack.c.bf16 %v2492, %v2491
    %v2498 = vpack.c.bf16 %v2494, %v2493
    %v2500 = vsel %vm701, %v2495, 0
    %v2503 = vsel %vm701, %v2496, 0
    %v2506 = vsel %vm701, %v2497, 0
    %v2509 = vsel %vm701, %v2498, 0
    %2511 = vmatpush.bf16.msra.mxu0 0
    %2512 = vmatpush.bf16.msra.mxu0 0
    %2513 = vmatpush.bf16.msra.mxu0 %v1197
    %2514 = vmatpush.bf16.msra.mxu0 %v1196
    %2515 = vmatpush.bf16.msra.mxu0 %v1195
    %2516 = vmatpush.bf16.msra.mxu0 %v1194
    %2517 = vmatpush.bf16.msra.mxu0 %v1193
    %2518 = vmatpush.bf16.msra.mxu0 %v1192
    %2519 = vmatmul.bf16.gmra.mxu0 %v2500
    %v2520 = vpop.f32.mrf.mxu0
    %v2521 = vadd.f32 %v1166, %v2520
    %v2522 = vpop.f32.mrf.mxu0
    %v2523 = vadd.f32 %v1166, %v2522
    %2524 = vmatmul.bf16.gmra.mxu0 %v2503
    %v2525 = vpop.f32.mrf.mxu0
    %v2526 = vadd.f32 %v1166, %v2525
    %v2527 = vpop.f32.mrf.mxu0
    %v2528 = vadd.f32 %v1166, %v2527
    %2529 = vmatmul.bf16.gmra.mxu0 %v2506
    %v2530 = vpop.f32.mrf.mxu0
    %v2531 = vadd.f32 %v1166, %v2530
    %v2532 = vpop.f32.mrf.mxu0
    %v2533 = vadd.f32 %v1166, %v2532
    %2534 = vmatmul.bf16.gmra.mxu0 %v2509
    %v2535 = vpop.f32.mrf.mxu0
    %v2536 = vadd.f32 %v1166, %v2535
    %v2537 = vpop.f32.mrf.mxu0
    %v2538 = vadd.f32 %v1166, %v2537
    %2539 = vdwg.mxu0
    %v2540 = vmax.f32 %v2521, 0.0
    %v2541 = vmax.f32 %v2523, 0.0
    %v2542 = vmax.f32 %v2526, 0.0
    %v2543 = vmax.f32 %v2528, 0.0
    %v2544 = vmax.f32 %v2531, 0.0
    %v2545 = vmax.f32 %v2533, 0.0
    %v2546 = vmax.f32 %v2536, 0.0
    %v2547 = vmax.f32 %v2538, 0.0
    %v2556 = vrot.slane %v2540, 7
    %v2557 = vrot.slane %v2541, 7
    %v2558 = vsel %vm208, %v2556, %v2557
    %v2559 = vrot.slane %v2542, 7
    %v2560 = vsel %vm208, %v2557, %v2559
    %v2561 = vrot.slane %v2543, 7
    %v2562 = vsel %vm208, %v2559, %v2561
    %v2563 = vrot.slane %v2544, 7
    %v2564 = vsel %vm208, %v2561, %v2563
    %v2565 = vrot.slane %v2545, 7
    %v2566 = vsel %vm208, %v2563, %v2565
    %v2567 = vrot.slane %v2546, 7
    %v2568 = vsel %vm208, %v2565, %v2567
    %v2569 = vrot.slane %v2547, 7
    %v2570 = vsel %vm208, %v2567, %v2569
    %v2579 = vsel %vm208, 0.0, %v2556
    %v2580 = vsel %vm241, 0.0, %v2579
    %v2581 = vsel %vm242, 0.0, %v2558
    %v2582 = vsel %vm243, 0.0, %v2560
    %v2583 = vsel %vm244, 0.0, %v2562
    %v2584 = vsel %vm245, 0.0, %v2564
    %v2585 = vsel %vm246, 0.0, %v2566
    %v2586 = vsel %vm247, 0.0, %v2568
    %v2587 = vsel %vm248, 0.0, %v2570
    %v2588 = vrot.slane %v2540, 1
    %v2589 = vrot.slane %v2541, 1
    %v2590 = vsel %vm257, %v2588, %v2589
    %v2591 = vrot.slane %v2542, 1
    %v2592 = vsel %vm257, %v2589, %v2591
    %v2593 = vrot.slane %v2543, 1
    %v2594 = vsel %vm257, %v2591, %v2593
    %v2595 = vrot.slane %v2544, 1
    %v2596 = vsel %vm257, %v2593, %v2595
    %v2597 = vrot.slane %v2545, 1
    %v2598 = vsel %vm257, %v2595, %v2597
    %v2599 = vrot.slane %v2546, 1
    %v2600 = vsel %vm257, %v2597, %v2599
    %v2601 = vrot.slane %v2547, 1
    %v2602 = vsel %vm257, %v2599, %v2601
    %v2611 = vsel %vm257, %v2601, 0.0
    %v2612 = vsel %vm290, 0.0, %v2590
    %v2613 = vsel %vm291, 0.0, %v2592
    %v2614 = vsel %vm292, 0.0, %v2594
    %v2615 = vsel %vm293, 0.0, %v2596
    %v2616 = vsel %vm294, 0.0, %v2598
    %v2617 = vsel %vm295, 0.0, %v2600
    %v2618 = vsel %vm296, 0.0, %v2602
    %v2619 = vsel %vm297, 0.0, %v2611
    %2620 = vrot.lane.b32.xlu0 %v2540, 32
    %v2621 = vpop.permute.xlu0 %2620
    %2622 = vrot.lane.b32.xlu0 %v2541, 32
    %v2623 = vpop.permute.xlu0 %2622
    %2624 = vrot.lane.b32.xlu0 %v2542, 32
    %v2625 = vpop.permute.xlu0 %2624
    %2626 = vrot.lane.b32.xlu0 %v2543, 32
    %v2627 = vpop.permute.xlu0 %2626
    %2628 = vrot.lane.b32.xlu0 %v2544, 32
    %v2629 = vpop.permute.xlu0 %2628
    %2630 = vrot.lane.b32.xlu0 %v2545, 32
    %v2631 = vpop.permute.xlu0 %2630
    %2632 = vrot.lane.b32.xlu0 %v2546, 32
    %v2633 = vpop.permute.xlu0 %2632
    %2634 = vrot.lane.b32.xlu0 %v2547, 32
    %v2635 = vpop.permute.xlu0 %2634
    %2652 = vrot.lane.b32.xlu0 %v2612, 64
    %v2653 = vpop.permute.xlu0 %2652
    %2654 = vrot.lane.b32.xlu0 %v2613, 64
    %v2655 = vpop.permute.xlu0 %2654
    %2656 = vrot.lane.b32.xlu0 %v2614, 64
    %v2657 = vpop.permute.xlu0 %2656
    %2658 = vrot.lane.b32.xlu0 %v2615, 64
    %v2659 = vpop.permute.xlu0 %2658
    %2660 = vrot.lane.b32.xlu0 %v2616, 64
    %v2661 = vpop.permute.xlu0 %2660
    %2662 = vrot.lane.b32.xlu0 %v2617, 64
    %v2663 = vpop.permute.xlu0 %2662
    %2664 = vrot.lane.b32.xlu0 %v2618, 64
    %v2665 = vpop.permute.xlu0 %2664
    %2666 = vrot.lane.b32.xlu0 %v2619, 64
    %v2667 = vpop.permute.xlu0 %2666
    %v2676 = vsel %vm371, %v2580, %v2621
    %v2677 = vsel %vm371, %v2581, %v2623
    %v2678 = vsel %vm371, %v2582, %v2625
    %v2679 = vsel %vm371, %v2583, %v2627
    %v2680 = vsel %vm371, %v2584, %v2629
    %v2681 = vsel %vm371, %v2585, %v2631
    %v2682 = vsel %vm371, %v2586, %v2633
    %v2683 = vsel %vm371, %v2587, %v2635
    %v2684 = vsel %vm649, %v2676, %v2653
    %v2685 = vsel %vm649, %v2677, %v2655
    %v2686 = vsel %vm649, %v2678, %v2657
    %v2687 = vsel %vm649, %v2679, %v2659
    %v2688 = vsel %vm649, %v2680, %v2661
    %v2689 = vsel %vm649, %v2681, %v2663
    %v2690 = vsel %vm649, %v2682, %v2665
    %v2691 = vsel %vm649, %v2683, %v2667
    %v2692 = vpack.c.bf16 %v2685, %v2684
    %v2693 = vpack.c.bf16 %v2687, %v2686
    %v2694 = vpack.c.bf16 %v2689, %v2688
    %v2695 = vpack.c.bf16 %v2691, %v2690
    %v2697 = vsel %vm701, %v2692, 0
    %v2700 = vsel %vm701, %v2693, 0
    %v2703 = vsel %vm701, %v2694, 0
    %v2706 = vsel %vm701, %v2695, 0
    %2708 = vmatpush.bf16.msra.mxu0 0
    %2709 = vmatpush.bf16.msra.mxu0 0
    %2710 = vmatpush.bf16.msra.mxu0 %v1448
    %2711 = vmatpush.bf16.msra.mxu0 %v1447
    %2712 = vmatpush.bf16.msra.mxu0 %v1446
    %2713 = vmatpush.bf16.msra.mxu0 %v1445
    %2714 = vmatpush.bf16.msra.mxu0 %v1444
    %2715 = vmatpush.bf16.msra.mxu0 %v1443
    %2716 = vmatmul.bf16.gmra.mxu0 %v2697
    %v2717 = vpop.f32.mrf.mxu0
    %v2718 = vadd.f32 %v1417, %v2717
    %v2719 = vpop.f32.mrf.mxu0
    %v2720 = vadd.f32 %v1417, %v2719
    %2721 = vmatmul.bf16.gmra.mxu0 %v2700
    %v2722 = vpop.f32.mrf.mxu0
    %v2723 = vadd.f32 %v1417, %v2722
    %v2724 = vpop.f32.mrf.mxu0
    %v2725 = vadd.f32 %v1417, %v2724
    %2726 = vmatmul.bf16.gmra.mxu0 %v2703
    %v2727 = vpop.f32.mrf.mxu0
    %v2728 = vadd.f32 %v1417, %v2727
    %v2729 = vpop.f32.mrf.mxu0
    %v2730 = vadd.f32 %v1417, %v2729
    %2731 = vmatmul.bf16.gmra.mxu0 %v2706
    %v2732 = vpop.f32.mrf.mxu0
    %v2733 = vadd.f32 %v1417, %v2732
    %v2734 = vpop.f32.mrf.mxu0
    %v2735 = vadd.f32 %v1417, %v2734
    %2736 = vdwg.mxu0
    %v2737 = vmax.f32 %v2718, 0.0
    %v2738 = vmax.f32 %v2720, 0.0
    %v2739 = vmax.f32 %v2723, 0.0
    %v2740 = vmax.f32 %v2725, 0.0
    %v2741 = vmax.f32 %v2728, 0.0
    %v2742 = vmax.f32 %v2730, 0.0
    %v2743 = vmax.f32 %v2733, 0.0
    %v2744 = vmax.f32 %v2735, 0.0
    %v2745 = vpack.c.bf16 %v2738, %v2737
    %v2746 = vpack.c.bf16 %v2740, %v2739
    %v2747 = vpack.c.bf16 %v2742, %v2741
    %v2748 = vpack.c.bf16 %v2744, %v2743
    %2749 = vmatpush.bf16.msra.mxu0 0
    %2750 = vmatpush.bf16.msra.mxu0 0
    %2751 = vmatpush.bf16.msra.mxu0 0
    %2752 = vmatpush.bf16.msra.mxu0 0
    %2753 = vmatpush.bf16.msra.mxu0 %v2748
    %2754 = vmatpush.bf16.msra.mxu0 %v2747
    %2755 = vmatpush.bf16.msra.mxu0 %v2746
    %2756 = vmatpush.bf16.msra.mxu0 %v2745
    %2757 = vmatmul.bf16.gmra.mxu0 %v1569
    %v2758 = vpop.f32.mrf.mxu0
    %v2759 = vadd.f32 %v1511, %v2758
    %v2760 = vpop.f32.mrf.mxu0
    %v2761 = vadd.f32 %v1516, %v2760
    %2762 = vmatmul.bf16.gmra.mxu0 %v1572
    %v2763 = vpop.f32.mrf.mxu0
    %v2764 = vadd.f32 %v1521, %v2763
    %v2765 = vpop.f32.mrf.mxu0
    %v2766 = vadd.f32 %v1526, %v2765
    %2767 = vmatmul.bf16.gmra.mxu0 %v1575
    %v2768 = vpop.f32.mrf.mxu0
    %v2769 = vadd.f32 %v1531, %v2768
    %v2770 = vpop.f32.mrf.mxu0
    %v2771 = vadd.f32 %v1536, %v2770
    %2772 = vmatmul.bf16.gmra.mxu0 %v1578
    %v2773 = vpop.f32.mrf.mxu0
    %v2774 = vadd.f32 %v1541, %v2773
    %v2775 = vpop.f32.mrf.mxu0
    %v2776 = vadd.f32 %v1546, %v2775
    %2777 = vdwg.mxu0
    %v2778 = vmax.f32 %v2759, 0.0
    %v2779 = vmax.f32 %v2761, 0.0
    %v2780 = vmax.f32 %v2764, 0.0
    %v2781 = vmax.f32 %v2766, 0.0
    %v2782 = vmax.f32 %v2769, 0.0
    %v2783 = vmax.f32 %v2771, 0.0
    %v2784 = vmax.f32 %v2774, 0.0
    %v2785 = vmax.f32 %v2776, 0.0
    %v2786 = vpack.c.bf16 %v2779, %v2778
    %v2787 = vpack.c.bf16 %v2781, %v2780
    %v2788 = vpack.c.bf16 %v2783, %v2782
    %v2789 = vpack.c.bf16 %v2785, %v2784
    %2790 = vmatpush.bf16.msra.mxu0 0
    %2791 = vmatpush.bf16.msra.mxu0 0
    %2792 = vmatpush.bf16.msra.mxu0 0
    %2793 = vmatpush.bf16.msra.mxu0 0
    %2794 = vmatpush.bf16.msra.mxu0 %v2789
    %2795 = vmatpush.bf16.msra.mxu0 %v2788
    %2796 = vmatpush.bf16.msra.mxu0 %v2787
    %2797 = vmatpush.bf16.msra.mxu0 %v2786
    %2798 = vmatmul.bf16.gmra.mxu0 %v1742
    %v2799 = vpop.f32.mrf.mxu0
    %v2800 = vadd.f32 %v1624, %v2799
    %v2801 = vpop.f32.mrf.mxu0
    %v2802 = vadd.f32 %v1629, %v2801
    %2803 = vmatmul.bf16.gmra.mxu0 %v1745
    %v2804 = vpop.f32.mrf.mxu0
    %v2805 = vadd.f32 %v1634, %v2804
    %v2806 = vpop.f32.mrf.mxu0
    %v2807 = vadd.f32 %v1639, %v2806
    %2808 = vmatmul.bf16.gmra.mxu0 %v1748
    %v2809 = vpop.f32.mrf.mxu0
    %v2810 = vadd.f32 %v1644, %v2809
    %v2811 = vpop.f32.mrf.mxu0
    %v2812 = vadd.f32 %v1649, %v2811
    %2813 = vmatmul.bf16.gmra.mxu0 %v1751
    %v2814 = vpop.f32.mrf.mxu0
    %v2815 = vadd.f32 %v1654, %v2814
    %v2816 = vpop.f32.mrf.mxu0
    %v2817 = vadd.f32 %v1659, %v2816
    %2818 = vmatmul.bf16.gmra.mxu0 %v1754
    %v2819 = vpop.f32.mrf.mxu0
    %v2820 = vadd.f32 %v1664, %v2819
    %v2821 = vpop.f32.mrf.mxu0
    %v2822 = vadd.f32 %v1669, %v2821
    %2823 = vmatmul.bf16.gmra.mxu0 %v1757
    %v2824 = vpop.f32.mrf.mxu0
    %v2825 = vadd.f32 %v1674, %v2824
    %v2826 = vpop.f32.mrf.mxu0
    %v2827 = vadd.f32 %v1679, %v2826
    %2828 = vmatmul.bf16.gmra.mxu0 %v1760
    %v2829 = vpop.f32.mrf.mxu0
    %v2830 = vadd.f32 %v1684, %v2829
    %v2831 = vpop.f32.mrf.mxu0
    %v2832 = vadd.f32 %v1689, %v2831
    %2833 = vmatmul.bf16.gmra.mxu0 %v1763
    %v2834 = vpop.f32.mrf.mxu0
    %v2835 = vadd.f32 %v1694, %v2834
    %v2836 = vpop.f32.mrf.mxu0
    %v2837 = vadd.f32 %v1699, %v2836
    %2838 = vdwg.mxu0
    %v2839 = vmax.f32 %v2820, 0.0
    %v2840 = vmax.f32 %v2822, 0.0
    %v2841 = vmax.f32 %v2825, 0.0
    %v2842 = vmax.f32 %v2827, 0.0
    %v2843 = vmax.f32 %v2830, 0.0
    %v2844 = vmax.f32 %v2832, 0.0
    %v2845 = vmax.f32 %v2835, 0.0
    %v2846 = vmax.f32 %v2837, 0.0
    %v2847 = vsel %vm371, %v2839, -inf
    %v2848 = vrot.slane %v2847, 4
    %v2849 = vmax.f32 %v2847, %v2848
    %v2850 = vrot.slane %v2849, 2
    %v2851 = vmax.f32 %v2849, %v2850
    %v2852 = vrot.slane %v2851, 1
    %v2853 = vmax.f32 %v2851, %v2852
    %v2854 = vsel %vm371, %v2840, -inf
    %v2855 = vrot.slane %v2854, 4
    %v2856 = vmax.f32 %v2854, %v2855
    %v2857 = vrot.slane %v2856, 2
    %v2858 = vmax.f32 %v2856, %v2857
    %v2859 = vrot.slane %v2858, 1
    %v2860 = vmax.f32 %v2858, %v2859
    %v2861 = vsel %vm371, %v2841, -inf
    %v2862 = vrot.slane %v2861, 4
    %v2863 = vmax.f32 %v2861, %v2862
    %v2864 = vrot.slane %v2863, 2
    %v2865 = vmax.f32 %v2863, %v2864
    %v2866 = vrot.slane %v2865, 1
    %v2867 = vmax.f32 %v2865, %v2866
    %v2868 = vsel %vm371, %v2842, -inf
    %v2869 = vrot.slane %v2868, 4
    %v2870 = vmax.f32 %v2868, %v2869
    %v2871 = vrot.slane %v2870, 2
    %v2872 = vmax.f32 %v2870, %v2871
    %v2873 = vrot.slane %v2872, 1
    %v2874 = vmax.f32 %v2872, %v2873
    %v2875 = vsel %vm371, %v2843, -inf
    %v2876 = vrot.slane %v2875, 4
    %v2877 = vmax.f32 %v2875, %v2876
    %v2878 = vrot.slane %v2877, 2
    %v2879 = vmax.f32 %v2877, %v2878
    %v2880 = vrot.slane %v2879, 1
    %v2881 = vmax.f32 %v2879, %v2880
    %v2882 = vsel %vm371, %v2844, -inf
    %v2883 = vrot.slane %v2882, 4
    %v2884 = vmax.f32 %v2882, %v2883
    %v2885 = vrot.slane %v2884, 2
    %v2886 = vmax.f32 %v2884, %v2885
    %v2887 = vrot.slane %v2886, 1
    %v2888 = vmax.f32 %v2886, %v2887
    %v2889 = vsel %vm371, %v2845, -inf
    %v2890 = vrot.slane %v2889, 4
    %v2891 = vmax.f32 %v2889, %v2890
    %v2892 = vrot.slane %v2891, 2
    %v2893 = vmax.f32 %v2891, %v2892
    %v2894 = vrot.slane %v2893, 1
    %v2895 = vmax.f32 %v2893, %v2894
    %v2896 = vsel %vm371, %v2846, -inf
    %v2897 = vrot.slane %v2896, 4
    %v2898 = vmax.f32 %v2896, %v2897
    %v2899 = vrot.slane %v2898, 2
    %v2900 = vmax.f32 %v2898, %v2899
    %v2901 = vrot.slane %v2900, 1
    %v2902 = vmax.f32 %v2900, %v2901
    %v2903 = vpack.c.bf16 %v2853, %v2853
    %v2904 = vpack.c.bf16 %v2860, %v2860
    %v2905 = vpack.c.bf16 %v2867, %v2867
    %v2906 = vpack.c.bf16 %v2874, %v2874
    %v2907 = vpack.c.bf16 %v2881, %v2881
    %v2908 = vpack.c.bf16 %v2888, %v2888
    %v2909 = vpack.c.bf16 %v2895, %v2895
    %v2910 = vpack.c.bf16 %v2902, %v2902
    %v2919 = vunpack.c.l.b16 %v2903
    %v2920 = vunpack.c.l.b16 %v2904
    %v2921 = vunpack.c.l.b16 %v2905
    %v2922 = vunpack.c.l.b16 %v2906
    %v2923 = vunpack.c.l.b16 %v2907
    %v2924 = vunpack.c.l.b16 %v2908
    %v2925 = vunpack.c.l.b16 %v2909
    %v2926 = vunpack.c.l.b16 %v2910
    %v2927 = vsel %vm1905, %v2920, %v2919
    %v2928 = vsel %vm1907, %v2921, %v2927
    %v2929 = vsel %vm1909, %v2922, %v2928
    %v2930 = vsel %vm1911, %v2923, %v2929
    %v2931 = vsel %vm1913, %v2924, %v2930
    %v2932 = vsel %vm1915, %v2925, %v2931
    %v2933 = vsel %vm1917, %v2926, %v2932
    %v2934 = vpack.c.b16 %v2933, %v2933
    %v2936 = vsel %vm371, %v2934, 0
    %2938 = vmatpush.bf16.msra.mxu0 0
    %2939 = vmatpush.bf16.msra.mxu0 0
    %2940 = vmatpush.bf16.msra.mxu0 0
    %2941 = vmatpush.bf16.msra.mxu0 0
    %2942 = vmatpush.bf16.msra.mxu0 0
    %2943 = vmatpush.bf16.msra.mxu0 0
    %2944 = vmatpush.bf16.msra.mxu0 %v1929
    %2945 = vmatpush.bf16.msra.mxu0 %v1928
    %2946 = vmatmul.bf16.gmra.mxu0 %v2936
    %v2947 = vpop.f32.mrf.mxu0
    %v2948 = vadd.f32 %v1887, %v2947
    %v2949 = vpop.f32.mrf.mxu0
    %2950 = vdwg.mxu0
    %v2951 = vsub.f32 %v1948, %v2800
    %v2952 = vsub.f32 %v1949, %v2802
    %v2953 = vsub.f32 %v1950, %v2805
    %v2954 = vsub.f32 %v1951, %v2807
    %v2955 = vsub.f32 %v1952, %v2810
    %v2956 = vsub.f32 %v1953, %v2812
    %v2957 = vsub.f32 %v1954, %v2815
    %v2958 = vsub.f32 %v1955, %v2817
    %v2959 = vadd.f32 %v1956, %v2948
    %v2960 = vld [vmem:[%s13] sm:$0xf]
    %v2961 = vld [vmem:[%s13 + $0x4] sm:$0xf]
    %v2962 = vld [vmem:[%s13 + $0x8] sm:$0xf]
    %v2963 = vld [vmem:[%s13 + $0xc] sm:$0xf]
    %v2964 = vld [vmem:[%s13 + $0x10] sm:$0xf]
    %v2965 = vld [vmem:[%s13 + $0x14] sm:$0xf]
    %v2966 = vld [vmem:[%s13 + $0x18] sm:$0xf]
    %v2967 = vld [vmem:[%s13 + $0x1c] sm:$0xf]
    %v2968 = vld [vmem:[%s13 + $0x20] sm:$0xf]
    %v2969 = vld [vmem:[%s13 + $0x24] sm:$0xf]
    %v2970 = vld [vmem:[%s13 + $0x28] sm:$0xf]
    %v2971 = vld [vmem:[%s13 + $0x2c] sm:$0xf]
    %v2972 = vld [vmem:[%s13 + $0x30] sm:$0xf]
    %v2973 = vld [vmem:[%s13 + $0x34] sm:$0xf]
    %v2974 = vld [vmem:[%s13 + $0x38] sm:$0xf]
    %v2975 = vld [vmem:[%s13 + $0x3c] sm:$0xf]
    %v2976 = vld [vmem:[%s14] sm:$0xff]
    %v2977 = vld [vmem:[%s14 + $0x8] sm:$0xff]
    %v2978 = vld [vmem:[%s14 + $0x10] sm:$0xff]
    %v2979 = vld [vmem:[%s14 + $0x18] sm:$0xff]
    %v2980 = vld [vmem:[%s14 + $0x20] sm:$0xff]
    %v2981 = vld [vmem:[%s14 + $0x28] sm:$0xff]
    %v2982 = vld [vmem:[%s14 + $0x30] sm:$0xff]
    %v2983 = vld [vmem:[%s14 + $0x38] sm:$0xff]
    %v2984 = vld [vmem:[%s14 + $0x40] sm:$0xff]
    %v2985 = vld [vmem:[%s14 + $0x48] sm:$0xff]
    %v2986 = vld [vmem:[%s14 + $0x50] sm:$0xff]
    %v2987 = vld [vmem:[%s14 + $0x58] sm:$0xff]
    %v2988 = vld [vmem:[%s14 + $0x60] sm:$0xff]
    %v2989 = vld [vmem:[%s14 + $0x68] sm:$0xff]
    %v2990 = vld [vmem:[%s14 + $0x70] sm:$0xff]
    %v2991 = vld [vmem:[%s14 + $0x78] sm:$0xff]
    %v2992 = vld [vmem:[%s15] sm:$0xf]
    %v2993 = vld [vmem:[%s15 + $0x4] sm:$0xf]
    %v2994 = vld [vmem:[%s15 + $0x8] sm:$0xf]
    %v2995 = vld [vmem:[%s15 + $0xc] sm:$0xf]
    %v2996 = vld [vmem:[%s15 + $0x10] sm:$0xf]
    %v2997 = vld [vmem:[%s15 + $0x14] sm:$0xf]
    %v2998 = vld [vmem:[%s15 + $0x18] sm:$0xf]
    %v2999 = vld [vmem:[%s15 + $0x1c] sm:$0xf]
    %v3000 = vld [vmem:[%s15 + $0x20] sm:$0xf]
    %v3001 = vld [vmem:[%s15 + $0x24] sm:$0xf]
    %v3002 = vld [vmem:[%s15 + $0x28] sm:$0xf]
    %v3003 = vld [vmem:[%s15 + $0x2c] sm:$0xf]
    %v3004 = vld [vmem:[%s15 + $0x30] sm:$0xf]
    %v3005 = vld [vmem:[%s15 + $0x34] sm:$0xf]
    %v3006 = vld [vmem:[%s15 + $0x38] sm:$0xf]
    %v3007 = vld [vmem:[%s15 + $0x3c] sm:$0xf]
    %v3008 = vld [vmem:[%s16] sm:$0xff]
    %v3009 = vld [vmem:[%s16 + $0x8] sm:$0xff]
    %v3010 = vld [vmem:[%s16 + $0x10] sm:$0xff]
    %v3011 = vld [vmem:[%s16 + $0x18] sm:$0xff]
    %v3012 = vld [vmem:[%s16 + $0x20] sm:$0xff]
    %v3013 = vld [vmem:[%s16 + $0x28] sm:$0xff]
    %v3014 = vld [vmem:[%s16 + $0x30] sm:$0xff]
    %v3015 = vld [vmem:[%s16 + $0x38] sm:$0xff]
    %v3016 = vld [vmem:[%s16 + $0x40] sm:$0xff]
    %v3017 = vld [vmem:[%s16 + $0x48] sm:$0xff]
    %v3018 = vld [vmem:[%s16 + $0x50] sm:$0xff]
    %v3019 = vld [vmem:[%s16 + $0x58] sm:$0xff]
    %v3020 = vld [vmem:[%s16 + $0x60] sm:$0xff]
    %v3021 = vld [vmem:[%s16 + $0x68] sm:$0xff]
    %v3022 = vld [vmem:[%s16 + $0x70] sm:$0xff]
    %v3023 = vld [vmem:[%s16 + $0x78] sm:$0xff]
    %v3024 = vld [vmem:[%s17] sm:$0xf]
    %v3025 = vld [vmem:[%s17 + $0x4] sm:$0xf]
    %v3026 = vld [vmem:[%s17 + $0x8] sm:$0xf]
    %v3027 = vld [vmem:[%s17 + $0xc] sm:$0xf]
    %v3028 = vld [vmem:[%s18] sm:$0x1]
    %v3029 = vld [vmem:[%s11] sm:$0xf]
    %v3030 = vld [vmem:[%s11 + $0x4] sm:$0xf]
    %v3031 = vld [vmem:[%s11 + $0x8] sm:$0xf]
    %v3032 = vld [vmem:[%s11 + $0xc] sm:$0xf]
    %v3033 = vld [vmem:[%s11 + $0x10] sm:$0xf]
    %v3034 = vld [vmem:[%s11 + $0x14] sm:$0xf]
    %v3035 = vld [vmem:[%s11 + $0x18] sm:$0xf]
    %v3036 = vld [vmem:[%s11 + $0x1c] sm:$0xf]
    %v3037 = vld [vmem:[%s11 + $0x20] sm:$0xf]
    %v3038 = vld [vmem:[%s11 + $0x24] sm:$0xf]
    %v3039 = vld [vmem:[%s11 + $0x28] sm:$0xf]
    %v3040 = vld [vmem:[%s11 + $0x2c] sm:$0xf]
    %v3041 = vld [vmem:[%s12] sm:$0x1]
    %v3050 = vrot.slane %v2951, 7
    %v3051 = vrot.slane %v2952, 7
    %v3052 = vsel %vm208, %v3050, %v3051
    %v3053 = vrot.slane %v2953, 7
    %v3054 = vsel %vm208, %v3051, %v3053
    %v3055 = vrot.slane %v2954, 7
    %v3056 = vsel %vm208, %v3053, %v3055
    %v3057 = vrot.slane %v2955, 7
    %v3058 = vsel %vm208, %v3055, %v3057
    %v3059 = vrot.slane %v2956, 7
    %v3060 = vsel %vm208, %v3057, %v3059
    %v3061 = vrot.slane %v2957, 7
    %v3062 = vsel %vm208, %v3059, %v3061
    %v3063 = vrot.slane %v2958, 7
    %v3064 = vsel %vm208, %v3061, %v3063
    %v3073 = vsel %vm208, 0.0, %v3050
    %v3074 = vsel %vm241, 0.0, %v3073
    %v3075 = vsel %vm242, 0.0, %v3052
    %v3076 = vsel %vm243, 0.0, %v3054
    %v3077 = vsel %vm244, 0.0, %v3056
    %v3078 = vsel %vm245, 0.0, %v3058
    %v3079 = vsel %vm246, 0.0, %v3060
    %v3080 = vsel %vm247, 0.0, %v3062
    %v3081 = vsel %vm248, 0.0, %v3064
    %v3082 = vrot.slane %v2951, 1
    %v3083 = vrot.slane %v2952, 1
    %v3084 = vsel %vm257, %v3082, %v3083
    %v3085 = vrot.slane %v2953, 1
    %v3086 = vsel %vm257, %v3083, %v3085
    %v3087 = vrot.slane %v2954, 1
    %v3088 = vsel %vm257, %v3085, %v3087
    %v3089 = vrot.slane %v2955, 1
    %v3090 = vsel %vm257, %v3087, %v3089
    %v3091 = vrot.slane %v2956, 1
    %v3092 = vsel %vm257, %v3089, %v3091
    %v3093 = vrot.slane %v2957, 1
    %v3094 = vsel %vm257, %v3091, %v3093
    %v3095 = vrot.slane %v2958, 1
    %v3096 = vsel %vm257, %v3093, %v3095
    %v3105 = vsel %vm257, %v3095, 0.0
    %v3106 = vsel %vm290, 0.0, %v3084
    %v3107 = vsel %vm291, 0.0, %v3086
    %v3108 = vsel %vm292, 0.0, %v3088
    %v3109 = vsel %vm293, 0.0, %v3090
    %v3110 = vsel %vm294, 0.0, %v3092
    %v3111 = vsel %vm295, 0.0, %v3094
    %v3112 = vsel %vm296, 0.0, %v3096
    %v3113 = vsel %vm297, 0.0, %v3105
    %3114 = vrot.lane.b32.xlu0 %v2951, 32
    %v3115 = vpop.permute.xlu0 %3114
    %3116 = vrot.lane.b32.xlu0 %v2952, 32
    %v3117 = vpop.permute.xlu0 %3116
    %3118 = vrot.lane.b32.xlu0 %v2953, 32
    %v3119 = vpop.permute.xlu0 %3118
    %3120 = vrot.lane.b32.xlu0 %v2954, 32
    %v3121 = vpop.permute.xlu0 %3120
    %3122 = vrot.lane.b32.xlu0 %v2955, 32
    %v3123 = vpop.permute.xlu0 %3122
    %3124 = vrot.lane.b32.xlu0 %v2956, 32
    %v3125 = vpop.permute.xlu0 %3124
    %3126 = vrot.lane.b32.xlu0 %v2957, 32
    %v3127 = vpop.permute.xlu0 %3126
    %3128 = vrot.lane.b32.xlu0 %v2958, 32
    %v3129 = vpop.permute.xlu0 %3128
    %3146 = vrot.lane.b32.xlu0 %v3106, 64
    %v3147 = vpop.permute.xlu0 %3146
    %3148 = vrot.lane.b32.xlu0 %v3107, 64
    %v3149 = vpop.permute.xlu0 %3148
    %3150 = vrot.lane.b32.xlu0 %v3108, 64
    %v3151 = vpop.permute.xlu0 %3150
    %3152 = vrot.lane.b32.xlu0 %v3109, 64
    %v3153 = vpop.permute.xlu0 %3152
    %3154 = vrot.lane.b32.xlu0 %v3110, 64
    %v3155 = vpop.permute.xlu0 %3154
    %3156 = vrot.lane.b32.xlu0 %v3111, 64
    %v3157 = vpop.permute.xlu0 %3156
    %3158 = vrot.lane.b32.xlu0 %v3112, 64
    %v3159 = vpop.permute.xlu0 %3158
    %3160 = vrot.lane.b32.xlu0 %v3113, 64
    %v3161 = vpop.permute.xlu0 %3160
    %v3170 = vsel %vm371, %v3074, %v3115
    %v3171 = vsel %vm371, %v3075, %v3117
    %v3172 = vsel %vm371, %v3076, %v3119
    %v3173 = vsel %vm371, %v3077, %v3121
    %v3174 = vsel %vm371, %v3078, %v3123
    %v3175 = vsel %vm371, %v3079, %v3125
    %v3176 = vsel %vm371, %v3080, %v3127
    %v3177 = vsel %vm371, %v3081, %v3129
    %v3178 = vsel %vm649, %v3170, %v3147
    %v3179 = vsel %vm649, %v3171, %v3149
    %v3180 = vsel %vm649, %v3172, %v3151
    %v3181 = vsel %vm649, %v3173, %v3153
    %v3182 = vsel %vm649, %v3174, %v3155
    %v3183 = vsel %vm649, %v3175, %v3157
    %v3184 = vsel %vm649, %v3176, %v3159
    %v3185 = vsel %vm649, %v3177, %v3161
    %v3186 = vpack.c.bf16 %v3179, %v3178
    %v3187 = vpack.c.bf16 %v3181, %v3180
    %v3188 = vpack.c.bf16 %v3183, %v3182
    %v3189 = vpack.c.bf16 %v3185, %v3184
    %v3191 = vperm.slane %v3041, 0
    %v3205 = vunpack.c.l.b16 %v3029
    %v3206 = vunpack.c.l.b16 %v3030
    %v3207 = vunpack.c.l.b16 %v3031
    %v3208 = vunpack.c.l.b16 %v3032
    %v3209 = vunpack.c.l.b16 %v3033
    %v3210 = vunpack.c.l.b16 %v3034
    %v3211 = vunpack.c.l.b16 %v3035
    %v3212 = vunpack.c.l.b16 %v3036
    %v3213 = vunpack.c.l.b16 %v3037
    %v3214 = vunpack.c.l.b16 %v3038
    %v3215 = vunpack.c.l.b16 %v3039
    %v3216 = vunpack.c.l.b16 %v3040
    %v3217 = vpack.c.b16 %v3206, %v3205
    %v3218 = vpack.c.b16 %v3208, %v3207
    %v3219 = vpack.c.b16 %v3210, %v3209
    %v3220 = vpack.c.b16 %v3212, %v3211
    %v3221 = vpack.c.b16 %v3214, %v3213
    %v3222 = vpack.c.b16 %v3216, %v3215
    %v3230 = vsel %vm701, %v3186, 0
    %v3233 = vsel %vm701, %v3187, 0
    %v3236 = vsel %vm701, %v3188, 0
    %v3239 = vsel %vm701, %v3189, 0
    %3241 = vmatpush.bf16.msra.mxu0 0
    %3242 = vmatpush.bf16.msra.mxu0 0
    %3243 = vmatpush.bf16.msra.mxu0 %v3222
    %3244 = vmatpush.bf16.msra.mxu0 %v3221
    %3245 = vmatpush.bf16.msra.mxu0 %v3220
    %3246 = vmatpush.bf16.msra.mxu0 %v3219
    %3247 = vmatpush.bf16.msra.mxu0 %v3218
    %3248 = vmatpush.bf16.msra.mxu0 %v3217
    %3249 = vmatmul.bf16.gmra.mxu0 %v3230
    %v3250 = vpop.f32.mrf.mxu0
    %v3251 = vadd.f32 %v3191, %v3250
    %v3252 = vpop.f32.mrf.mxu0
    %v3253 = vadd.f32 %v3191, %v3252
    %3254 = vmatmul.bf16.gmra.mxu0 %v3233
    %v3255 = vpop.f32.mrf.mxu0
    %v3256 = vadd.f32 %v3191, %v3255
    %v3257 = vpop.f32.mrf.mxu0
    %v3258 = vadd.f32 %v3191, %v3257
    %3259 = vmatmul.bf16.gmra.mxu0 %v3236
    %v3260 = vpop.f32.mrf.mxu0
    %v3261 = vadd.f32 %v3191, %v3260
    %v3262 = vpop.f32.mrf.mxu0
    %v3263 = vadd.f32 %v3191, %v3262
    %3264 = vmatmul.bf16.gmra.mxu0 %v3239
    %v3265 = vpop.f32.mrf.mxu0
    %v3266 = vadd.f32 %v3191, %v3265
    %v3267 = vpop.f32.mrf.mxu0
    %v3268 = vadd.f32 %v3191, %v3267
    %3269 = vdwg.mxu0
    %v3270 = vmax.f32 %v3251, 0.0
    %v3271 = vmax.f32 %v3253, 0.0
    %v3272 = vmax.f32 %v3256, 0.0
    %v3273 = vmax.f32 %v3258, 0.0
    %v3274 = vmax.f32 %v3261, 0.0
    %v3275 = vmax.f32 %v3263, 0.0
    %v3276 = vmax.f32 %v3266, 0.0
    %v3277 = vmax.f32 %v3268, 0.0
    %s3278 = scalar_lea.vmem %s11, 48
    %v3279 = vld [vmem:[%s3278] sm:$0xf]
    %v3280 = vld [vmem:[%s3278 + $0x4] sm:$0xf]
    %v3281 = vld [vmem:[%s3278 + $0x8] sm:$0xf]
    %v3282 = vld [vmem:[%s3278 + $0xc] sm:$0xf]
    %v3283 = vld [vmem:[%s3278 + $0x10] sm:$0xf]
    %v3284 = vld [vmem:[%s3278 + $0x14] sm:$0xf]
    %v3285 = vld [vmem:[%s3278 + $0x18] sm:$0xf]
    %v3286 = vld [vmem:[%s3278 + $0x1c] sm:$0xf]
    %v3287 = vld [vmem:[%s3278 + $0x20] sm:$0xf]
    %v3288 = vld [vmem:[%s3278 + $0x24] sm:$0xf]
    %v3289 = vld [vmem:[%s3278 + $0x28] sm:$0xf]
    %v3290 = vld [vmem:[%s3278 + $0x2c] sm:$0xf]
    %s3291 = scalar_lea.vmem %s12, 1
    %v3292 = vld [vmem:[%s3291] sm:$0x1]
    %v3301 = vrot.slane %v3270, 7
    %v3302 = vrot.slane %v3271, 7
    %v3303 = vsel %vm208, %v3301, %v3302
    %v3304 = vrot.slane %v3272, 7
    %v3305 = vsel %vm208, %v3302, %v3304
    %v3306 = vrot.slane %v3273, 7
    %v3307 = vsel %vm208, %v3304, %v3306
    %v3308 = vrot.slane %v3274, 7
    %v3309 = vsel %vm208, %v3306, %v3308
    %v3310 = vrot.slane %v3275, 7
    %v3311 = vsel %vm208, %v3308, %v3310
    %v3312 = vrot.slane %v3276, 7
    %v3313 = vsel %vm208, %v3310, %v3312
    %v3314 = vrot.slane %v3277, 7
    %v3315 = vsel %vm208, %v3312, %v3314
    %v3324 = vsel %vm208, 0.0, %v3301
    %v3325 = vsel %vm241, 0.0, %v3324
    %v3326 = vsel %vm242, 0.0, %v3303
    %v3327 = vsel %vm243, 0.0, %v3305
    %v3328 = vsel %vm244, 0.0, %v3307
    %v3329 = vsel %vm245, 0.0, %v3309
    %v3330 = vsel %vm246, 0.0, %v3311
    %v3331 = vsel %vm247, 0.0, %v3313
    %v3332 = vsel %vm248, 0.0, %v3315
    %v3333 = vrot.slane %v3270, 1
    %v3334 = vrot.slane %v3271, 1
    %v3335 = vsel %vm257, %v3333, %v3334
    %v3336 = vrot.slane %v3272, 1
    %v3337 = vsel %vm257, %v3334, %v3336
    %v3338 = vrot.slane %v3273, 1
    %v3339 = vsel %vm257, %v3336, %v3338
    %v3340 = vrot.slane %v3274, 1
    %v3341 = vsel %vm257, %v3338, %v3340
    %v3342 = vrot.slane %v3275, 1
    %v3343 = vsel %vm257, %v3340, %v3342
    %v3344 = vrot.slane %v3276, 1
    %v3345 = vsel %vm257, %v3342, %v3344
    %v3346 = vrot.slane %v3277, 1
    %v3347 = vsel %vm257, %v3344, %v3346
    %v3356 = vsel %vm257, %v3346, 0.0
    %v3357 = vsel %vm290, 0.0, %v3335
    %v3358 = vsel %vm291, 0.0, %v3337
    %v3359 = vsel %vm292, 0.0, %v3339
    %v3360 = vsel %vm293, 0.0, %v3341
    %v3361 = vsel %vm294, 0.0, %v3343
    %v3362 = vsel %vm295, 0.0, %v3345
    %v3363 = vsel %vm296, 0.0, %v3347
    %v3364 = vsel %vm297, 0.0, %v3356
    %3365 = vrot.lane.b32.xlu0 %v3270, 32
    %v3366 = vpop.permute.xlu0 %3365
    %3367 = vrot.lane.b32.xlu0 %v3271, 32
    %v3368 = vpop.permute.xlu0 %3367
    %3369 = vrot.lane.b32.xlu0 %v3272, 32
    %v3370 = vpop.permute.xlu0 %3369
    %3371 = vrot.lane.b32.xlu0 %v3273, 32
    %v3372 = vpop.permute.xlu0 %3371
    %3373 = vrot.lane.b32.xlu0 %v3274, 32
    %v3374 = vpop.permute.xlu0 %3373
    %3375 = vrot.lane.b32.xlu0 %v3275, 32
    %v3376 = vpop.permute.xlu0 %3375
    %3377 = vrot.lane.b32.xlu0 %v3276, 32
    %v3378 = vpop.permute.xlu0 %3377
    %3379 = vrot.lane.b32.xlu0 %v3277, 32
    %v3380 = vpop.permute.xlu0 %3379
    %3397 = vrot.lane.b32.xlu0 %v3357, 64
    %v3398 = vpop.permute.xlu0 %3397
    %3399 = vrot.lane.b32.xlu0 %v3358, 64
    %v3400 = vpop.permute.xlu0 %3399
    %3401 = vrot.lane.b32.xlu0 %v3359, 64
    %v3402 = vpop.permute.xlu0 %3401
    %3403 = vrot.lane.b32.xlu0 %v3360, 64
    %v3404 = vpop.permute.xlu0 %3403
    %3405 = vrot.lane.b32.xlu0 %v3361, 64
    %v3406 = vpop.permute.xlu0 %3405
    %3407 = vrot.lane.b32.xlu0 %v3362, 64
    %v3408 = vpop.permute.xlu0 %3407
    %3409 = vrot.lane.b32.xlu0 %v3363, 64
    %v3410 = vpop.permute.xlu0 %3409
    %3411 = vrot.lane.b32.xlu0 %v3364, 64
    %v3412 = vpop.permute.xlu0 %3411
    %v3421 = vsel %vm371, %v3325, %v3366
    %v3422 = vsel %vm371, %v3326, %v3368
    %v3423 = vsel %vm371, %v3327, %v3370
    %v3424 = vsel %vm371, %v3328, %v3372
    %v3425 = vsel %vm371, %v3329, %v3374
    %v3426 = vsel %vm371, %v3330, %v3376
    %v3427 = vsel %vm371, %v3331, %v3378
    %v3428 = vsel %vm371, %v3332, %v3380
    %v3429 = vsel %vm649, %v3421, %v3398
    %v3430 = vsel %vm649, %v3422, %v3400
    %v3431 = vsel %vm649, %v3423, %v3402
    %v3432 = vsel %vm649, %v3424, %v3404
    %v3433 = vsel %vm649, %v3425, %v3406
    %v3434 = vsel %vm649, %v3426, %v3408
    %v3435 = vsel %vm649, %v3427, %v3410
    %v3436 = vsel %vm649, %v3428, %v3412
    %v3437 = vpack.c.bf16 %v3430, %v3429
    %v3438 = vpack.c.bf16 %v3432, %v3431
    %v3439 = vpack.c.bf16 %v3434, %v3433
    %v3440 = vpack.c.bf16 %v3436, %v3435
    %v3442 = vperm.slane %v3292, 0
    %v3456 = vunpack.c.l.b16 %v3279
    %v3457 = vunpack.c.l.b16 %v3280
    %v3458 = vunpack.c.l.b16 %v3281
    %v3459 = vunpack.c.l.b16 %v3282
    %v3460 = vunpack.c.l.b16 %v3283
    %v3461 = vunpack.c.l.b16 %v3284
    %v3462 = vunpack.c.l.b16 %v3285
    %v3463 = vunpack.c.l.b16 %v3286
    %v3464 = vunpack.c.l.b16 %v3287
    %v3465 = vunpack.c.l.b16 %v3288
    %v3466 = vunpack.c.l.b16 %v3289
    %v3467 = vunpack.c.l.b16 %v3290
    %v3468 = vpack.c.b16 %v3457, %v3456
    %v3469 = vpack.c.b16 %v3459, %v3458
    %v3470 = vpack.c.b16 %v3461, %v3460
    %v3471 = vpack.c.b16 %v3463, %v3462
    %v3472 = vpack.c.b16 %v3465, %v3464
    %v3473 = vpack.c.b16 %v3467, %v3466
    %v3481 = vsel %vm701, %v3437, 0
    %v3484 = vsel %vm701, %v3438, 0
    %v3487 = vsel %vm701, %v3439, 0
    %v3490 = vsel %vm701, %v3440, 0
    %3492 = vmatpush.bf16.msra.mxu0 0
    %3493 = vmatpush.bf16.msra.mxu0 0
    %3494 = vmatpush.bf16.msra.mxu0 %v3473
    %3495 = vmatpush.bf16.msra.mxu0 %v3472
    %3496 = vmatpush.bf16.msra.mxu0 %v3471
    %3497 = vmatpush.bf16.msra.mxu0 %v3470
    %3498 = vmatpush.bf16.msra.mxu0 %v3469
    %3499 = vmatpush.bf16.msra.mxu0 %v3468
    %3500 = vmatmul.bf16.gmra.mxu0 %v3481
    %v3501 = vpop.f32.mrf.mxu0
    %v3502 = vadd.f32 %v3442, %v3501
    %v3503 = vpop.f32.mrf.mxu0
    %v3504 = vadd.f32 %v3442, %v3503
    %3505 = vmatmul.bf16.gmra.mxu0 %v3484
    %v3506 = vpop.f32.mrf.mxu0
    %v3507 = vadd.f32 %v3442, %v3506
    %v3508 = vpop.f32.mrf.mxu0
    %v3509 = vadd.f32 %v3442, %v3508
    %3510 = vmatmul.bf16.gmra.mxu0 %v3487
    %v3511 = vpop.f32.mrf.mxu0
    %v3512 = vadd.f32 %v3442, %v3511
    %v3513 = vpop.f32.mrf.mxu0
    %v3514 = vadd.f32 %v3442, %v3513
    %3515 = vmatmul.bf16.gmra.mxu0 %v3490
    %v3516 = vpop.f32.mrf.mxu0
    %v3517 = vadd.f32 %v3442, %v3516
    %v3518 = vpop.f32.mrf.mxu0
    %v3519 = vadd.f32 %v3442, %v3518
    %3520 = vdwg.mxu0
    %v3521 = vmax.f32 %v3502, 0.0
    %v3522 = vmax.f32 %v3504, 0.0
    %v3523 = vmax.f32 %v3507, 0.0
    %v3524 = vmax.f32 %v3509, 0.0
    %v3525 = vmax.f32 %v3512, 0.0
    %v3526 = vmax.f32 %v3514, 0.0
    %v3527 = vmax.f32 %v3517, 0.0
    %v3528 = vmax.f32 %v3519, 0.0
    %s3529 = scalar_lea.vmem %s11, 96
    %v3530 = vld [vmem:[%s3529] sm:$0xf]
    %v3531 = vld [vmem:[%s3529 + $0x4] sm:$0xf]
    %v3532 = vld [vmem:[%s3529 + $0x8] sm:$0xf]
    %v3533 = vld [vmem:[%s3529 + $0xc] sm:$0xf]
    %v3534 = vld [vmem:[%s3529 + $0x10] sm:$0xf]
    %v3535 = vld [vmem:[%s3529 + $0x14] sm:$0xf]
    %v3536 = vld [vmem:[%s3529 + $0x18] sm:$0xf]
    %v3537 = vld [vmem:[%s3529 + $0x1c] sm:$0xf]
    %v3538 = vld [vmem:[%s3529 + $0x20] sm:$0xf]
    %v3539 = vld [vmem:[%s3529 + $0x24] sm:$0xf]
    %v3540 = vld [vmem:[%s3529 + $0x28] sm:$0xf]
    %v3541 = vld [vmem:[%s3529 + $0x2c] sm:$0xf]
    %s3542 = scalar_lea.vmem %s12, 2
    %v3543 = vld [vmem:[%s3542] sm:$0x1]
    %v3552 = vrot.slane %v3521, 7
    %v3553 = vrot.slane %v3522, 7
    %v3554 = vsel %vm208, %v3552, %v3553
    %v3555 = vrot.slane %v3523, 7
    %v3556 = vsel %vm208, %v3553, %v3555
    %v3557 = vrot.slane %v3524, 7
    %v3558 = vsel %vm208, %v3555, %v3557
    %v3559 = vrot.slane %v3525, 7
    %v3560 = vsel %vm208, %v3557, %v3559
    %v3561 = vrot.slane %v3526, 7
    %v3562 = vsel %vm208, %v3559, %v3561
    %v3563 = vrot.slane %v3527, 7
    %v3564 = vsel %vm208, %v3561, %v3563
    %v3565 = vrot.slane %v3528, 7
    %v3566 = vsel %vm208, %v3563, %v3565
    %v3575 = vsel %vm208, 0.0, %v3552
    %v3576 = vsel %vm241, 0.0, %v3575
    %v3577 = vsel %vm242, 0.0, %v3554
    %v3578 = vsel %vm243, 0.0, %v3556
    %v3579 = vsel %vm244, 0.0, %v3558
    %v3580 = vsel %vm245, 0.0, %v3560
    %v3581 = vsel %vm246, 0.0, %v3562
    %v3582 = vsel %vm247, 0.0, %v3564
    %v3583 = vsel %vm248, 0.0, %v3566
    %v3584 = vrot.slane %v3521, 1
    %v3585 = vrot.slane %v3522, 1
    %v3586 = vsel %vm257, %v3584, %v3585
    %v3587 = vrot.slane %v3523, 1
    %v3588 = vsel %vm257, %v3585, %v3587
    %v3589 = vrot.slane %v3524, 1
    %v3590 = vsel %vm257, %v3587, %v3589
    %v3591 = vrot.slane %v3525, 1
    %v3592 = vsel %vm257, %v3589, %v3591
    %v3593 = vrot.slane %v3526, 1
    %v3594 = vsel %vm257, %v3591, %v3593
    %v3595 = vrot.slane %v3527, 1
    %v3596 = vsel %vm257, %v3593, %v3595
    %v3597 = vrot.slane %v3528, 1
    %v3598 = vsel %vm257, %v3595, %v3597
    %v3607 = vsel %vm257, %v3597, 0.0
    %v3608 = vsel %vm290, 0.0, %v3586
    %v3609 = vsel %vm291, 0.0, %v3588
    %v3610 = vsel %vm292, 0.0, %v3590
    %v3611 = vsel %vm293, 0.0, %v3592
    %v3612 = vsel %vm294, 0.0, %v3594
    %v3613 = vsel %vm295, 0.0, %v3596
    %v3614 = vsel %vm296, 0.0, %v3598
    %v3615 = vsel %vm297, 0.0, %v3607
    %3616 = vrot.lane.b32.xlu0 %v3521, 32
    %v3617 = vpop.permute.xlu0 %3616
    %3618 = vrot.lane.b32.xlu0 %v3522, 32
    %v3619 = vpop.permute.xlu0 %3618
    %3620 = vrot.lane.b32.xlu0 %v3523, 32
    %v3621 = vpop.permute.xlu0 %3620
    %3622 = vrot.lane.b32.xlu0 %v3524, 32
    %v3623 = vpop.permute.xlu0 %3622
    %3624 = vrot.lane.b32.xlu0 %v3525, 32
    %v3625 = vpop.permute.xlu0 %3624
    %3626 = vrot.lane.b32.xlu0 %v3526, 32
    %v3627 = vpop.permute.xlu0 %3626
    %3628 = vrot.lane.b32.xlu0 %v3527, 32
    %v3629 = vpop.permute.xlu0 %3628
    %3630 = vrot.lane.b32.xlu0 %v3528, 32
    %v3631 = vpop.permute.xlu0 %3630
    %3648 = vrot.lane.b32.xlu0 %v3608, 64
    %v3649 = vpop.permute.xlu0 %3648
    %3650 = vrot.lane.b32.xlu0 %v3609, 64
    %v3651 = vpop.permute.xlu0 %3650
    %3652 = vrot.lane.b32.xlu0 %v3610, 64
    %v3653 = vpop.permute.xlu0 %3652
    %3654 = vrot.lane.b32.xlu0 %v3611, 64
    %v3655 = vpop.permute.xlu0 %3654
    %3656 = vrot.lane.b32.xlu0 %v3612, 64
    %v3657 = vpop.permute.xlu0 %3656
    %3658 = vrot.lane.b32.xlu0 %v3613, 64
    %v3659 = vpop.permute.xlu0 %3658
    %3660 = vrot.lane.b32.xlu0 %v3614, 64
    %v3661 = vpop.permute.xlu0 %3660
    %3662 = vrot.lane.b32.xlu0 %v3615, 64
    %v3663 = vpop.permute.xlu0 %3662
    %v3672 = vsel %vm371, %v3576, %v3617
    %v3673 = vsel %vm371, %v3577, %v3619
    %v3674 = vsel %vm371, %v3578, %v3621
    %v3675 = vsel %vm371, %v3579, %v3623
    %v3676 = vsel %vm371, %v3580, %v3625
    %v3677 = vsel %vm371, %v3581, %v3627
    %v3678 = vsel %vm371, %v3582, %v3629
    %v3679 = vsel %vm371, %v3583, %v3631
    %v3680 = vsel %vm649, %v3672, %v3649
    %v3681 = vsel %vm649, %v3673, %v3651
    %v3682 = vsel %vm649, %v3674, %v3653
    %v3683 = vsel %vm649, %v3675, %v3655
    %v3684 = vsel %vm649, %v3676, %v3657
    %v3685 = vsel %vm649, %v3677, %v3659
    %v3686 = vsel %vm649, %v3678, %v3661
    %v3687 = vsel %vm649, %v3679, %v3663
    %v3688 = vpack.c.bf16 %v3681, %v3680
    %v3689 = vpack.c.bf16 %v3683, %v3682
    %v3690 = vpack.c.bf16 %v3685, %v3684
    %v3691 = vpack.c.bf16 %v3687, %v3686
    %v3693 = vperm.slane %v3543, 0
    %v3707 = vunpack.c.l.b16 %v3530
    %v3708 = vunpack.c.l.b16 %v3531
    %v3709 = vunpack.c.l.b16 %v3532
    %v3710 = vunpack.c.l.b16 %v3533
    %v3711 = vunpack.c.l.b16 %v3534
    %v3712 = vunpack.c.l.b16 %v3535
    %v3713 = vunpack.c.l.b16 %v3536
    %v3714 = vunpack.c.l.b16 %v3537
    %v3715 = vunpack.c.l.b16 %v3538
    %v3716 = vunpack.c.l.b16 %v3539
    %v3717 = vunpack.c.l.b16 %v3540
    %v3718 = vunpack.c.l.b16 %v3541
    %v3719 = vpack.c.b16 %v3708, %v3707
    %v3720 = vpack.c.b16 %v3710, %v3709
    %v3721 = vpack.c.b16 %v3712, %v3711
    %v3722 = vpack.c.b16 %v3714, %v3713
    %v3723 = vpack.c.b16 %v3716, %v3715
    %v3724 = vpack.c.b16 %v3718, %v3717
    %v3732 = vsel %vm701, %v3688, 0
    %v3735 = vsel %vm701, %v3689, 0
    %v3738 = vsel %vm701, %v3690, 0
    %v3741 = vsel %vm701, %v3691, 0
    %3743 = vmatpush.bf16.msra.mxu0 0
    %3744 = vmatpush.bf16.msra.mxu0 0
    %3745 = vmatpush.bf16.msra.mxu0 %v3724
    %3746 = vmatpush.bf16.msra.mxu0 %v3723
    %3747 = vmatpush.bf16.msra.mxu0 %v3722
    %3748 = vmatpush.bf16.msra.mxu0 %v3721
    %3749 = vmatpush.bf16.msra.mxu0 %v3720
    %3750 = vmatpush.bf16.msra.mxu0 %v3719
    %3751 = vmatmul.bf16.gmra.mxu0 %v3732
    %v3752 = vpop.f32.mrf.mxu0
    %v3753 = vadd.f32 %v3693, %v3752
    %v3754 = vpop.f32.mrf.mxu0
    %v3755 = vadd.f32 %v3693, %v3754
    %3756 = vmatmul.bf16.gmra.mxu0 %v3735
    %v3757 = vpop.f32.mrf.mxu0
    %v3758 = vadd.f32 %v3693, %v3757
    %v3759 = vpop.f32.mrf.mxu0
    %v3760 = vadd.f32 %v3693, %v3759
    %3761 = vmatmul.bf16.gmra.mxu0 %v3738
    %v3762 = vpop.f32.mrf.mxu0
    %v3763 = vadd.f32 %v3693, %v3762
    %v3764 = vpop.f32.mrf.mxu0
    %v3765 = vadd.f32 %v3693, %v3764
    %3766 = vmatmul.bf16.gmra.mxu0 %v3741
    %v3767 = vpop.f32.mrf.mxu0
    %v3768 = vadd.f32 %v3693, %v3767
    %v3769 = vpop.f32.mrf.mxu0
    %v3770 = vadd.f32 %v3693, %v3769
    %3771 = vdwg.mxu0
    %v3772 = vmax.f32 %v3753, 0.0
    %v3773 = vmax.f32 %v3755, 0.0
    %v3774 = vmax.f32 %v3758, 0.0
    %v3775 = vmax.f32 %v3760, 0.0
    %v3776 = vmax.f32 %v3763, 0.0
    %v3777 = vmax.f32 %v3765, 0.0
    %v3778 = vmax.f32 %v3768, 0.0
    %v3779 = vmax.f32 %v3770, 0.0
    %s3780 = scalar_lea.vmem %s11, 144
    %v3781 = vld [vmem:[%s3780] sm:$0xf]
    %v3782 = vld [vmem:[%s3780 + $0x4] sm:$0xf]
    %v3783 = vld [vmem:[%s3780 + $0x8] sm:$0xf]
    %v3784 = vld [vmem:[%s3780 + $0xc] sm:$0xf]
    %v3785 = vld [vmem:[%s3780 + $0x10] sm:$0xf]
    %v3786 = vld [vmem:[%s3780 + $0x14] sm:$0xf]
    %v3787 = vld [vmem:[%s3780 + $0x18] sm:$0xf]
    %v3788 = vld [vmem:[%s3780 + $0x1c] sm:$0xf]
    %v3789 = vld [vmem:[%s3780 + $0x20] sm:$0xf]
    %v3790 = vld [vmem:[%s3780 + $0x24] sm:$0xf]
    %v3791 = vld [vmem:[%s3780 + $0x28] sm:$0xf]
    %v3792 = vld [vmem:[%s3780 + $0x2c] sm:$0xf]
    %s3793 = scalar_lea.vmem %s12, 3
    %v3794 = vld [vmem:[%s3793] sm:$0x1]
    %v3803 = vrot.slane %v3772, 7
    %v3804 = vrot.slane %v3773, 7
    %v3805 = vsel %vm208, %v3803, %v3804
    %v3806 = vrot.slane %v3774, 7
    %v3807 = vsel %vm208, %v3804, %v3806
    %v3808 = vrot.slane %v3775, 7
    %v3809 = vsel %vm208, %v3806, %v3808
    %v3810 = vrot.slane %v3776, 7
    %v3811 = vsel %vm208, %v3808, %v3810
    %v3812 = vrot.slane %v3777, 7
    %v3813 = vsel %vm208, %v3810, %v3812
    %v3814 = vrot.slane %v3778, 7
    %v3815 = vsel %vm208, %v3812, %v3814
    %v3816 = vrot.slane %v3779, 7
    %v3817 = vsel %vm208, %v3814, %v3816
    %v3826 = vsel %vm208, 0.0, %v3803
    %v3827 = vsel %vm241, 0.0, %v3826
    %v3828 = vsel %vm242, 0.0, %v3805
    %v3829 = vsel %vm243, 0.0, %v3807
    %v3830 = vsel %vm244, 0.0, %v3809
    %v3831 = vsel %vm245, 0.0, %v3811
    %v3832 = vsel %vm246, 0.0, %v3813
    %v3833 = vsel %vm247, 0.0, %v3815
    %v3834 = vsel %vm248, 0.0, %v3817
    %v3835 = vrot.slane %v3772, 1
    %v3836 = vrot.slane %v3773, 1
    %v3837 = vsel %vm257, %v3835, %v3836
    %v3838 = vrot.slane %v3774, 1
    %v3839 = vsel %vm257, %v3836, %v3838
    %v3840 = vrot.slane %v3775, 1
    %v3841 = vsel %vm257, %v3838, %v3840
    %v3842 = vrot.slane %v3776, 1
    %v3843 = vsel %vm257, %v3840, %v3842
    %v3844 = vrot.slane %v3777, 1
    %v3845 = vsel %vm257, %v3842, %v3844
    %v3846 = vrot.slane %v3778, 1
    %v3847 = vsel %vm257, %v3844, %v3846
    %v3848 = vrot.slane %v3779, 1
    %v3849 = vsel %vm257, %v3846, %v3848
    %v3858 = vsel %vm257, %v3848, 0.0
    %v3859 = vsel %vm290, 0.0, %v3837
    %v3860 = vsel %vm291, 0.0, %v3839
    %v3861 = vsel %vm292, 0.0, %v3841
    %v3862 = vsel %vm293, 0.0, %v3843
    %v3863 = vsel %vm294, 0.0, %v3845
    %v3864 = vsel %vm295, 0.0, %v3847
    %v3865 = vsel %vm296, 0.0, %v3849
    %v3866 = vsel %vm297, 0.0, %v3858
    %3867 = vrot.lane.b32.xlu0 %v3772, 32
    %v3868 = vpop.permute.xlu0 %3867
    %3869 = vrot.lane.b32.xlu0 %v3773, 32
    %v3870 = vpop.permute.xlu0 %3869
    %3871 = vrot.lane.b32.xlu0 %v3774, 32
    %v3872 = vpop.permute.xlu0 %3871
    %3873 = vrot.lane.b32.xlu0 %v3775, 32
    %v3874 = vpop.permute.xlu0 %3873
    %3875 = vrot.lane.b32.xlu0 %v3776, 32
    %v3876 = vpop.permute.xlu0 %3875
    %3877 = vrot.lane.b32.xlu0 %v3777, 32
    %v3878 = vpop.permute.xlu0 %3877
    %3879 = vrot.lane.b32.xlu0 %v3778, 32
    %v3880 = vpop.permute.xlu0 %3879
    %3881 = vrot.lane.b32.xlu0 %v3779, 32
    %v3882 = vpop.permute.xlu0 %3881
    %3899 = vrot.lane.b32.xlu0 %v3859, 64
    %v3900 = vpop.permute.xlu0 %3899
    %3901 = vrot.lane.b32.xlu0 %v3860, 64
    %v3902 = vpop.permute.xlu0 %3901
    %3903 = vrot.lane.b32.xlu0 %v3861, 64
    %v3904 = vpop.permute.xlu0 %3903
    %3905 = vrot.lane.b32.xlu0 %v3862, 64
    %v3906 = vpop.permute.xlu0 %3905
    %3907 = vrot.lane.b32.xlu0 %v3863, 64
    %v3908 = vpop.permute.xlu0 %3907
    %3909 = vrot.lane.b32.xlu0 %v3864, 64
    %v3910 = vpop.permute.xlu0 %3909
    %3911 = vrot.lane.b32.xlu0 %v3865, 64
    %v3912 = vpop.permute.xlu0 %3911
    %3913 = vrot.lane.b32.xlu0 %v3866, 64
    %v3914 = vpop.permute.xlu0 %3913
    %v3923 = vsel %vm371, %v3827, %v3868
    %v3924 = vsel %vm371, %v3828, %v3870
    %v3925 = vsel %vm371, %v3829, %v3872
    %v3926 = vsel %vm371, %v3830, %v3874
    %v3927 = vsel %vm371, %v3831, %v3876
    %v3928 = vsel %vm371, %v3832, %v3878
    %v3929 = vsel %vm371, %v3833, %v3880
    %v3930 = vsel %vm371, %v3834, %v3882
    %v3931 = vsel %vm649, %v3923, %v3900
    %v3932 = vsel %vm649, %v3924, %v3902
    %v3933 = vsel %vm649, %v3925, %v3904
    %v3934 = vsel %vm649, %v3926, %v3906
    %v3935 = vsel %vm649, %v3927, %v3908
    %v3936 = vsel %vm649, %v3928, %v3910
    %v3937 = vsel %vm649, %v3929, %v3912
    %v3938 = vsel %vm649, %v3930, %v3914
    %v3939 = vpack.c.bf16 %v3932, %v3931
    %v3940 = vpack.c.bf16 %v3934, %v3933
    %v3941 = vpack.c.bf16 %v3936, %v3935
    %v3942 = vpack.c.bf16 %v3938, %v3937
    %v3944 = vperm.slane %v3794, 0
    %v3958 = vunpack.c.l.b16 %v3781
    %v3959 = vunpack.c.l.b16 %v3782
    %v3960 = vunpack.c.l.b16 %v3783
    %v3961 = vunpack.c.l.b16 %v3784
    %v3962 = vunpack.c.l.b16 %v3785
    %v3963 = vunpack.c.l.b16 %v3786
    %v3964 = vunpack.c.l.b16 %v3787
    %v3965 = vunpack.c.l.b16 %v3788
    %v3966 = vunpack.c.l.b16 %v3789
    %v3967 = vunpack.c.l.b16 %v3790
    %v3968 = vunpack.c.l.b16 %v3791
    %v3969 = vunpack.c.l.b16 %v3792
    %v3970 = vpack.c.b16 %v3959, %v3958
    %v3971 = vpack.c.b16 %v3961, %v3960
    %v3972 = vpack.c.b16 %v3963, %v3962
    %v3973 = vpack.c.b16 %v3965, %v3964
    %v3974 = vpack.c.b16 %v3967, %v3966
    %v3975 = vpack.c.b16 %v3969, %v3968
    %v3983 = vsel %vm701, %v3939, 0
    %v3986 = vsel %vm701, %v3940, 0
    %v3989 = vsel %vm701, %v3941, 0
    %v3992 = vsel %vm701, %v3942, 0
    %3994 = vmatpush.bf16.msra.mxu0 0
    %3995 = vmatpush.bf16.msra.mxu0 0
    %3996 = vmatpush.bf16.msra.mxu0 %v3975
    %3997 = vmatpush.bf16.msra.mxu0 %v3974
    %3998 = vmatpush.bf16.msra.mxu0 %v3973
    %3999 = vmatpush.bf16.msra.mxu0 %v3972
    %4000 = vmatpush.bf16.msra.mxu0 %v3971
    %4001 = vmatpush.bf16.msra.mxu0 %v3970
    %4002 = vmatmul.bf16.gmra.mxu0 %v3983
    %v4003 = vpop.f32.mrf.mxu0
    %v4004 = vadd.f32 %v3944, %v4003
    %v4005 = vpop.f32.mrf.mxu0
    %v4006 = vadd.f32 %v3944, %v4005
    %4007 = vmatmul.bf16.gmra.mxu0 %v3986
    %v4008 = vpop.f32.mrf.mxu0
    %v4009 = vadd.f32 %v3944, %v4008
    %v4010 = vpop.f32.mrf.mxu0
    %v4011 = vadd.f32 %v3944, %v4010
    %4012 = vmatmul.bf16.gmra.mxu0 %v3989
    %v4013 = vpop.f32.mrf.mxu0
    %v4014 = vadd.f32 %v3944, %v4013
    %v4015 = vpop.f32.mrf.mxu0
    %v4016 = vadd.f32 %v3944, %v4015
    %4017 = vmatmul.bf16.gmra.mxu0 %v3992
    %v4018 = vpop.f32.mrf.mxu0
    %v4019 = vadd.f32 %v3944, %v4018
    %v4020 = vpop.f32.mrf.mxu0
    %v4021 = vadd.f32 %v3944, %v4020
    %4022 = vdwg.mxu0
    %v4023 = vmax.f32 %v4004, 0.0
    %v4024 = vmax.f32 %v4006, 0.0
    %v4025 = vmax.f32 %v4009, 0.0
    %v4026 = vmax.f32 %v4011, 0.0
    %v4027 = vmax.f32 %v4014, 0.0
    %v4028 = vmax.f32 %v4016, 0.0
    %v4029 = vmax.f32 %v4019, 0.0
    %v4030 = vmax.f32 %v4021, 0.0
    %v4031 = vpack.c.bf16 %v4024, %v4023
    %v4032 = vpack.c.bf16 %v4026, %v4025
    %v4033 = vpack.c.bf16 %v4028, %v4027
    %v4034 = vpack.c.bf16 %v4030, %v4029
    %4036 = vset.pattern.permute.xlu0 0
    %4037 = vperm.xlu0 %4036, %v2976
    %v4038 = vpop.permute.xlu0 %4037
    %4041 = vset.pattern.permute.xlu0 0
    %4042 = vperm.xlu0 %4041, %v2977
    %v4043 = vpop.permute.xlu0 %4042
    %4046 = vset.pattern.permute.xlu0 0
    %4047 = vperm.xlu0 %4046, %v2978
    %v4048 = vpop.permute.xlu0 %4047
    %4051 = vset.pattern.permute.xlu0 0
    %4052 = vperm.xlu0 %4051, %v2979
    %v4053 = vpop.permute.xlu0 %4052
    %4056 = vset.pattern.permute.xlu0 0
    %4057 = vperm.xlu0 %4056, %v2980
    %v4058 = vpop.permute.xlu0 %4057
    %4061 = vset.pattern.permute.xlu0 0
    %4062 = vperm.xlu0 %4061, %v2981
    %v4063 = vpop.permute.xlu0 %4062
    %4066 = vset.pattern.permute.xlu0 0
    %4067 = vperm.xlu0 %4066, %v2982
    %v4068 = vpop.permute.xlu0 %4067
    %4071 = vset.pattern.permute.xlu0 0
    %4072 = vperm.xlu0 %4071, %v2983
    %v4073 = vpop.permute.xlu0 %4072
    %4076 = vset.pattern.permute.xlu0 0
    %4077 = vperm.xlu0 %4076, %v2984
    %v4078 = vpop.permute.xlu0 %4077
    %4081 = vset.pattern.permute.xlu0 0
    %4082 = vperm.xlu0 %4081, %v2985
    %v4083 = vpop.permute.xlu0 %4082
    %4086 = vset.pattern.permute.xlu0 0
    %4087 = vperm.xlu0 %4086, %v2986
    %v4088 = vpop.permute.xlu0 %4087
    %4091 = vset.pattern.permute.xlu0 0
    %4092 = vperm.xlu0 %4091, %v2987
    %v4093 = vpop.permute.xlu0 %4092
    %4096 = vset.pattern.permute.xlu0 0
    %4097 = vperm.xlu0 %4096, %v2988
    %v4098 = vpop.permute.xlu0 %4097
    %4101 = vset.pattern.permute.xlu0 0
    %4102 = vperm.xlu0 %4101, %v2989
    %v4103 = vpop.permute.xlu0 %4102
    %4106 = vset.pattern.permute.xlu0 0
    %4107 = vperm.xlu0 %4106, %v2990
    %v4108 = vpop.permute.xlu0 %4107
    %4111 = vset.pattern.permute.xlu0 0
    %4112 = vperm.xlu0 %4111, %v2991
    %v4113 = vpop.permute.xlu0 %4112
    %v4131 = vunpack.c.l.b16 %v2960
    %v4132 = vunpack.c.l.b16 %v2961
    %v4133 = vunpack.c.l.b16 %v2962
    %v4134 = vunpack.c.l.b16 %v2963
    %v4135 = vunpack.c.l.b16 %v2964
    %v4136 = vunpack.c.l.b16 %v2965
    %v4137 = vunpack.c.l.b16 %v2966
    %v4138 = vunpack.c.l.b16 %v2967
    %v4139 = vunpack.c.l.b16 %v2968
    %v4140 = vunpack.c.l.b16 %v2969
    %v4141 = vunpack.c.l.b16 %v2970
    %v4142 = vunpack.c.l.b16 %v2971
    %v4143 = vunpack.c.l.b16 %v2972
    %v4144 = vunpack.c.l.b16 %v2973
    %v4145 = vunpack.c.l.b16 %v2974
    %v4146 = vunpack.c.l.b16 %v2975
    %v4147 = vpack.c.b16 %v4132, %v4131
    %v4148 = vpack.c.b16 %v4134, %v4133
    %v4149 = vpack.c.b16 %v4136, %v4135
    %v4150 = vpack.c.b16 %v4138, %v4137
    %v4151 = vpack.c.b16 %v4140, %v4139
    %v4152 = vpack.c.b16 %v4142, %v4141
    %v4153 = vpack.c.b16 %v4144, %v4143
    %v4154 = vpack.c.b16 %v4146, %v4145
    %v4156 = vsel %vm649, %v4147, 0
    %v4159 = vsel %vm649, %v4148, 0
    %v4162 = vsel %vm649, %v4149, 0
    %v4165 = vsel %vm649, %v4150, 0
    %v4168 = vsel %vm649, %v4151, 0
    %v4171 = vsel %vm649, %v4152, 0
    %v4174 = vsel %vm649, %v4153, 0
    %v4177 = vsel %vm649, %v4154, 0
    %4179 = vmatpush.bf16.msra.mxu0 0
    %4180 = vmatpush.bf16.msra.mxu0 0
    %4181 = vmatpush.bf16.msra.mxu0 0
    %4182 = vmatpush.bf16.msra.mxu0 0
    %4183 = vmatpush.bf16.msra.mxu0 %v4034
    %4184 = vmatpush.bf16.msra.mxu0 %v4033
    %4185 = vmatpush.bf16.msra.mxu0 %v4032
    %4186 = vmatpush.bf16.msra.mxu0 %v4031
    %4187 = vmatmul.bf16.gmra.mxu0 %v4156
    %v4188 = vpop.f32.mrf.mxu0
    %v4189 = vadd.f32 %v4038, %v4188
    %v4190 = vpop.f32.mrf.mxu0
    %v4191 = vadd.f32 %v4043, %v4190
    %4192 = vmatmul.bf16.gmra.mxu0 %v4159
    %v4193 = vpop.f32.mrf.mxu0
    %v4194 = vadd.f32 %v4048, %v4193
    %v4195 = vpop.f32.mrf.mxu0
    %v4196 = vadd.f32 %v4053, %v4195
    %4197 = vmatmul.bf16.gmra.mxu0 %v4162
    %v4198 = vpop.f32.mrf.mxu0
    %v4199 = vadd.f32 %v4058, %v4198
    %v4200 = vpop.f32.mrf.mxu0
    %v4201 = vadd.f32 %v4063, %v4200
    %4202 = vmatmul.bf16.gmra.mxu0 %v4165
    %v4203 = vpop.f32.mrf.mxu0
    %v4204 = vadd.f32 %v4068, %v4203
    %v4205 = vpop.f32.mrf.mxu0
    %v4206 = vadd.f32 %v4073, %v4205
    %4207 = vmatmul.bf16.gmra.mxu0 %v4168
    %v4208 = vpop.f32.mrf.mxu0
    %v4209 = vadd.f32 %v4078, %v4208
    %v4210 = vpop.f32.mrf.mxu0
    %v4211 = vadd.f32 %v4083, %v4210
    %4212 = vmatmul.bf16.gmra.mxu0 %v4171
    %v4213 = vpop.f32.mrf.mxu0
    %v4214 = vadd.f32 %v4088, %v4213
    %v4215 = vpop.f32.mrf.mxu0
    %v4216 = vadd.f32 %v4093, %v4215
    %4217 = vmatmul.bf16.gmra.mxu0 %v4174
    %v4218 = vpop.f32.mrf.mxu0
    %v4219 = vadd.f32 %v4098, %v4218
    %v4220 = vpop.f32.mrf.mxu0
    %v4221 = vadd.f32 %v4103, %v4220
    %4222 = vmatmul.bf16.gmra.mxu0 %v4177
    %v4223 = vpop.f32.mrf.mxu0
    %v4224 = vadd.f32 %v4108, %v4223
    %v4225 = vpop.f32.mrf.mxu0
    %v4226 = vadd.f32 %v4113, %v4225
    %4227 = vdwg.mxu0
    %v4228 = vmax.f32 %v4189, 0.0
    %v4229 = vmax.f32 %v4191, 0.0
    %v4230 = vmax.f32 %v4194, 0.0
    %v4231 = vmax.f32 %v4196, 0.0
    %v4232 = vmax.f32 %v4199, 0.0
    %v4233 = vmax.f32 %v4201, 0.0
    %v4234 = vmax.f32 %v4204, 0.0
    %v4235 = vmax.f32 %v4206, 0.0
    %v4236 = vmax.f32 %v4209, 0.0
    %v4237 = vmax.f32 %v4211, 0.0
    %v4238 = vmax.f32 %v4214, 0.0
    %v4239 = vmax.f32 %v4216, 0.0
    %v4240 = vmax.f32 %v4219, 0.0
    %v4241 = vmax.f32 %v4221, 0.0
    %v4242 = vmax.f32 %v4224, 0.0
    %v4243 = vmax.f32 %v4226, 0.0
    %v4244 = vpack.c.bf16 %v4229, %v4228
    %v4245 = vpack.c.bf16 %v4231, %v4230
    %v4246 = vpack.c.bf16 %v4233, %v4232
    %v4247 = vpack.c.bf16 %v4235, %v4234
    %v4248 = vpack.c.bf16 %v4237, %v4236
    %v4249 = vpack.c.bf16 %v4239, %v4238
    %v4250 = vpack.c.bf16 %v4241, %v4240
    %v4251 = vpack.c.bf16 %v4243, %v4242
    %4253 = vset.pattern.permute.xlu0 0
    %4254 = vperm.xlu0 %4253, %v3008
    %v4255 = vpop.permute.xlu0 %4254
    %4258 = vset.pattern.permute.xlu0 0
    %4259 = vperm.xlu0 %4258, %v3009
    %v4260 = vpop.permute.xlu0 %4259
    %4263 = vset.pattern.permute.xlu0 0
    %4264 = vperm.xlu0 %4263, %v3010
    %v4265 = vpop.permute.xlu0 %4264
    %4268 = vset.pattern.permute.xlu0 0
    %4269 = vperm.xlu0 %4268, %v3011
    %v4270 = vpop.permute.xlu0 %4269
    %4273 = vset.pattern.permute.xlu0 0
    %4274 = vperm.xlu0 %4273, %v3012
    %v4275 = vpop.permute.xlu0 %4274
    %4278 = vset.pattern.permute.xlu0 0
    %4279 = vperm.xlu0 %4278, %v3013
    %v4280 = vpop.permute.xlu0 %4279
    %4283 = vset.pattern.permute.xlu0 0
    %4284 = vperm.xlu0 %4283, %v3014
    %v4285 = vpop.permute.xlu0 %4284
    %4288 = vset.pattern.permute.xlu0 0
    %4289 = vperm.xlu0 %4288, %v3015
    %v4290 = vpop.permute.xlu0 %4289
    %4293 = vset.pattern.permute.xlu0 0
    %4294 = vperm.xlu0 %4293, %v3016
    %v4295 = vpop.permute.xlu0 %4294
    %4298 = vset.pattern.permute.xlu0 0
    %4299 = vperm.xlu0 %4298, %v3017
    %v4300 = vpop.permute.xlu0 %4299
    %4303 = vset.pattern.permute.xlu0 0
    %4304 = vperm.xlu0 %4303, %v3018
    %v4305 = vpop.permute.xlu0 %4304
    %4308 = vset.pattern.permute.xlu0 0
    %4309 = vperm.xlu0 %4308, %v3019
    %v4310 = vpop.permute.xlu0 %4309
    %4313 = vset.pattern.permute.xlu0 0
    %4314 = vperm.xlu0 %4313, %v3020
    %v4315 = vpop.permute.xlu0 %4314
    %4318 = vset.pattern.permute.xlu0 0
    %4319 = vperm.xlu0 %4318, %v3021
    %v4320 = vpop.permute.xlu0 %4319
    %4323 = vset.pattern.permute.xlu0 0
    %4324 = vperm.xlu0 %4323, %v3022
    %v4325 = vpop.permute.xlu0 %4324
    %4328 = vset.pattern.permute.xlu0 0
    %4329 = vperm.xlu0 %4328, %v3023
    %v4330 = vpop.permute.xlu0 %4329
    %v4348 = vunpack.c.l.b16 %v2992
    %v4349 = vunpack.c.l.b16 %v2993
    %v4350 = vunpack.c.l.b16 %v2994
    %v4351 = vunpack.c.l.b16 %v2995
    %v4352 = vunpack.c.l.b16 %v2996
    %v4353 = vunpack.c.l.b16 %v2997
    %v4354 = vunpack.c.l.b16 %v2998
    %v4355 = vunpack.c.l.b16 %v2999
    %v4356 = vunpack.c.l.b16 %v3000
    %v4357 = vunpack.c.l.b16 %v3001
    %v4358 = vunpack.c.l.b16 %v3002
    %v4359 = vunpack.c.l.b16 %v3003
    %v4360 = vunpack.c.l.b16 %v3004
    %v4361 = vunpack.c.l.b16 %v3005
    %v4362 = vunpack.c.l.b16 %v3006
    %v4363 = vunpack.c.l.b16 %v3007
    %v4364 = vpack.c.b16 %v4349, %v4348
    %v4365 = vpack.c.b16 %v4351, %v4350
    %v4366 = vpack.c.b16 %v4353, %v4352
    %v4367 = vpack.c.b16 %v4355, %v4354
    %v4368 = vpack.c.b16 %v4357, %v4356
    %v4369 = vpack.c.b16 %v4359, %v4358
    %v4370 = vpack.c.b16 %v4361, %v4360
    %v4371 = vpack.c.b16 %v4363, %v4362
    %4380 = vmatpush.bf16.msra.mxu0 %v4251
    %4381 = vmatpush.bf16.msra.mxu0 %v4250
    %4382 = vmatpush.bf16.msra.mxu0 %v4249
    %4383 = vmatpush.bf16.msra.mxu0 %v4248
    %4384 = vmatpush.bf16.msra.mxu0 %v4247
    %4385 = vmatpush.bf16.msra.mxu0 %v4246
    %4386 = vmatpush.bf16.msra.mxu0 %v4245
    %4387 = vmatpush.bf16.msra.mxu0 %v4244
    %4388 = vmatmul.bf16.gmra.mxu0 %v4364
    %v4389 = vpop.f32.mrf.mxu0
    %v4390 = vadd.f32 %v4255, %v4389
    %v4391 = vpop.f32.mrf.mxu0
    %v4392 = vadd.f32 %v4260, %v4391
    %4393 = vmatmul.bf16.gmra.mxu0 %v4365
    %v4394 = vpop.f32.mrf.mxu0
    %v4395 = vadd.f32 %v4265, %v4394
    %v4396 = vpop.f32.mrf.mxu0
    %v4397 = vadd.f32 %v4270, %v4396
    %4398 = vmatmul.bf16.gmra.mxu0 %v4366
    %v4399 = vpop.f32.mrf.mxu0
    %v4400 = vadd.f32 %v4275, %v4399
    %v4401 = vpop.f32.mrf.mxu0
    %v4402 = vadd.f32 %v4280, %v4401
    %4403 = vmatmul.bf16.gmra.mxu0 %v4367
    %v4404 = vpop.f32.mrf.mxu0
    %v4405 = vadd.f32 %v4285, %v4404
    %v4406 = vpop.f32.mrf.mxu0
    %v4407 = vadd.f32 %v4290, %v4406
    %4408 = vmatmul.bf16.gmra.mxu0 %v4368
    %v4409 = vpop.f32.mrf.mxu0
    %v4410 = vadd.f32 %v4295, %v4409
    %v4411 = vpop.f32.mrf.mxu0
    %v4412 = vadd.f32 %v4300, %v4411
    %4413 = vmatmul.bf16.gmra.mxu0 %v4369
    %v4414 = vpop.f32.mrf.mxu0
    %v4415 = vadd.f32 %v4305, %v4414
    %v4416 = vpop.f32.mrf.mxu0
    %v4417 = vadd.f32 %v4310, %v4416
    %4418 = vmatmul.bf16.gmra.mxu0 %v4370
    %v4419 = vpop.f32.mrf.mxu0
    %v4420 = vadd.f32 %v4315, %v4419
    %v4421 = vpop.f32.mrf.mxu0
    %v4422 = vadd.f32 %v4320, %v4421
    %4423 = vmatmul.bf16.gmra.mxu0 %v4371
    %v4424 = vpop.f32.mrf.mxu0
    %v4425 = vadd.f32 %v4325, %v4424
    %v4426 = vpop.f32.mrf.mxu0
    %v4427 = vadd.f32 %v4330, %v4426
    %4428 = vdwg.mxu0
    %v4429 = vmax.f32 %v4410, 0.0
    %v4430 = vmax.f32 %v4412, 0.0
    %v4431 = vmax.f32 %v4415, 0.0
    %v4432 = vmax.f32 %v4417, 0.0
    %v4433 = vmax.f32 %v4420, 0.0
    %v4434 = vmax.f32 %v4422, 0.0
    %v4435 = vmax.f32 %v4425, 0.0
    %v4436 = vmax.f32 %v4427, 0.0
    %v4437 = vsel %vm371, %v4429, -inf
    %v4438 = vrot.slane %v4437, 4
    %v4439 = vmax.f32 %v4437, %v4438
    %v4440 = vrot.slane %v4439, 2
    %v4441 = vmax.f32 %v4439, %v4440
    %v4442 = vrot.slane %v4441, 1
    %v4443 = vmax.f32 %v4441, %v4442
    %v4444 = vsel %vm371, %v4430, -inf
    %v4445 = vrot.slane %v4444, 4
    %v4446 = vmax.f32 %v4444, %v4445
    %v4447 = vrot.slane %v4446, 2
    %v4448 = vmax.f32 %v4446, %v4447
    %v4449 = vrot.slane %v4448, 1
    %v4450 = vmax.f32 %v4448, %v4449
    %v4451 = vsel %vm371, %v4431, -inf
    %v4452 = vrot.slane %v4451, 4
    %v4453 = vmax.f32 %v4451, %v4452
    %v4454 = vrot.slane %v4453, 2
    %v4455 = vmax.f32 %v4453, %v4454
    %v4456 = vrot.slane %v4455, 1
    %v4457 = vmax.f32 %v4455, %v4456
    %v4458 = vsel %vm371, %v4432, -inf
    %v4459 = vrot.slane %v4458, 4
    %v4460 = vmax.f32 %v4458, %v4459
    %v4461 = vrot.slane %v4460, 2
    %v4462 = vmax.f32 %v4460, %v4461
    %v4463 = vrot.slane %v4462, 1
    %v4464 = vmax.f32 %v4462, %v4463
    %v4465 = vsel %vm371, %v4433, -inf
    %v4466 = vrot.slane %v4465, 4
    %v4467 = vmax.f32 %v4465, %v4466
    %v4468 = vrot.slane %v4467, 2
    %v4469 = vmax.f32 %v4467, %v4468
    %v4470 = vrot.slane %v4469, 1
    %v4471 = vmax.f32 %v4469, %v4470
    %v4472 = vsel %vm371, %v4434, -inf
    %v4473 = vrot.slane %v4472, 4
    %v4474 = vmax.f32 %v4472, %v4473
    %v4475 = vrot.slane %v4474, 2
    %v4476 = vmax.f32 %v4474, %v4475
    %v4477 = vrot.slane %v4476, 1
    %v4478 = vmax.f32 %v4476, %v4477
    %v4479 = vsel %vm371, %v4435, -inf
    %v4480 = vrot.slane %v4479, 4
    %v4481 = vmax.f32 %v4479, %v4480
    %v4482 = vrot.slane %v4481, 2
    %v4483 = vmax.f32 %v4481, %v4482
    %v4484 = vrot.slane %v4483, 1
    %v4485 = vmax.f32 %v4483, %v4484
    %v4486 = vsel %vm371, %v4436, -inf
    %v4487 = vrot.slane %v4486, 4
    %v4488 = vmax.f32 %v4486, %v4487
    %v4489 = vrot.slane %v4488, 2
    %v4490 = vmax.f32 %v4488, %v4489
    %v4491 = vrot.slane %v4490, 1
    %v4492 = vmax.f32 %v4490, %v4491
    %v4493 = vpack.c.bf16 %v4443, %v4443
    %v4494 = vpack.c.bf16 %v4450, %v4450
    %v4495 = vpack.c.bf16 %v4457, %v4457
    %v4496 = vpack.c.bf16 %v4464, %v4464
    %v4497 = vpack.c.bf16 %v4471, %v4471
    %v4498 = vpack.c.bf16 %v4478, %v4478
    %v4499 = vpack.c.bf16 %v4485, %v4485
    %v4500 = vpack.c.bf16 %v4492, %v4492
    %v4502 = vperm.slane %v3028, 0
    %v4512 = vunpack.c.l.b16 %v4493
    %v4513 = vunpack.c.l.b16 %v4494
    %v4514 = vunpack.c.l.b16 %v4495
    %v4515 = vunpack.c.l.b16 %v4496
    %v4516 = vunpack.c.l.b16 %v4497
    %v4517 = vunpack.c.l.b16 %v4498
    %v4518 = vunpack.c.l.b16 %v4499
    %v4519 = vunpack.c.l.b16 %v4500
    %v4520 = vsel %vm1905, %v4513, %v4512
    %v4521 = vsel %vm1907, %v4514, %v4520
    %v4522 = vsel %vm1909, %v4515, %v4521
    %v4523 = vsel %vm1911, %v4516, %v4522
    %v4524 = vsel %vm1913, %v4517, %v4523
    %v4525 = vsel %vm1915, %v4518, %v4524
    %v4526 = vsel %vm1917, %v4519, %v4525
    %v4527 = vpack.c.b16 %v4526, %v4526
    %v4532 = vunpack.c.l.b16 %v3024
    %v4533 = vunpack.c.l.b16 %v3025
    %v4534 = vunpack.c.l.b16 %v3026
    %v4535 = vunpack.c.l.b16 %v3027
    %v4536 = vpack.c.b16 %v4533, %v4532
    %v4537 = vpack.c.b16 %v4535, %v4534
    %v4541 = vsel %vm371, %v4527, 0
    %4543 = vmatpush.bf16.msra.mxu0 0
    %4544 = vmatpush.bf16.msra.mxu0 0
    %4545 = vmatpush.bf16.msra.mxu0 0
    %4546 = vmatpush.bf16.msra.mxu0 0
    %4547 = vmatpush.bf16.msra.mxu0 0
    %4548 = vmatpush.bf16.msra.mxu0 0
    %4549 = vmatpush.bf16.msra.mxu0 %v4537
    %4550 = vmatpush.bf16.msra.mxu0 %v4536
    %4551 = vmatmul.bf16.gmra.mxu0 %v4541
    %v4552 = vpop.f32.mrf.mxu0
    %v4553 = vadd.f32 %v4502, %v4552
    %v4554 = vpop.f32.mrf.mxu0
    %4555 = vdwg.mxu0
    %v4556 = vsub.f32 %v2951, %v4390
    %v4557 = vsub.f32 %v2952, %v4392
    %v4558 = vsub.f32 %v2953, %v4395
    %v4559 = vsub.f32 %v2954, %v4397
    %v4560 = vsub.f32 %v2955, %v4400
    %v4561 = vsub.f32 %v2956, %v4402
    %v4562 = vsub.f32 %v2957, %v4405
    %v4563 = vsub.f32 %v2958, %v4407
    %v4564 = vadd.f32 %v2959, %v4553
    %v4573 = vrot.slane %v4556, 7
    %v4574 = vrot.slane %v4557, 7
    %v4575 = vsel %vm208, %v4573, %v4574
    %v4576 = vrot.slane %v4558, 7
    %v4577 = vsel %vm208, %v4574, %v4576
    %v4578 = vrot.slane %v4559, 7
    %v4579 = vsel %vm208, %v4576, %v4578
    %v4580 = vrot.slane %v4560, 7
    %v4581 = vsel %vm208, %v4578, %v4580
    %v4582 = vrot.slane %v4561, 7
    %v4583 = vsel %vm208, %v4580, %v4582
    %v4584 = vrot.slane %v4562, 7
    %v4585 = vsel %vm208, %v4582, %v4584
    %v4586 = vrot.slane %v4563, 7
    %v4587 = vsel %vm208, %v4584, %v4586
    %v4596 = vsel %vm208, 0.0, %v4573
    %v4597 = vsel %vm241, 0.0, %v4596
    %v4598 = vsel %vm242, 0.0, %v4575
    %v4599 = vsel %vm243, 0.0, %v4577
    %v4600 = vsel %vm244, 0.0, %v4579
    %v4601 = vsel %vm245, 0.0, %v4581
    %v4602 = vsel %vm246, 0.0, %v4583
    %v4603 = vsel %vm247, 0.0, %v4585
    %v4604 = vsel %vm248, 0.0, %v4587
    %v4605 = vrot.slane %v4556, 1
    %v4606 = vrot.slane %v4557, 1
    %v4607 = vsel %vm257, %v4605, %v4606
    %v4608 = vrot.slane %v4558, 1
    %v4609 = vsel %vm257, %v4606, %v4608
    %v4610 = vrot.slane %v4559, 1
    %v4611 = vsel %vm257, %v4608, %v4610
    %v4612 = vrot.slane %v4560, 1
    %v4613 = vsel %vm257, %v4610, %v4612
    %v4614 = vrot.slane %v4561, 1
    %v4615 = vsel %vm257, %v4612, %v4614
    %v4616 = vrot.slane %v4562, 1
    %v4617 = vsel %vm257, %v4614, %v4616
    %v4618 = vrot.slane %v4563, 1
    %v4619 = vsel %vm257, %v4616, %v4618
    %v4628 = vsel %vm257, %v4618, 0.0
    %v4629 = vsel %vm290, 0.0, %v4607
    %v4630 = vsel %vm291, 0.0, %v4609
    %v4631 = vsel %vm292, 0.0, %v4611
    %v4632 = vsel %vm293, 0.0, %v4613
    %v4633 = vsel %vm294, 0.0, %v4615
    %v4634 = vsel %vm295, 0.0, %v4617
    %v4635 = vsel %vm296, 0.0, %v4619
    %v4636 = vsel %vm297, 0.0, %v4628
    %4637 = vrot.lane.b32.xlu0 %v4556, 32
    %v4638 = vpop.permute.xlu0 %4637
    %4639 = vrot.lane.b32.xlu0 %v4557, 32
    %v4640 = vpop.permute.xlu0 %4639
    %4641 = vrot.lane.b32.xlu0 %v4558, 32
    %v4642 = vpop.permute.xlu0 %4641
    %4643 = vrot.lane.b32.xlu0 %v4559, 32
    %v4644 = vpop.permute.xlu0 %4643
    %4645 = vrot.lane.b32.xlu0 %v4560, 32
    %v4646 = vpop.permute.xlu0 %4645
    %4647 = vrot.lane.b32.xlu0 %v4561, 32
    %v4648 = vpop.permute.xlu0 %4647
    %4649 = vrot.lane.b32.xlu0 %v4562, 32
    %v4650 = vpop.permute.xlu0 %4649
    %4651 = vrot.lane.b32.xlu0 %v4563, 32
    %v4652 = vpop.permute.xlu0 %4651
    %4669 = vrot.lane.b32.xlu0 %v4629, 64
    %v4670 = vpop.permute.xlu0 %4669
    %4671 = vrot.lane.b32.xlu0 %v4630, 64
    %v4672 = vpop.permute.xlu0 %4671
    %4673 = vrot.lane.b32.xlu0 %v4631, 64
    %v4674 = vpop.permute.xlu0 %4673
    %4675 = vrot.lane.b32.xlu0 %v4632, 64
    %v4676 = vpop.permute.xlu0 %4675
    %4677 = vrot.lane.b32.xlu0 %v4633, 64
    %v4678 = vpop.permute.xlu0 %4677
    %4679 = vrot.lane.b32.xlu0 %v4634, 64
    %v4680 = vpop.permute.xlu0 %4679
    %4681 = vrot.lane.b32.xlu0 %v4635, 64
    %v4682 = vpop.permute.xlu0 %4681
    %4683 = vrot.lane.b32.xlu0 %v4636, 64
    %v4684 = vpop.permute.xlu0 %4683
    %v4693 = vsel %vm371, %v4597, %v4638
    %v4694 = vsel %vm371, %v4598, %v4640
    %v4695 = vsel %vm371, %v4599, %v4642
    %v4696 = vsel %vm371, %v4600, %v4644
    %v4697 = vsel %vm371, %v4601, %v4646
    %v4698 = vsel %vm371, %v4602, %v4648
    %v4699 = vsel %vm371, %v4603, %v4650
    %v4700 = vsel %vm371, %v4604, %v4652
    %v4701 = vsel %vm649, %v4693, %v4670
    %v4702 = vsel %vm649, %v4694, %v4672
    %v4703 = vsel %vm649, %v4695, %v4674
    %v4704 = vsel %vm649, %v4696, %v4676
    %v4705 = vsel %vm649, %v4697, %v4678
    %v4706 = vsel %vm649, %v4698, %v4680
    %v4707 = vsel %vm649, %v4699, %v4682
    %v4708 = vsel %vm649, %v4700, %v4684
    %v4709 = vpack.c.bf16 %v4702, %v4701
    %v4710 = vpack.c.bf16 %v4704, %v4703
    %v4711 = vpack.c.bf16 %v4706, %v4705
    %v4712 = vpack.c.bf16 %v4708, %v4707
    %v4714 = vsel %vm701, %v4709, 0
    %v4717 = vsel %vm701, %v4710, 0
    %v4720 = vsel %vm701, %v4711, 0
    %v4723 = vsel %vm701, %v4712, 0
    %4725 = vmatpush.bf16.msra.mxu0 0
    %4726 = vmatpush.bf16.msra.mxu0 0
    %4727 = vmatpush.bf16.msra.mxu0 %v3222
    %4728 = vmatpush.bf16.msra.mxu0 %v3221
    %4729 = vmatpush.bf16.msra.mxu0 %v3220
    %4730 = vmatpush.bf16.msra.mxu0 %v3219
    %4731 = vmatpush.bf16.msra.mxu0 %v3218
    %4732 = vmatpush.bf16.msra.mxu0 %v3217
    %4733 = vmatmul.bf16.gmra.mxu0 %v4714
    %v4734 = vpop.f32.mrf.mxu0
    %v4735 = vadd.f32 %v3191, %v4734
    %v4736 = vpop.f32.mrf.mxu0
    %v4737 = vadd.f32 %v3191, %v4736
    %4738 = vmatmul.bf16.gmra.mxu0 %v4717
    %v4739 = vpop.f32.mrf.mxu0
    %v4740 = vadd.f32 %v3191, %v4739
    %v4741 = vpop.f32.mrf.mxu0
    %v4742 = vadd.f32 %v3191, %v4741
    %4743 = vmatmul.bf16.gmra.mxu0 %v4720
    %v4744 = vpop.f32.mrf.mxu0
    %v4745 = vadd.f32 %v3191, %v4744
    %v4746 = vpop.f32.mrf.mxu0
    %v4747 = vadd.f32 %v3191, %v4746
    %4748 = vmatmul.bf16.gmra.mxu0 %v4723
    %v4749 = vpop.f32.mrf.mxu0
    %v4750 = vadd.f32 %v3191, %v4749
    %v4751 = vpop.f32.mrf.mxu0
    %v4752 = vadd.f32 %v3191, %v4751
    %4753 = vdwg.mxu0
    %v4754 = vmax.f32 %v4735, 0.0
    %v4755 = vmax.f32 %v4737, 0.0
    %v4756 = vmax.f32 %v4740, 0.0
    %v4757 = vmax.f32 %v4742, 0.0
    %v4758 = vmax.f32 %v4745, 0.0
    %v4759 = vmax.f32 %v4747, 0.0
    %v4760 = vmax.f32 %v4750, 0.0
    %v4761 = vmax.f32 %v4752, 0.0
    %v4770 = vrot.slane %v4754, 7
    %v4771 = vrot.slane %v4755, 7
    %v4772 = vsel %vm208, %v4770, %v4771
    %v4773 = vrot.slane %v4756, 7
    %v4774 = vsel %vm208, %v4771, %v4773
    %v4775 = vrot.slane %v4757, 7
    %v4776 = vsel %vm208, %v4773, %v4775
    %v4777 = vrot.slane %v4758, 7
    %v4778 = vsel %vm208, %v4775, %v4777
    %v4779 = vrot.slane %v4759, 7
    %v4780 = vsel %vm208, %v4777, %v4779
    %v4781 = vrot.slane %v4760, 7
    %v4782 = vsel %vm208, %v4779, %v4781
    %v4783 = vrot.slane %v4761, 7
    %v4784 = vsel %vm208, %v4781, %v4783
    %v4793 = vsel %vm208, 0.0, %v4770
    %v4794 = vsel %vm241, 0.0, %v4793
    %v4795 = vsel %vm242, 0.0, %v4772
    %v4796 = vsel %vm243, 0.0, %v4774
    %v4797 = vsel %vm244, 0.0, %v4776
    %v4798 = vsel %vm245, 0.0, %v4778
    %v4799 = vsel %vm246, 0.0, %v4780
    %v4800 = vsel %vm247, 0.0, %v4782
    %v4801 = vsel %vm248, 0.0, %v4784
    %v4802 = vrot.slane %v4754, 1
    %v4803 = vrot.slane %v4755, 1
    %v4804 = vsel %vm257, %v4802, %v4803
    %v4805 = vrot.slane %v4756, 1
    %v4806 = vsel %vm257, %v4803, %v4805
    %v4807 = vrot.slane %v4757, 1
    %v4808 = vsel %vm257, %v4805, %v4807
    %v4809 = vrot.slane %v4758, 1
    %v4810 = vsel %vm257, %v4807, %v4809
    %v4811 = vrot.slane %v4759, 1
    %v4812 = vsel %vm257, %v4809, %v4811
    %v4813 = vrot.slane %v4760, 1
    %v4814 = vsel %vm257, %v4811, %v4813
    %v4815 = vrot.slane %v4761, 1
    %v4816 = vsel %vm257, %v4813, %v4815
    %v4825 = vsel %vm257, %v4815, 0.0
    %v4826 = vsel %vm290, 0.0, %v4804
    %v4827 = vsel %vm291, 0.0, %v4806
    %v4828 = vsel %vm292, 0.0, %v4808
    %v4829 = vsel %vm293, 0.0, %v4810
    %v4830 = vsel %vm294, 0.0, %v4812
    %v4831 = vsel %vm295, 0.0, %v4814
    %v4832 = vsel %vm296, 0.0, %v4816
    %v4833 = vsel %vm297, 0.0, %v4825
    %4834 = vrot.lane.b32.xlu0 %v4754, 32
    %v4835 = vpop.permute.xlu0 %4834
    %4836 = vrot.lane.b32.xlu0 %v4755, 32
    %v4837 = vpop.permute.xlu0 %4836
    %4838 = vrot.lane.b32.xlu0 %v4756, 32
    %v4839 = vpop.permute.xlu0 %4838
    %4840 = vrot.lane.b32.xlu0 %v4757, 32
    %v4841 = vpop.permute.xlu0 %4840
    %4842 = vrot.lane.b32.xlu0 %v4758, 32
    %v4843 = vpop.permute.xlu0 %4842
    %4844 = vrot.lane.b32.xlu0 %v4759, 32
    %v4845 = vpop.permute.xlu0 %4844
    %4846 = vrot.lane.b32.xlu0 %v4760, 32
    %v4847 = vpop.permute.xlu0 %4846
    %4848 = vrot.lane.b32.xlu0 %v4761, 32
    %v4849 = vpop.permute.xlu0 %4848
    %4866 = vrot.lane.b32.xlu0 %v4826, 64
    %v4867 = vpop.permute.xlu0 %4866
    %4868 = vrot.lane.b32.xlu0 %v4827, 64
    %v4869 = vpop.permute.xlu0 %4868
    %4870 = vrot.lane.b32.xlu0 %v4828, 64
    %v4871 = vpop.permute.xlu0 %4870
    %4872 = vrot.lane.b32.xlu0 %v4829, 64
    %v4873 = vpop.permute.xlu0 %4872
    %4874 = vrot.lane.b32.xlu0 %v4830, 64
    %v4875 = vpop.permute.xlu0 %4874
    %4876 = vrot.lane.b32.xlu0 %v4831, 64
    %v4877 = vpop.permute.xlu0 %4876
    %4878 = vrot.lane.b32.xlu0 %v4832, 64
    %v4879 = vpop.permute.xlu0 %4878
    %4880 = vrot.lane.b32.xlu0 %v4833, 64
    %v4881 = vpop.permute.xlu0 %4880
    %v4890 = vsel %vm371, %v4794, %v4835
    %v4891 = vsel %vm371, %v4795, %v4837
    %v4892 = vsel %vm371, %v4796, %v4839
    %v4893 = vsel %vm371, %v4797, %v4841
    %v4894 = vsel %vm371, %v4798, %v4843
    %v4895 = vsel %vm371, %v4799, %v4845
    %v4896 = vsel %vm371, %v4800, %v4847
    %v4897 = vsel %vm371, %v4801, %v4849
    %v4898 = vsel %vm649, %v4890, %v4867
    %v4899 = vsel %vm649, %v4891, %v4869
    %v4900 = vsel %vm649, %v4892, %v4871
    %v4901 = vsel %vm649, %v4893, %v4873
    %v4902 = vsel %vm649, %v4894, %v4875
    %v4903 = vsel %vm649, %v4895, %v4877
    %v4904 = vsel %vm649, %v4896, %v4879
    %v4905 = vsel %vm649, %v4897, %v4881
    %v4906 = vpack.c.bf16 %v4899, %v4898
    %v4907 = vpack.c.bf16 %v4901, %v4900
    %v4908 = vpack.c.bf16 %v4903, %v4902
    %v4909 = vpack.c.bf16 %v4905, %v4904
    %v4911 = vsel %vm701, %v4906, 0
    %v4914 = vsel %vm701, %v4907, 0
    %v4917 = vsel %vm701, %v4908, 0
    %v4920 = vsel %vm701, %v4909, 0
    %4922 = vmatpush.bf16.msra.mxu0 0
    %4923 = vmatpush.bf16.msra.mxu0 0
    %4924 = vmatpush.bf16.msra.mxu0 %v3473
    %4925 = vmatpush.bf16.msra.mxu0 %v3472
    %4926 = vmatpush.bf16.msra.mxu0 %v3471
    %4927 = vmatpush.bf16.msra.mxu0 %v3470
    %4928 = vmatpush.bf16.msra.mxu0 %v3469
    %4929 = vmatpush.bf16.msra.mxu0 %v3468
    %4930 = vmatmul.bf16.gmra.mxu0 %v4911
    %v4931 = vpop.f32.mrf.mxu0
    %v4932 = vadd.f32 %v3442, %v4931
    %v4933 = vpop.f32.mrf.mxu0
    %v4934 = vadd.f32 %v3442, %v4933
    %4935 = vmatmul.bf16.gmra.mxu0 %v4914
    %v4936 = vpop.f32.mrf.mxu0
    %v4937 = vadd.f32 %v3442, %v4936
    %v4938 = vpop.f32.mrf.mxu0
    %v4939 = vadd.f32 %v3442, %v4938
    %4940 = vmatmul.bf16.gmra.mxu0 %v4917
    %v4941 = vpop.f32.mrf.mxu0
    %v4942 = vadd.f32 %v3442, %v4941
    %v4943 = vpop.f32.mrf.mxu0
    %v4944 = vadd.f32 %v3442, %v4943
    %4945 = vmatmul.bf16.gmra.mxu0 %v4920
    %v4946 = vpop.f32.mrf.mxu0
    %v4947 = vadd.f32 %v3442, %v4946
    %v4948 = vpop.f32.mrf.mxu0
    %v4949 = vadd.f32 %v3442, %v4948
    %4950 = vdwg.mxu0
    %v4951 = vmax.f32 %v4932, 0.0
    %v4952 = vmax.f32 %v4934, 0.0
    %v4953 = vmax.f32 %v4937, 0.0
    %v4954 = vmax.f32 %v4939, 0.0
    %v4955 = vmax.f32 %v4942, 0.0
    %v4956 = vmax.f32 %v4944, 0.0
    %v4957 = vmax.f32 %v4947, 0.0
    %v4958 = vmax.f32 %v4949, 0.0
    %v4967 = vrot.slane %v4951, 7
    %v4968 = vrot.slane %v4952, 7
    %v4969 = vsel %vm208, %v4967, %v4968
    %v4970 = vrot.slane %v4953, 7
    %v4971 = vsel %vm208, %v4968, %v4970
    %v4972 = vrot.slane %v4954, 7
    %v4973 = vsel %vm208, %v4970, %v4972
    %v4974 = vrot.slane %v4955, 7
    %v4975 = vsel %vm208, %v4972, %v4974
    %v4976 = vrot.slane %v4956, 7
    %v4977 = vsel %vm208, %v4974, %v4976
    %v4978 = vrot.slane %v4957, 7
    %v4979 = vsel %vm208, %v4976, %v4978
    %v4980 = vrot.slane %v4958, 7
    %v4981 = vsel %vm208, %v4978, %v4980
    %v4990 = vsel %vm208, 0.0, %v4967
    %v4991 = vsel %vm241, 0.0, %v4990
    %v4992 = vsel %vm242, 0.0, %v4969
    %v4993 = vsel %vm243, 0.0, %v4971
    %v4994 = vsel %vm244, 0.0, %v4973
    %v4995 = vsel %vm245, 0.0, %v4975
    %v4996 = vsel %vm246, 0.0, %v4977
    %v4997 = vsel %vm247, 0.0, %v4979
    %v4998 = vsel %vm248, 0.0, %v4981
    %v4999 = vrot.slane %v4951, 1
    %v5000 = vrot.slane %v4952, 1
    %v5001 = vsel %vm257, %v4999, %v5000
    %v5002 = vrot.slane %v4953, 1
    %v5003 = vsel %vm257, %v5000, %v5002
    %v5004 = vrot.slane %v4954, 1
    %v5005 = vsel %vm257, %v5002, %v5004
    %v5006 = vrot.slane %v4955, 1
    %v5007 = vsel %vm257, %v5004, %v5006
    %v5008 = vrot.slane %v4956, 1
    %v5009 = vsel %vm257, %v5006, %v5008
    %v5010 = vrot.slane %v4957, 1
    %v5011 = vsel %vm257, %v5008, %v5010
    %v5012 = vrot.slane %v4958, 1
    %v5013 = vsel %vm257, %v5010, %v5012
    %v5022 = vsel %vm257, %v5012, 0.0
    %v5023 = vsel %vm290, 0.0, %v5001
    %v5024 = vsel %vm291, 0.0, %v5003
    %v5025 = vsel %vm292, 0.0, %v5005
    %v5026 = vsel %vm293, 0.0, %v5007
    %v5027 = vsel %vm294, 0.0, %v5009
    %v5028 = vsel %vm295, 0.0, %v5011
    %v5029 = vsel %vm296, 0.0, %v5013
    %v5030 = vsel %vm297, 0.0, %v5022
    %5031 = vrot.lane.b32.xlu0 %v4951, 32
    %v5032 = vpop.permute.xlu0 %5031
    %5033 = vrot.lane.b32.xlu0 %v4952, 32
    %v5034 = vpop.permute.xlu0 %5033
    %5035 = vrot.lane.b32.xlu0 %v4953, 32
    %v5036 = vpop.permute.xlu0 %5035
    %5037 = vrot.lane.b32.xlu0 %v4954, 32
    %v5038 = vpop.permute.xlu0 %5037
    %5039 = vrot.lane.b32.xlu0 %v4955, 32
    %v5040 = vpop.permute.xlu0 %5039
    %5041 = vrot.lane.b32.xlu0 %v4956, 32
    %v5042 = vpop.permute.xlu0 %5041
    %5043 = vrot.lane.b32.xlu0 %v4957, 32
    %v5044 = vpop.permute.xlu0 %5043
    %5045 = vrot.lane.b32.xlu0 %v4958, 32
    %v5046 = vpop.permute.xlu0 %5045
    %5063 = vrot.lane.b32.xlu0 %v5023, 64
    %v5064 = vpop.permute.xlu0 %5063
    %5065 = vrot.lane.b32.xlu0 %v5024, 64
    %v5066 = vpop.permute.xlu0 %5065
    %5067 = vrot.lane.b32.xlu0 %v5025, 64
    %v5068 = vpop.permute.xlu0 %5067
    %5069 = vrot.lane.b32.xlu0 %v5026, 64
    %v5070 = vpop.permute.xlu0 %5069
    %5071 = vrot.lane.b32.xlu0 %v5027, 64
    %v5072 = vpop.permute.xlu0 %5071
    %5073 = vrot.lane.b32.xlu0 %v5028, 64
    %v5074 = vpop.permute.xlu0 %5073
    %5075 = vrot.lane.b32.xlu0 %v5029, 64
    %v5076 = vpop.permute.xlu0 %5075
    %5077 = vrot.lane.b32.xlu0 %v5030, 64
    %v5078 = vpop.permute.xlu0 %5077
    %v5087 = vsel %vm371, %v4991, %v5032
    %v5088 = vsel %vm371, %v4992, %v5034
    %v5089 = vsel %vm371, %v4993, %v5036
    %v5090 = vsel %vm371, %v4994, %v5038
    %v5091 = vsel %vm371, %v4995, %v5040
    %v5092 = vsel %vm371, %v4996, %v5042
    %v5093 = vsel %vm371, %v4997, %v5044
    %v5094 = vsel %vm371, %v4998, %v5046
    %v5095 = vsel %vm649, %v5087, %v5064
    %v5096 = vsel %vm649, %v5088, %v5066
    %v5097 = vsel %vm649, %v5089, %v5068
    %v5098 = vsel %vm649, %v5090, %v5070
    %v5099 = vsel %vm649, %v5091, %v5072
    %v5100 = vsel %vm649, %v5092, %v5074
    %v5101 = vsel %vm649, %v5093, %v5076
    %v5102 = vsel %vm649, %v5094, %v5078
    %v5103 = vpack.c.bf16 %v5096, %v5095
    %v5104 = vpack.c.bf16 %v5098, %v5097
    %v5105 = vpack.c.bf16 %v5100, %v5099
    %v5106 = vpack.c.bf16 %v5102, %v5101
    %v5108 = vsel %vm701, %v5103, 0
    %v5111 = vsel %vm701, %v5104, 0
    %v5114 = vsel %vm701, %v5105, 0
    %v5117 = vsel %vm701, %v5106, 0
    %5119 = vmatpush.bf16.msra.mxu0 0
    %5120 = vmatpush.bf16.msra.mxu0 0
    %5121 = vmatpush.bf16.msra.mxu0 %v3724
    %5122 = vmatpush.bf16.msra.mxu0 %v3723
    %5123 = vmatpush.bf16.msra.mxu0 %v3722
    %5124 = vmatpush.bf16.msra.mxu0 %v3721
    %5125 = vmatpush.bf16.msra.mxu0 %v3720
    %5126 = vmatpush.bf16.msra.mxu0 %v3719
    %5127 = vmatmul.bf16.gmra.mxu0 %v5108
    %v5128 = vpop.f32.mrf.mxu0
    %v5129 = vadd.f32 %v3693, %v5128
    %v5130 = vpop.f32.mrf.mxu0
    %v5131 = vadd.f32 %v3693, %v5130
    %5132 = vmatmul.bf16.gmra.mxu0 %v5111
    %v5133 = vpop.f32.mrf.mxu0
    %v5134 = vadd.f32 %v3693, %v5133
    %v5135 = vpop.f32.mrf.mxu0
    %v5136 = vadd.f32 %v3693, %v5135
    %5137 = vmatmul.bf16.gmra.mxu0 %v5114
    %v5138 = vpop.f32.mrf.mxu0
    %v5139 = vadd.f32 %v3693, %v5138
    %v5140 = vpop.f32.mrf.mxu0
    %v5141 = vadd.f32 %v3693, %v5140
    %5142 = vmatmul.bf16.gmra.mxu0 %v5117
    %v5143 = vpop.f32.mrf.mxu0
    %v5144 = vadd.f32 %v3693, %v5143
    %v5145 = vpop.f32.mrf.mxu0
    %v5146 = vadd.f32 %v3693, %v5145
    %5147 = vdwg.mxu0
    %v5148 = vmax.f32 %v5129, 0.0
    %v5149 = vmax.f32 %v5131, 0.0
    %v5150 = vmax.f32 %v5134, 0.0
    %v5151 = vmax.f32 %v5136, 0.0
    %v5152 = vmax.f32 %v5139, 0.0
    %v5153 = vmax.f32 %v5141, 0.0
    %v5154 = vmax.f32 %v5144, 0.0
    %v5155 = vmax.f32 %v5146, 0.0
    %v5164 = vrot.slane %v5148, 7
    %v5165 = vrot.slane %v5149, 7
    %v5166 = vsel %vm208, %v5164, %v5165
    %v5167 = vrot.slane %v5150, 7
    %v5168 = vsel %vm208, %v5165, %v5167
    %v5169 = vrot.slane %v5151, 7
    %v5170 = vsel %vm208, %v5167, %v5169
    %v5171 = vrot.slane %v5152, 7
    %v5172 = vsel %vm208, %v5169, %v5171
    %v5173 = vrot.slane %v5153, 7
    %v5174 = vsel %vm208, %v5171, %v5173
    %v5175 = vrot.slane %v5154, 7
    %v5176 = vsel %vm208, %v5173, %v5175
    %v5177 = vrot.slane %v5155, 7
    %v5178 = vsel %vm208, %v5175, %v5177
    %v5187 = vsel %vm208, 0.0, %v5164
    %v5188 = vsel %vm241, 0.0, %v5187
    %v5189 = vsel %vm242, 0.0, %v5166
    %v5190 = vsel %vm243, 0.0, %v5168
    %v5191 = vsel %vm244, 0.0, %v5170
    %v5192 = vsel %vm245, 0.0, %v5172
    %v5193 = vsel %vm246, 0.0, %v5174
    %v5194 = vsel %vm247, 0.0, %v5176
    %v5195 = vsel %vm248, 0.0, %v5178
    %v5196 = vrot.slane %v5148, 1
    %v5197 = vrot.slane %v5149, 1
    %v5198 = vsel %vm257, %v5196, %v5197
    %v5199 = vrot.slane %v5150, 1
    %v5200 = vsel %vm257, %v5197, %v5199
    %v5201 = vrot.slane %v5151, 1
    %v5202 = vsel %vm257, %v5199, %v5201
    %v5203 = vrot.slane %v5152, 1
    %v5204 = vsel %vm257, %v5201, %v5203
    %v5205 = vrot.slane %v5153, 1
    %v5206 = vsel %vm257, %v5203, %v5205
    %v5207 = vrot.slane %v5154, 1
    %v5208 = vsel %vm257, %v5205, %v5207
    %v5209 = vrot.slane %v5155, 1
    %v5210 = vsel %vm257, %v5207, %v5209
    %v5219 = vsel %vm257, %v5209, 0.0
    %v5220 = vsel %vm290, 0.0, %v5198
    %v5221 = vsel %vm291, 0.0, %v5200
    %v5222 = vsel %vm292, 0.0, %v5202
    %v5223 = vsel %vm293, 0.0, %v5204
    %v5224 = vsel %vm294, 0.0, %v5206
    %v5225 = vsel %vm295, 0.0, %v5208
    %v5226 = vsel %vm296, 0.0, %v5210
    %v5227 = vsel %vm297, 0.0, %v5219
    %5228 = vrot.lane.b32.xlu0 %v5148, 32
    %v5229 = vpop.permute.xlu0 %5228
    %5230 = vrot.lane.b32.xlu0 %v5149, 32
    %v5231 = vpop.permute.xlu0 %5230
    %5232 = vrot.lane.b32.xlu0 %v5150, 32
    %v5233 = vpop.permute.xlu0 %5232
    %5234 = vrot.lane.b32.xlu0 %v5151, 32
    %v5235 = vpop.permute.xlu0 %5234
    %5236 = vrot.lane.b32.xlu0 %v5152, 32
    %v5237 = vpop.permute.xlu0 %5236
    %5238 = vrot.lane.b32.xlu0 %v5153, 32
    %v5239 = vpop.permute.xlu0 %5238
    %5240 = vrot.lane.b32.xlu0 %v5154, 32
    %v5241 = vpop.permute.xlu0 %5240
    %5242 = vrot.lane.b32.xlu0 %v5155, 32
    %v5243 = vpop.permute.xlu0 %5242
    %5260 = vrot.lane.b32.xlu0 %v5220, 64
    %v5261 = vpop.permute.xlu0 %5260
    %5262 = vrot.lane.b32.xlu0 %v5221, 64
    %v5263 = vpop.permute.xlu0 %5262
    %5264 = vrot.lane.b32.xlu0 %v5222, 64
    %v5265 = vpop.permute.xlu0 %5264
    %5266 = vrot.lane.b32.xlu0 %v5223, 64
    %v5267 = vpop.permute.xlu0 %5266
    %5268 = vrot.lane.b32.xlu0 %v5224, 64
    %v5269 = vpop.permute.xlu0 %5268
    %5270 = vrot.lane.b32.xlu0 %v5225, 64
    %v5271 = vpop.permute.xlu0 %5270
    %5272 = vrot.lane.b32.xlu0 %v5226, 64
    %v5273 = vpop.permute.xlu0 %5272
    %5274 = vrot.lane.b32.xlu0 %v5227, 64
    %v5275 = vpop.permute.xlu0 %5274
    %v5284 = vsel %vm371, %v5188, %v5229
    %v5285 = vsel %vm371, %v5189, %v5231
    %v5286 = vsel %vm371, %v5190, %v5233
    %v5287 = vsel %vm371, %v5191, %v5235
    %v5288 = vsel %vm371, %v5192, %v5237
    %v5289 = vsel %vm371, %v5193, %v5239
    %v5290 = vsel %vm371, %v5194, %v5241
    %v5291 = vsel %vm371, %v5195, %v5243
    %v5292 = vsel %vm649, %v5284, %v5261
    %v5293 = vsel %vm649, %v5285, %v5263
    %v5294 = vsel %vm649, %v5286, %v5265
    %v5295 = vsel %vm649, %v5287, %v5267
    %v5296 = vsel %vm649, %v5288, %v5269
    %v5297 = vsel %vm649, %v5289, %v5271
    %v5298 = vsel %vm649, %v5290, %v5273
    %v5299 = vsel %vm649, %v5291, %v5275
    %v5300 = vpack.c.bf16 %v5293, %v5292
    %v5301 = vpack.c.bf16 %v5295, %v5294
    %v5302 = vpack.c.bf16 %v5297, %v5296
    %v5303 = vpack.c.bf16 %v5299, %v5298
    %v5305 = vsel %vm701, %v5300, 0
    %v5308 = vsel %vm701, %v5301, 0
    %v5311 = vsel %vm701, %v5302, 0
    %v5314 = vsel %vm701, %v5303, 0
    %5316 = vmatpush.bf16.msra.mxu0 0
    %5317 = vmatpush.bf16.msra.mxu0 0
    %5318 = vmatpush.bf16.msra.mxu0 %v3975
    %5319 = vmatpush.bf16.msra.mxu0 %v3974
    %5320 = vmatpush.bf16.msra.mxu0 %v3973
    %5321 = vmatpush.bf16.msra.mxu0 %v3972
    %5322 = vmatpush.bf16.msra.mxu0 %v3971
    %5323 = vmatpush.bf16.msra.mxu0 %v3970
    %5324 = vmatmul.bf16.gmra.mxu0 %v5305
    %v5325 = vpop.f32.mrf.mxu0
    %v5326 = vadd.f32 %v3944, %v5325
    %v5327 = vpop.f32.mrf.mxu0
    %v5328 = vadd.f32 %v3944, %v5327
    %5329 = vmatmul.bf16.gmra.mxu0 %v5308
    %v5330 = vpop.f32.mrf.mxu0
    %v5331 = vadd.f32 %v3944, %v5330
    %v5332 = vpop.f32.mrf.mxu0
    %v5333 = vadd.f32 %v3944, %v5332
    %5334 = vmatmul.bf16.gmra.mxu0 %v5311
    %v5335 = vpop.f32.mrf.mxu0
    %v5336 = vadd.f32 %v3944, %v5335
    %v5337 = vpop.f32.mrf.mxu0
    %v5338 = vadd.f32 %v3944, %v5337
    %5339 = vmatmul.bf16.gmra.mxu0 %v5314
    %v5340 = vpop.f32.mrf.mxu0
    %v5341 = vadd.f32 %v3944, %v5340
    %v5342 = vpop.f32.mrf.mxu0
    %v5343 = vadd.f32 %v3944, %v5342
    %5344 = vdwg.mxu0
    %v5345 = vmax.f32 %v5326, 0.0
    %v5346 = vmax.f32 %v5328, 0.0
    %v5347 = vmax.f32 %v5331, 0.0
    %v5348 = vmax.f32 %v5333, 0.0
    %v5349 = vmax.f32 %v5336, 0.0
    %v5350 = vmax.f32 %v5338, 0.0
    %v5351 = vmax.f32 %v5341, 0.0
    %v5352 = vmax.f32 %v5343, 0.0
    %v5353 = vpack.c.bf16 %v5346, %v5345
    %v5354 = vpack.c.bf16 %v5348, %v5347
    %v5355 = vpack.c.bf16 %v5350, %v5349
    %v5356 = vpack.c.bf16 %v5352, %v5351
    %5357 = vmatpush.bf16.msra.mxu0 0
    %5358 = vmatpush.bf16.msra.mxu0 0
    %5359 = vmatpush.bf16.msra.mxu0 0
    %5360 = vmatpush.bf16.msra.mxu0 0
    %5361 = vmatpush.bf16.msra.mxu0 %v5356
    %5362 = vmatpush.bf16.msra.mxu0 %v5355
    %5363 = vmatpush.bf16.msra.mxu0 %v5354
    %5364 = vmatpush.bf16.msra.mxu0 %v5353
    %5365 = vmatmul.bf16.gmra.mxu0 %v4156
    %v5366 = vpop.f32.mrf.mxu0
    %v5367 = vadd.f32 %v4038, %v5366
    %v5368 = vpop.f32.mrf.mxu0
    %v5369 = vadd.f32 %v4043, %v5368
    %5370 = vmatmul.bf16.gmra.mxu0 %v4159
    %v5371 = vpop.f32.mrf.mxu0
    %v5372 = vadd.f32 %v4048, %v5371
    %v5373 = vpop.f32.mrf.mxu0
    %v5374 = vadd.f32 %v4053, %v5373
    %5375 = vmatmul.bf16.gmra.mxu0 %v4162
    %v5376 = vpop.f32.mrf.mxu0
    %v5377 = vadd.f32 %v4058, %v5376
    %v5378 = vpop.f32.mrf.mxu0
    %v5379 = vadd.f32 %v4063, %v5378
    %5380 = vmatmul.bf16.gmra.mxu0 %v4165
    %v5381 = vpop.f32.mrf.mxu0
    %v5382 = vadd.f32 %v4068, %v5381
    %v5383 = vpop.f32.mrf.mxu0
    %v5384 = vadd.f32 %v4073, %v5383
    %5385 = vmatmul.bf16.gmra.mxu0 %v4168
    %v5386 = vpop.f32.mrf.mxu0
    %v5387 = vadd.f32 %v4078, %v5386
    %v5388 = vpop.f32.mrf.mxu0
    %v5389 = vadd.f32 %v4083, %v5388
    %5390 = vmatmul.bf16.gmra.mxu0 %v4171
    %v5391 = vpop.f32.mrf.mxu0
    %v5392 = vadd.f32 %v4088, %v5391
    %v5393 = vpop.f32.mrf.mxu0
    %v5394 = vadd.f32 %v4093, %v5393
    %5395 = vmatmul.bf16.gmra.mxu0 %v4174
    %v5396 = vpop.f32.mrf.mxu0
    %v5397 = vadd.f32 %v4098, %v5396
    %v5398 = vpop.f32.mrf.mxu0
    %v5399 = vadd.f32 %v4103, %v5398
    %5400 = vmatmul.bf16.gmra.mxu0 %v4177
    %v5401 = vpop.f32.mrf.mxu0
    %v5402 = vadd.f32 %v4108, %v5401
    %v5403 = vpop.f32.mrf.mxu0
    %v5404 = vadd.f32 %v4113, %v5403
    %5405 = vdwg.mxu0
    %v5406 = vmax.f32 %v5367, 0.0
    %v5407 = vmax.f32 %v5369, 0.0
    %v5408 = vmax.f32 %v5372, 0.0
    %v5409 = vmax.f32 %v5374, 0.0
    %v5410 = vmax.f32 %v5377, 0.0
    %v5411 = vmax.f32 %v5379, 0.0
    %v5412 = vmax.f32 %v5382, 0.0
    %v5413 = vmax.f32 %v5384, 0.0
    %v5414 = vmax.f32 %v5387, 0.0
    %v5415 = vmax.f32 %v5389, 0.0
    %v5416 = vmax.f32 %v5392, 0.0
    %v5417 = vmax.f32 %v5394, 0.0
    %v5418 = vmax.f32 %v5397, 0.0
    %v5419 = vmax.f32 %v5399, 0.0
    %v5420 = vmax.f32 %v5402, 0.0
    %v5421 = vmax.f32 %v5404, 0.0
    %v5422 = vpack.c.bf16 %v5407, %v5406
    %v5423 = vpack.c.bf16 %v5409, %v5408
    %v5424 = vpack.c.bf16 %v5411, %v5410
    %v5425 = vpack.c.bf16 %v5413, %v5412
    %v5426 = vpack.c.bf16 %v5415, %v5414
    %v5427 = vpack.c.bf16 %v5417, %v5416
    %v5428 = vpack.c.bf16 %v5419, %v5418
    %v5429 = vpack.c.bf16 %v5421, %v5420
    %5430 = vmatpush.bf16.msra.mxu0 %v5429
    %5431 = vmatpush.bf16.msra.mxu0 %v5428
    %5432 = vmatpush.bf16.msra.mxu0 %v5427
    %5433 = vmatpush.bf16.msra.mxu0 %v5426
    %5434 = vmatpush.bf16.msra.mxu0 %v5425
    %5435 = vmatpush.bf16.msra.mxu0 %v5424
    %5436 = vmatpush.bf16.msra.mxu0 %v5423
    %5437 = vmatpush.bf16.msra.mxu0 %v5422
    %5438 = vmatmul.bf16.gmra.mxu0 %v4364
    %v5439 = vpop.f32.mrf.mxu0
    %v5440 = vpop.f32.mrf.mxu0
    %5441 = vmatmul.bf16.gmra.mxu0 %v4365
    %v5442 = vpop.f32.mrf.mxu0
    %v5443 = vpop.f32.mrf.mxu0
    %5444 = vmatmul.bf16.gmra.mxu0 %v4366
    %v5445 = vpop.f32.mrf.mxu0
    %v5446 = vpop.f32.mrf.mxu0
    %5447 = vmatmul.bf16.gmra.mxu0 %v4367
    %v5448 = vpop.f32.mrf.mxu0
    %v5449 = vpop.f32.mrf.mxu0
    %5450 = vmatmul.bf16.gmra.mxu0 %v4368
    %v5451 = vpop.f32.mrf.mxu0
    %v5452 = vadd.f32 %v4295, %v5451
    %v5453 = vpop.f32.mrf.mxu0
    %v5454 = vadd.f32 %v4300, %v5453
    %5455 = vmatmul.bf16.gmra.mxu0 %v4369
    %v5456 = vpop.f32.mrf.mxu0
    %v5457 = vadd.f32 %v4305, %v5456
    %v5458 = vpop.f32.mrf.mxu0
    %v5459 = vadd.f32 %v4310, %v5458
    %5460 = vmatmul.bf16.gmra.mxu0 %v4370
    %v5461 = vpop.f32.mrf.mxu0
    %v5462 = vadd.f32 %v4315, %v5461
    %v5463 = vpop.f32.mrf.mxu0
    %v5464 = vadd.f32 %v4320, %v5463
    %5465 = vmatmul.bf16.gmra.mxu0 %v4371
    %v5466 = vpop.f32.mrf.mxu0
    %v5467 = vadd.f32 %v4325, %v5466
    %v5468 = vpop.f32.mrf.mxu0
    %v5469 = vadd.f32 %v4330, %v5468
    %5470 = vdwg.mxu0
    %v5471 = vmax.f32 %v5452, 0.0
    %v5472 = vmax.f32 %v5454, 0.0
    %v5473 = vmax.f32 %v5457, 0.0
    %v5474 = vmax.f32 %v5459, 0.0
    %v5475 = vmax.f32 %v5462, 0.0
    %v5476 = vmax.f32 %v5464, 0.0
    %v5477 = vmax.f32 %v5467, 0.0
    %v5478 = vmax.f32 %v5469, 0.0
    %v5479 = vsel %vm371, %v5471, -inf
    %v5480 = vrot.slane %v5479, 4
    %v5481 = vmax.f32 %v5479, %v5480
    %v5482 = vrot.slane %v5481, 2
    %v5483 = vmax.f32 %v5481, %v5482
    %v5484 = vrot.slane %v5483, 1
    %v5485 = vmax.f32 %v5483, %v5484
    %v5486 = vsel %vm371, %v5472, -inf
    %v5487 = vrot.slane %v5486, 4
    %v5488 = vmax.f32 %v5486, %v5487
    %v5489 = vrot.slane %v5488, 2
    %v5490 = vmax.f32 %v5488, %v5489
    %v5491 = vrot.slane %v5490, 1
    %v5492 = vmax.f32 %v5490, %v5491
    %v5493 = vsel %vm371, %v5473, -inf
    %v5494 = vrot.slane %v5493, 4
    %v5495 = vmax.f32 %v5493, %v5494
    %v5496 = vrot.slane %v5495, 2
    %v5497 = vmax.f32 %v5495, %v5496
    %v5498 = vrot.slane %v5497, 1
    %v5499 = vmax.f32 %v5497, %v5498
    %v5500 = vsel %vm371, %v5474, -inf
    %v5501 = vrot.slane %v5500, 4
    %v5502 = vmax.f32 %v5500, %v5501
    %v5503 = vrot.slane %v5502, 2
    %v5504 = vmax.f32 %v5502, %v5503
    %v5505 = vrot.slane %v5504, 1
    %v5506 = vmax.f32 %v5504, %v5505
    %v5507 = vsel %vm371, %v5475, -inf
    %v5508 = vrot.slane %v5507, 4
    %v5509 = vmax.f32 %v5507, %v5508
    %v5510 = vrot.slane %v5509, 2
    %v5511 = vmax.f32 %v5509, %v5510
    %v5512 = vrot.slane %v5511, 1
    %v5513 = vmax.f32 %v5511, %v5512
    %v5514 = vsel %vm371, %v5476, -inf
    %v5515 = vrot.slane %v5514, 4
    %v5516 = vmax.f32 %v5514, %v5515
    %v5517 = vrot.slane %v5516, 2
    %v5518 = vmax.f32 %v5516, %v5517
    %v5519 = vrot.slane %v5518, 1
    %v5520 = vmax.f32 %v5518, %v5519
    %v5521 = vsel %vm371, %v5477, -inf
    %v5522 = vrot.slane %v5521, 4
    %v5523 = vmax.f32 %v5521, %v5522
    %v5524 = vrot.slane %v5523, 2
    %v5525 = vmax.f32 %v5523, %v5524
    %v5526 = vrot.slane %v5525, 1
    %v5527 = vmax.f32 %v5525, %v5526
    %v5528 = vsel %vm371, %v5478, -inf
    %v5529 = vrot.slane %v5528, 4
    %v5530 = vmax.f32 %v5528, %v5529
    %v5531 = vrot.slane %v5530, 2
    %v5532 = vmax.f32 %v5530, %v5531
    %v5533 = vrot.slane %v5532, 1
    %v5534 = vmax.f32 %v5532, %v5533
    %v5535 = vpack.c.bf16 %v5485, %v5485
    %v5536 = vpack.c.bf16 %v5492, %v5492
    %v5537 = vpack.c.bf16 %v5499, %v5499
    %v5538 = vpack.c.bf16 %v5506, %v5506
    %v5539 = vpack.c.bf16 %v5513, %v5513
    %v5540 = vpack.c.bf16 %v5520, %v5520
    %v5541 = vpack.c.bf16 %v5527, %v5527
    %v5542 = vpack.c.bf16 %v5534, %v5534
    %v5551 = vunpack.c.l.b16 %v5535
    %v5552 = vunpack.c.l.b16 %v5536
    %v5553 = vunpack.c.l.b16 %v5537
    %v5554 = vunpack.c.l.b16 %v5538
    %v5555 = vunpack.c.l.b16 %v5539
    %v5556 = vunpack.c.l.b16 %v5540
    %v5557 = vunpack.c.l.b16 %v5541
    %v5558 = vunpack.c.l.b16 %v5542
    %v5559 = vsel %vm1905, %v5552, %v5551
    %v5560 = vsel %vm1907, %v5553, %v5559
    %v5561 = vsel %vm1909, %v5554, %v5560
    %v5562 = vsel %vm1911, %v5555, %v5561
    %v5563 = vsel %vm1913, %v5556, %v5562
    %v5564 = vsel %vm1915, %v5557, %v5563
    %v5565 = vsel %vm1917, %v5558, %v5564
    %v5566 = vpack.c.b16 %v5565, %v5565
    %v5568 = vsel %vm371, %v5566, 0
    %5570 = vmatpush.bf16.msra.mxu0 0
    %5571 = vmatpush.bf16.msra.mxu0 0
    %5572 = vmatpush.bf16.msra.mxu0 0
    %5573 = vmatpush.bf16.msra.mxu0 0
    %5574 = vmatpush.bf16.msra.mxu0 0
    %5575 = vmatpush.bf16.msra.mxu0 0
    %5576 = vmatpush.bf16.msra.mxu0 %v4537
    %5577 = vmatpush.bf16.msra.mxu0 %v4536
    %5578 = vmatmul.bf16.gmra.mxu0 %v5568
    %v5579 = vpop.f32.mrf.mxu0
    %v5580 = vadd.f32 %v4502, %v5579
    %v5581 = vpop.f32.mrf.mxu0
    %5582 = vdwg.mxu0
    %v5583 = vadd.f32 %v4564, %v5580
    %vm5584 = vcmask 64512
    %5585 = vst.msk [vmem:[#allocation2] sm:$0xff] %vm5584, %v5583
    // Predicated region
    $region78: #{tpu_custom_call.1} parent=1 // pred_check
      _
    $region79: #{tpu_custom_call.1} parent=1 // pred_check_branch
      %5587 = sbr.rel (0) target = $region81
    $region80: #{tpu_custom_call.1} parent=1 // pred_region
      %5589 = vsyncadd [#allocation3], 0
      %s5591 = sshll.u32 [#allocation2], 4
      %s5592 = int_to_ptr.vmem [resolvable:$true] %s5591
      %s5593 = sshll.u32 %s19, 4
      %s5594 = int_to_ptr.hbm [resolvable:$true] %s5593
      %5596 = dma.vmem_to_hbm [thread:$0]  %s5592, 128, %s5594, [#allocation3]
    $region81: #{tpu_custom_call.1} parent=1 // pred_fallthru
      _
    // Predicated region
    $region82: #{tpu_custom_call.1} parent=1 // pred_check
      _
    $region83: #{tpu_custom_call.1} parent=1 // pred_check_branch
      %5598 = sbr.rel (0) target = $region85
    $region84: #{tpu_custom_call.1} parent=1 // pred_region
      %5600 = dma.done [#allocation3], 128
    $region85: #{tpu_custom_call.1} parent=1 // pred_fallthru
      _
    %5601 = vsyncpa [#allocation3], 1

</llo_original>
